<compile_context>
chip_gen: v5e
topology: v5e:2x2
jax: 0.10.0
libtpu: 0.0.40
codegen_flags: <defaults>
</compile_context>

<pallas_src>
import jax
import jax.numpy as jnp
import numpy as np
from jax.experimental import pallas as pl
from jax.experimental.pallas import tpu as pltpu

EPS = 1e-5


# ---------------------------------------------------------------------------
# Pallas kernel: MaxPool2d(2) -> (conv3x3 + folded-BN + ReLU) x 2
# Processes a block of Nb batch elements per grid step.
# ---------------------------------------------------------------------------
def _down_kernel(x_ref, w1_ref, s1_ref, h1_ref, w2_ref, s2_ref, h2_ref,
                 o_ref, pad1, pad2):
    Nb, H, W, Cin = x_ref.shape
    _, Hp, Wp, Cout = o_ref.shape
    M = Nb * Hp * Wp

    # --- MaxPool2d(kernel=2, stride=2): single slab load, reshape, max ------
    x = x_ref[...]                                   # (Nb, H, W, Cin)
    x = x.reshape(Nb, Hp, 2, Wp, 2, Cin)             # lane dim (Cin) unchanged
    pooled = jnp.max(jnp.max(x, axis=4), axis=2)     # (Nb, Hp, Wp, Cin)

    # --- zero only the 1-wide halo borders (padding=1); interiors are fully
    #     overwritten every grid step, so this is cheap and megacore-safe -----
    def zero_border(pad, C):
        zc = jnp.zeros((Nb, Hp + 2, 1, C), jnp.float32)
        pad[:, :, 0:1, :] = zc
        pad[:, :, Wp + 1:Wp + 2, :] = zc
        zr = jnp.zeros((Nb, 1, Wp + 2, C), jnp.float32)
        pad[:, 0:1, :, :] = zr
        pad[:, Hp + 1:Hp + 2, :, :] = zr

    zero_border(pad1, Cin)
    zero_border(pad2, Cout)

    # --- 3x3 SAME conv as ONE im2col matmul: (M, 9*C) @ (9*C, Cout),
    #     fused folded-BN affine + ReLU epilogue ------------------------------
    def conv3x3_bn_relu(pad, C, w_ref, s_ref, h_ref):
        cols = []
        for ky in range(3):
            for kx in range(3):
                cols.append(pad[:, ky:ky + Hp, kx:kx + Wp, :].reshape(M, C))
        patches = jnp.concatenate(cols, axis=-1)               # (M, 9*C)
        acc = jnp.dot(patches, w_ref[...],
                      preferred_element_type=jnp.float32)      # (M, Cout)
        return jnp.maximum(acc * s_ref[...] + h_ref[...], 0.0)

    pad1[:, 1:Hp + 1, 1:Wp + 1, :] = pooled
    y1 = conv3x3_bn_relu(pad1, Cin, w1_ref, s1_ref, h1_ref)

    pad2[:, 1:Hp + 1, 1:Wp + 1, :] = y1.reshape(Nb, Hp, Wp, Cout)
    y2 = conv3x3_bn_relu(pad2, Cout, w2_ref, s2_ref, h2_ref)

    o_ref[...] = y2.reshape(Nb, Hp, Wp, Cout).astype(o_ref.dtype)


# ---------------------------------------------------------------------------
# Wrapper: NCHW in, NCHW out.  BN folded to scale/shift in plain JAX (glue).
# ---------------------------------------------------------------------------
def down_pallas(x_nchw, w1, b1, g1, be1, m1, v1, w2, b2, g2, be2, m2, v2):
    x = jnp.transpose(x_nchw, (0, 2, 3, 1)).astype(jnp.float32)  # NCHW -> NHWC
    N, H, W, Cin = x.shape
    Cout = w1.shape[-1]
    Hp, Wp = H // 2, W // 2

    # Fold conv bias + BatchNorm(running stats) into per-channel scale/shift.
    s1 = g1 / jnp.sqrt(v1 + EPS)
    h1 = be1 + (b1 - m1) * s1
    s2 = g2 / jnp.sqrt(v2 + EPS)
    h2 = be2 + (b2 - m2) * s2
    s1, h1, s2, h2 = (a.reshape(1, Cout).astype(jnp.float32)
                      for a in (s1, h1, s2, h2))

    # im2col weight layout: rows ordered (ky, kx, cin) -> (9*Cin, Cout).
    w1f = w1.reshape(9 * Cin, Cout).astype(jnp.float32)
    w2f = w2.reshape(9 * Cout, Cout).astype(jnp.float32)

    # Batch block: fold enough batch elements into the matmul M dim so that
    # M = Nb*Hp*Wp >= 128 (full MXU rows); otherwise Nb=1 and grid=N stays
    # parallel across cores.
    Nb = N
    for cand in range(1, N + 1):
        if N % cand == 0 and cand * Hp * Wp >= 128:
            Nb = cand
            break

    out_nhwc = pl.pallas_call(
        _down_kernel,
        out_shape=jax.ShapeDtypeStruct((N, Hp, Wp, Cout), jnp.float32),
        grid_spec=pltpu.PrefetchScalarGridSpec(
            num_scalar_prefetch=0,
            grid=(N // Nb,),
            in_specs=[
                pl.BlockSpec((Nb, H, W, Cin), lambda n: (n, 0, 0, 0)),
                pl.BlockSpec((9 * Cin, Cout), lambda n: (0, 0)),
                pl.BlockSpec((1, Cout), lambda n: (0, 0)),
                pl.BlockSpec((1, Cout), lambda n: (0, 0)),
                pl.BlockSpec((9 * Cout, Cout), lambda n: (0, 0)),
                pl.BlockSpec((1, Cout), lambda n: (0, 0)),
                pl.BlockSpec((1, Cout), lambda n: (0, 0)),
            ],
            out_specs=pl.BlockSpec((Nb, Hp, Wp, Cout),
                                   lambda n: (n, 0, 0, 0)),
            scratch_shapes=[
                pltpu.VMEM((Nb, Hp + 2, Wp + 2, Cin), jnp.float32),
                pltpu.VMEM((Nb, Hp + 2, Wp + 2, Cout), jnp.float32),
            ],
        ),
        compiler_params=pltpu.CompilerParams(
            dimension_semantics=("parallel",)),
    )(x, w1f, s1, h1, w2f, s2, h2)

    return jnp.transpose(out_nhwc, (0, 3, 1, 2))  # NHWC -> NCHW


# ---------------------------------------------------------------------------
# Pure-JAX reference (mirrors PyTorch eval-mode forward), for verification.
# ---------------------------------------------------------------------------
def down_reference(x, w1, b1, g1, be1, m1, v1, w2, b2, g2, be2, m2, v2):
    xp = jax.lax.reduce_window(x, -jnp.inf, jax.lax.max,
                               window_dimensions=(1, 1, 2, 2),
                               window_strides=(1, 1, 2, 2),
                               padding="VALID")

    def conv_bn_relu(z, w_hwio, b, g, be, m, v):
        w_oihw = jnp.transpose(w_hwio, (3, 2, 0, 1))
        y = jax.lax.conv_general_dilated(
            z, w_oihw, window_strides=(1, 1), padding=((1, 1), (1, 1)),
            dimension_numbers=("NCHW", "OIHW", "NCHW"))
        y = y + b[None, :, None, None]
        y = ((y - m[None, :, None, None]) /
             jnp.sqrt(v[None, :, None, None] + EPS)) * g[None, :, None, None] \
            + be[None, :, None, None]
        return jnp.maximum(y, 0.0)

    y = conv_bn_relu(xp, w1, b1, g1, be1, m1, v1)
    y = conv_bn_relu(y, w2, b2, g2, be2, m2, v2)
    return y


if __name__ == "__main__":
    N, Cin, H, W = 2, 4, 16, 16
    Cout = 8

    key = jax.random.PRNGKey(0)
    ks = jax.random.split(key, 16)

    def conv_init(kw, kb, cin, cout):
        bound = 1.0 / np.sqrt(cin * 9)
        w = jax.random.uniform(kw, (3, 3, cin, cout), jnp.float32, -bound, bound)
        b = jax.random.uniform(kb, (cout,), jnp.float32, -bound, bound)
        return w, b

    def bn_init(kg, kb, km, kv, c):
        g = jax.random.uniform(kg, (c,), jnp.float32, 0.5, 1.5)
        be = 0.1 * jax.random.normal(kb, (c,), jnp.float32)
        m = 0.1 * jax.random.normal(km, (c,), jnp.float32)
        v = jax.random.uniform(kv, (c,), jnp.float32, 0.5, 1.5)
        return g, be, m, v

    x = jax.random.normal(ks[0], (N, Cin, H, W), jnp.float32)
    w1, b1 = conv_init(ks[1], ks[2], Cin, Cout)
    g1, be1, m1, v1 = bn_init(ks[3], ks[4], ks[5], ks[6], Cout)
    w2, b2 = conv_init(ks[7], ks[8], Cout, Cout)
    g2, be2, m2, v2 = bn_init(ks[9], ks[10], ks[11], ks[12], Cout)

    params = (w1, b1, g1, be1, m1, v1, w2, b2, g2, be2, m2, v2)

    out = down_pallas(x, *params)
    out = jax.block_until_ready(out)

    ref = jax.block_until_ready(down_reference(x, *params))

    if not np.allclose(np.asarray(out), np.asarray(ref), atol=2e-4, rtol=2e-4):
        raise AssertionError("Pallas `down` kernel mismatch vs JAX reference")

    print("KERNEL_OK")
</pallas_src>

<mosaic_0001>
module attributes {stable_mosaic.version = 11 : i64} {
  func.func @_down_kernel(%arg0: i32, %arg1: memref<2x16x16x4xf32, #tpu.memory_space<vmem>>, %arg2: memref<36x8xf32, #tpu.memory_space<vmem>>, %arg3: memref<1x8xf32, #tpu.memory_space<vmem>>, %arg4: memref<1x8xf32, #tpu.memory_space<vmem>>, %arg5: memref<72x8xf32, #tpu.memory_space<vmem>>, %arg6: memref<1x8xf32, #tpu.memory_space<vmem>>, %arg7: memref<1x8xf32, #tpu.memory_space<vmem>>, %arg8: memref<2x8x8x8xf32, #tpu.memory_space<vmem>>, %arg9: memref<2x10x10x4xf32, #tpu.memory_space<vmem>>, %arg10: memref<2x10x10x8xf32, #tpu.memory_space<vmem>>) attributes {dimension_semantics = [#tpu.dimension_semantics<parallel>], iteration_bounds = array<i64: 1>, scalar_prefetch = 0 : i64, scratch_operands = 2 : i64, tpu.core_type = #tpu.core_type<tc>, window_params = [{transform_indices = @transform_0, window_bounds = array<i64: 2, 16, 16, 4>}, {pipeline_mode = #tpu.pipeline_mode<synchronous>, transform_indices = @transform_1, window_bounds = array<i64: 36, 8>}, {pipeline_mode = #tpu.pipeline_mode<synchronous>, transform_indices = @transform_2, window_bounds = array<i64: 1, 8>}, {pipeline_mode = #tpu.pipeline_mode<synchronous>, transform_indices = @transform_3, window_bounds = array<i64: 1, 8>}, {pipeline_mode = #tpu.pipeline_mode<synchronous>, transform_indices = @transform_4, window_bounds = array<i64: 72, 8>}, {pipeline_mode = #tpu.pipeline_mode<synchronous>, transform_indices = @transform_5, window_bounds = array<i64: 1, 8>}, {pipeline_mode = #tpu.pipeline_mode<synchronous>, transform_indices = @transform_6, window_bounds = array<i64: 1, 8>}, {transform_indices = @transform_7, window_bounds = array<i64: 2, 8, 8, 8>}]} {
    %c0 = arith.constant 0 : index
    %c0_0 = arith.constant 0 : index
    %c0_1 = arith.constant 0 : index
    %c0_2 = arith.constant 0 : index
    %0 = vector.load %arg1[%c0, %c0_0, %c0_1, %c0_2] : memref<2x16x16x4xf32, #tpu.memory_space<vmem>>, vector<2x16x16x4xf32>
    %1 = vector.shape_cast %0 : vector<2x16x16x4xf32> to vector<2x8x2x8x2x4xf32>
    %cst = arith.constant dense<0xFF800000> : vector<2x8x2x8x4xf32>
    %2 = vector.multi_reduction <maximumf>, %1, %cst [4] : vector<2x8x2x8x2x4xf32> to vector<2x8x2x8x4xf32>
    %cst_3 = arith.constant dense<0xFF800000> : vector<2x8x8x4xf32>
    %3 = vector.multi_reduction <maximumf>, %2, %cst_3 [2] : vector<2x8x2x8x4xf32> to vector<2x8x8x4xf32>
    %cst_4 = arith.constant 0.000000e+00 : f32
    %4 = vector.broadcast %cst_4 : f32 to vector<2x10x1x4xf32>
    %c0_5 = arith.constant 0 : index
    %c0_6 = arith.constant 0 : index
    %c0_7 = arith.constant 0 : index
    %c0_8 = arith.constant 0 : index
    %5 = vector.load %arg9[%c0_5, %c0_6, %c0_7, %c0_8] : memref<2x10x10x4xf32, #tpu.memory_space<vmem>>, vector<2x10x1x4xf32>
    tpu.vector_store %arg9[%c0_5, %c0_6, %c0_7, %c0_8], %4 {strides = array<i32>} : memref<2x10x10x4xf32, #tpu.memory_space<vmem>>, vector<2x10x1x4xf32>,
    %c0_9 = arith.constant 0 : index
    %c0_10 = arith.constant 0 : index
    %c9 = arith.constant 9 : index
    %c0_11 = arith.constant 0 : index
    %6 = vector.load %arg9[%c0_9, %c0_10, %c9, %c0_11] : memref<2x10x10x4xf32, #tpu.memory_space<vmem>>, vector<2x10x1x4xf32>
    tpu.vector_store %arg9[%c0_9, %c0_10, %c9, %c0_11], %4 {strides = array<i32>} : memref<2x10x10x4xf32, #tpu.memory_space<vmem>>, vector<2x10x1x4xf32>,
    %cst_12 = arith.constant 0.000000e+00 : f32
    %7 = vector.broadcast %cst_12 : f32 to vector<2x1x10x4xf32>
    %c0_13 = arith.constant 0 : index
    %c0_14 = arith.constant 0 : index
    %c0_15 = arith.constant 0 : index
    %c0_16 = arith.constant 0 : index
    %8 = vector.load %arg9[%c0_13, %c0_14, %c0_15, %c0_16] : memref<2x10x10x4xf32, #tpu.memory_space<vmem>>, vector<2x1x10x4xf32>
    tpu.vector_store %arg9[%c0_13, %c0_14, %c0_15, %c0_16], %7 {strides = array<i32>} : memref<2x10x10x4xf32, #tpu.memory_space<vmem>>, vector<2x1x10x4xf32>,
    %c0_17 = arith.constant 0 : index
    %c9_18 = arith.constant 9 : index
    %c0_19 = arith.constant 0 : index
    %c0_20 = arith.constant 0 : index
    %9 = vector.load %arg9[%c0_17, %c9_18, %c0_19, %c0_20] : memref<2x10x10x4xf32, #tpu.memory_space<vmem>>, vector<2x1x10x4xf32>
    tpu.vector_store %arg9[%c0_17, %c9_18, %c0_19, %c0_20], %7 {strides = array<i32>} : memref<2x10x10x4xf32, #tpu.memory_space<vmem>>, vector<2x1x10x4xf32>,
    %cst_21 = arith.constant 0.000000e+00 : f32
    %10 = vector.broadcast %cst_21 : f32 to vector<2x10x1x8xf32>
    %c0_22 = arith.constant 0 : index
    %c0_23 = arith.constant 0 : index
    %c0_24 = arith.constant 0 : index
    %c0_25 = arith.constant 0 : index
    %11 = vector.load %arg10[%c0_22, %c0_23, %c0_24, %c0_25] : memref<2x10x10x8xf32, #tpu.memory_space<vmem>>, vector<2x10x1x8xf32>
    tpu.vector_store %arg10[%c0_22, %c0_23, %c0_24, %c0_25], %10 {strides = array<i32>} : memref<2x10x10x8xf32, #tpu.memory_space<vmem>>, vector<2x10x1x8xf32>,
    %c0_26 = arith.constant 0 : index
    %c0_27 = arith.constant 0 : index
    %c9_28 = arith.constant 9 : index
    %c0_29 = arith.constant 0 : index
    %12 = vector.load %arg10[%c0_26, %c0_27, %c9_28, %c0_29] : memref<2x10x10x8xf32, #tpu.memory_space<vmem>>, vector<2x10x1x8xf32>
    tpu.vector_store %arg10[%c0_26, %c0_27, %c9_28, %c0_29], %10 {strides = array<i32>} : memref<2x10x10x8xf32, #tpu.memory_space<vmem>>, vector<2x10x1x8xf32>,
    %cst_30 = arith.constant 0.000000e+00 : f32
    %13 = vector.broadcast %cst_30 : f32 to vector<2x1x10x8xf32>
    %c0_31 = arith.constant 0 : index
    %c0_32 = arith.constant 0 : index
    %c0_33 = arith.constant 0 : index
    %c0_34 = arith.constant 0 : index
    %14 = vector.load %arg10[%c0_31, %c0_32, %c0_33, %c0_34] : memref<2x10x10x8xf32, #tpu.memory_space<vmem>>, vector<2x1x10x8xf32>
    tpu.vector_store %arg10[%c0_31, %c0_32, %c0_33, %c0_34], %13 {strides = array<i32>} : memref<2x10x10x8xf32, #tpu.memory_space<vmem>>, vector<2x1x10x8xf32>,
    %c0_35 = arith.constant 0 : index
    %c9_36 = arith.constant 9 : index
    %c0_37 = arith.constant 0 : index
    %c0_38 = arith.constant 0 : index
    %15 = vector.load %arg10[%c0_35, %c9_36, %c0_37, %c0_38] : memref<2x10x10x8xf32, #tpu.memory_space<vmem>>, vector<2x1x10x8xf32>
    tpu.vector_store %arg10[%c0_35, %c9_36, %c0_37, %c0_38], %13 {strides = array<i32>} : memref<2x10x10x8xf32, #tpu.memory_space<vmem>>, vector<2x1x10x8xf32>,
    %c0_39 = arith.constant 0 : index
    %c1 = arith.constant 1 : index
    %c1_40 = arith.constant 1 : index
    %c0_41 = arith.constant 0 : index
    %16 = vector.load %arg9[%c0_39, %c1, %c1_40, %c0_41] : memref<2x10x10x4xf32, #tpu.memory_space<vmem>>, vector<2x8x8x4xf32>
    tpu.vector_store %arg9[%c0_39, %c1, %c1_40, %c0_41], %3 {strides = array<i32>} : memref<2x10x10x4xf32, #tpu.memory_space<vmem>>, vector<2x8x8x4xf32>,
    %c0_42 = arith.constant 0 : index
    %c0_43 = arith.constant 0 : index
    %c0_44 = arith.constant 0 : index
    %c0_45 = arith.constant 0 : index
    %17 = vector.load %arg9[%c0_42, %c0_43, %c0_44, %c0_45] : memref<2x10x10x4xf32, #tpu.memory_space<vmem>>, vector<2x8x8x4xf32>
    %18 = vector.shape_cast %17 : vector<2x8x8x4xf32> to vector<128x4xf32>
    %c0_46 = arith.constant 0 : index
    %c0_47 = arith.constant 0 : index
    %c1_48 = arith.constant 1 : index
    %c0_49 = arith.constant 0 : index
    %19 = vector.load %arg9[%c0_46, %c0_47, %c1_48, %c0_49] : memref<2x10x10x4xf32, #tpu.memory_space<vmem>>, vector<2x8x8x4xf32>
    %20 = vector.shape_cast %19 : vector<2x8x8x4xf32> to vector<128x4xf32>
    %c0_50 = arith.constant 0 : index
    %c0_51 = arith.constant 0 : index
    %c2 = arith.constant 2 : index
    %c0_52 = arith.constant 0 : index
    %21 = vector.load %arg9[%c0_50, %c0_51, %c2, %c0_52] : memref<2x10x10x4xf32, #tpu.memory_space<vmem>>, vector<2x8x8x4xf32>
    %22 = vector.shape_cast %21 : vector<2x8x8x4xf32> to vector<128x4xf32>
    %c0_53 = arith.constant 0 : index
    %c1_54 = arith.constant 1 : index
    %c0_55 = arith.constant 0 : index
    %c0_56 = arith.constant 0 : index
    %23 = vector.load %arg9[%c0_53, %c1_54, %c0_55, %c0_56] : memref<2x10x10x4xf32, #tpu.memory_space<vmem>>, vector<2x8x8x4xf32>
    %24 = vector.shape_cast %23 : vector<2x8x8x4xf32> to vector<128x4xf32>
    %c0_57 = arith.constant 0 : index
    %c1_58 = arith.constant 1 : index
    %c1_59 = arith.constant 1 : index
    %c0_60 = arith.constant 0 : index
    %25 = vector.load %arg9[%c0_57, %c1_58, %c1_59, %c0_60] : memref<2x10x10x4xf32, #tpu.memory_space<vmem>>, vector<2x8x8x4xf32>
    %26 = vector.shape_cast %25 : vector<2x8x8x4xf32> to vector<128x4xf32>
    %c0_61 = arith.constant 0 : index
    %c1_62 = arith.constant 1 : index
    %c2_63 = arith.constant 2 : index
    %c0_64 = arith.constant 0 : index
    %27 = vector.load %arg9[%c0_61, %c1_62, %c2_63, %c0_64] : memref<2x10x10x4xf32, #tpu.memory_space<vmem>>, vector<2x8x8x4xf32>
    %28 = vector.shape_cast %27 : vector<2x8x8x4xf32> to vector<128x4xf32>
    %c0_65 = arith.constant 0 : index
    %c2_66 = arith.constant 2 : index
    %c0_67 = arith.constant 0 : index
    %c0_68 = arith.constant 0 : index
    %29 = vector.load %arg9[%c0_65, %c2_66, %c0_67, %c0_68] : memref<2x10x10x4xf32, #tpu.memory_space<vmem>>, vector<2x8x8x4xf32>
    %30 = vector.shape_cast %29 : vector<2x8x8x4xf32> to vector<128x4xf32>
    %c0_69 = arith.constant 0 : index
    %c2_70 = arith.constant 2 : index
    %c1_71 = arith.constant 1 : index
    %c0_72 = arith.constant 0 : index
    %31 = vector.load %arg9[%c0_69, %c2_70, %c1_71, %c0_72] : memref<2x10x10x4xf32, #tpu.memory_space<vmem>>, vector<2x8x8x4xf32>
    %32 = vector.shape_cast %31 : vector<2x8x8x4xf32> to vector<128x4xf32>
    %c0_73 = arith.constant 0 : index
    %c2_74 = arith.constant 2 : index
    %c2_75 = arith.constant 2 : index
    %c0_76 = arith.constant 0 : index
    %33 = vector.load %arg9[%c0_73, %c2_74, %c2_75, %c0_76] : memref<2x10x10x4xf32, #tpu.memory_space<vmem>>, vector<2x8x8x4xf32>
    %34 = vector.shape_cast %33 : vector<2x8x8x4xf32> to vector<128x4xf32>
    %35 = tpu.concatenate %18, %20, %22, %24, %26, %28, %30, %32, %34 in 1 : vector<128x4xf32>, vector<128x4xf32>, vector<128x4xf32>, vector<128x4xf32>, vector<128x4xf32>, vector<128x4xf32>, vector<128x4xf32>, vector<128x4xf32>, vector<128x4xf32> -> vector<128x36xf32>
    %c0_77 = arith.constant 0 : index
    %c0_78 = arith.constant 0 : index
    %36 = vector.load %arg2[%c0_77, %c0_78] : memref<36x8xf32, #tpu.memory_space<vmem>>, vector<36x8xf32>
    %cst_79 = arith.constant dense<0.000000e+00> : vector<128x8xf32>
    %37 = tpu.matmul %35, %36, %cst_79 {dimension_numbers = #tpu.dot_dimension_numbers<[1], [0], [0], [1], [0, 0, 1, 1], [], []>} : vector<128x36xf32>, vector<36x8xf32>, vector<128x8xf32> -> vector<128x8xf32>
    %c0_80 = arith.constant 0 : index
    %c0_81 = arith.constant 0 : index
    %38 = vector.load %arg3[%c0_80, %c0_81] : memref<1x8xf32, #tpu.memory_space<vmem>>, vector<1x8xf32>
    %39 = vector.broadcast %38 : vector<1x8xf32> to vector<128x8xf32>
    %40 = arith.mulf %37, %39 : vector<128x8xf32>
    %c0_82 = arith.constant 0 : index
    %c0_83 = arith.constant 0 : index
    %41 = vector.load %arg4[%c0_82, %c0_83] : memref<1x8xf32, #tpu.memory_space<vmem>>, vector<1x8xf32>
    %42 = vector.broadcast %41 : vector<1x8xf32> to vector<128x8xf32>
    %43 = arith.addf %40, %42 : vector<128x8xf32>
    %cst_84 = arith.constant 0.000000e+00 : f32
    %44 = vector.broadcast %cst_84 : f32 to vector<128x8xf32>
    %45 = arith.maximumf %43, %44 : vector<128x8xf32>
    %46 = vector.shape_cast %45 : vector<128x8xf32> to vector<2x8x8x8xf32>
    %c0_85 = arith.constant 0 : index
    %c1_86 = arith.constant 1 : index
    %c1_87 = arith.constant 1 : index
    %c0_88 = arith.constant 0 : index
    %47 = vector.load %arg10[%c0_85, %c1_86, %c1_87, %c0_88] : memref<2x10x10x8xf32, #tpu.memory_space<vmem>>, vector<2x8x8x8xf32>
    tpu.vector_store %arg10[%c0_85, %c1_86, %c1_87, %c0_88], %46 {strides = array<i32>} : memref<2x10x10x8xf32, #tpu.memory_space<vmem>>, vector<2x8x8x8xf32>,
    %c0_89 = arith.constant 0 : index
    %c0_90 = arith.constant 0 : index
    %c0_91 = arith.constant 0 : index
    %c0_92 = arith.constant 0 : index
    %48 = vector.load %arg10[%c0_89, %c0_90, %c0_91, %c0_92] : memref<2x10x10x8xf32, #tpu.memory_space<vmem>>, vector<2x8x8x8xf32>
    %49 = vector.shape_cast %48 : vector<2x8x8x8xf32> to vector<128x8xf32>
    %c0_93 = arith.constant 0 : index
    %c0_94 = arith.constant 0 : index
    %c1_95 = arith.constant 1 : index
    %c0_96 = arith.constant 0 : index
    %50 = vector.load %arg10[%c0_93, %c0_94, %c1_95, %c0_96] : memref<2x10x10x8xf32, #tpu.memory_space<vmem>>, vector<2x8x8x8xf32>
    %51 = vector.shape_cast %50 : vector<2x8x8x8xf32> to vector<128x8xf32>
    %c0_97 = arith.constant 0 : index
    %c0_98 = arith.constant 0 : index
    %c2_99 = arith.constant 2 : index
    %c0_100 = arith.constant 0 : index
    %52 = vector.load %arg10[%c0_97, %c0_98, %c2_99, %c0_100] : memref<2x10x10x8xf32, #tpu.memory_space<vmem>>, vector<2x8x8x8xf32>
    %53 = vector.shape_cast %52 : vector<2x8x8x8xf32> to vector<128x8xf32>
    %c0_101 = arith.constant 0 : index
    %c1_102 = arith.constant 1 : index
    %c0_103 = arith.constant 0 : index
    %c0_104 = arith.constant 0 : index
    %54 = vector.load %arg10[%c0_101, %c1_102, %c0_103, %c0_104] : memref<2x10x10x8xf32, #tpu.memory_space<vmem>>, vector<2x8x8x8xf32>
    %55 = vector.shape_cast %54 : vector<2x8x8x8xf32> to vector<128x8xf32>
    %c0_105 = arith.constant 0 : index
    %c1_106 = arith.constant 1 : index
    %c1_107 = arith.constant 1 : index
    %c0_108 = arith.constant 0 : index
    %56 = vector.load %arg10[%c0_105, %c1_106, %c1_107, %c0_108] : memref<2x10x10x8xf32, #tpu.memory_space<vmem>>, vector<2x8x8x8xf32>
    %57 = vector.shape_cast %56 : vector<2x8x8x8xf32> to vector<128x8xf32>
    %c0_109 = arith.constant 0 : index
    %c1_110 = arith.constant 1 : index
    %c2_111 = arith.constant 2 : index
    %c0_112 = arith.constant 0 : index
    %58 = vector.load %arg10[%c0_109, %c1_110, %c2_111, %c0_112] : memref<2x10x10x8xf32, #tpu.memory_space<vmem>>, vector<2x8x8x8xf32>
    %59 = vector.shape_cast %58 : vector<2x8x8x8xf32> to vector<128x8xf32>
    %c0_113 = arith.constant 0 : index
    %c2_114 = arith.constant 2 : index
    %c0_115 = arith.constant 0 : index
    %c0_116 = arith.constant 0 : index
    %60 = vector.load %arg10[%c0_113, %c2_114, %c0_115, %c0_116] : memref<2x10x10x8xf32, #tpu.memory_space<vmem>>, vector<2x8x8x8xf32>
    %61 = vector.shape_cast %60 : vector<2x8x8x8xf32> to vector<128x8xf32>
    %c0_117 = arith.constant 0 : index
    %c2_118 = arith.constant 2 : index
    %c1_119 = arith.constant 1 : index
    %c0_120 = arith.constant 0 : index
    %62 = vector.load %arg10[%c0_117, %c2_118, %c1_119, %c0_120] : memref<2x10x10x8xf32, #tpu.memory_space<vmem>>, vector<2x8x8x8xf32>
    %63 = vector.shape_cast %62 : vector<2x8x8x8xf32> to vector<128x8xf32>
    %c0_121 = arith.constant 0 : index
    %c2_122 = arith.constant 2 : index
    %c2_123 = arith.constant 2 : index
    %c0_124 = arith.constant 0 : index
    %64 = vector.load %arg10[%c0_121, %c2_122, %c2_123, %c0_124] : memref<2x10x10x8xf32, #tpu.memory_space<vmem>>, vector<2x8x8x8xf32>
    %65 = vector.shape_cast %64 : vector<2x8x8x8xf32> to vector<128x8xf32>
    %66 = tpu.concatenate %49, %51, %53, %55, %57, %59, %61, %63, %65 in 1 : vector<128x8xf32>, vector<128x8xf32>, vector<128x8xf32>, vector<128x8xf32>, vector<128x8xf32>, vector<128x8xf32>, vector<128x8xf32>, vector<128x8xf32>, vector<128x8xf32> -> vector<128x72xf32>
    %c0_125 = arith.constant 0 : index
    %c0_126 = arith.constant 0 : index
    %67 = vector.load %arg5[%c0_125, %c0_126] : memref<72x8xf32, #tpu.memory_space<vmem>>, vector<72x8xf32>
    %cst_127 = arith.constant dense<0.000000e+00> : vector<128x8xf32>
    %68 = tpu.matmul %66, %67, %cst_127 {dimension_numbers = #tpu.dot_dimension_numbers<[1], [0], [0], [1], [0, 0, 1, 1], [], []>} : vector<128x72xf32>, vector<72x8xf32>, vector<128x8xf32> -> vector<128x8xf32>
    %c0_128 = arith.constant 0 : index
    %c0_129 = arith.constant 0 : index
    %69 = vector.load %arg6[%c0_128, %c0_129] : memref<1x8xf32, #tpu.memory_space<vmem>>, vector<1x8xf32>
    %70 = vector.broadcast %69 : vector<1x8xf32> to vector<128x8xf32>
    %71 = arith.mulf %68, %70 : vector<128x8xf32>
    %c0_130 = arith.constant 0 : index
    %c0_131 = arith.constant 0 : index
    %72 = vector.load %arg7[%c0_130, %c0_131] : memref<1x8xf32, #tpu.memory_space<vmem>>, vector<1x8xf32>
    %73 = vector.broadcast %72 : vector<1x8xf32> to vector<128x8xf32>
    %74 = arith.addf %71, %73 : vector<128x8xf32>
    %cst_132 = arith.constant 0.000000e+00 : f32
    %75 = vector.broadcast %cst_132 : f32 to vector<128x8xf32>
    %76 = arith.maximumf %74, %75 : vector<128x8xf32>
    %77 = vector.shape_cast %76 : vector<128x8xf32> to vector<2x8x8x8xf32>
    %c0_133 = arith.constant 0 : index
    %c0_134 = arith.constant 0 : index
    %c0_135 = arith.constant 0 : index
    %c0_136 = arith.constant 0 : index
    %78 = vector.load %arg8[%c0_133, %c0_134, %c0_135, %c0_136] : memref<2x8x8x8xf32, #tpu.memory_space<vmem>>, vector<2x8x8x8xf32>
    tpu.vector_store %arg8[%c0_133, %c0_134, %c0_135, %c0_136], %77 {strides = array<i32>} : memref<2x8x8x8xf32, #tpu.memory_space<vmem>>, vector<2x8x8x8xf32>,
    return
  }
  func.func @transform_0(%arg0: i32) -> (i32, i32, i32, i32) {
    %c0_i32 = arith.constant 0 : i32
    %c0_i32_0 = arith.constant 0 : i32
    %c0_i32_1 = arith.constant 0 : i32
    %c0_i32_2 = arith.constant 0 : i32
    return %arg0, %c0_i32, %c0_i32_0, %c0_i32_1 : i32, i32, i32, i32
  }
  func.func @transform_1(%arg0: i32) -> (i32, i32) {
    %c0_i32 = arith.constant 0 : i32
    %c0_i32_0 = arith.constant 0 : i32
    %c0_i32_1 = arith.constant 0 : i32
    return %c0_i32, %c0_i32_0 : i32, i32
  }
  func.func @transform_2(%arg0: i32) -> (i32, i32) {
    %c0_i32 = arith.constant 0 : i32
    %c0_i32_0 = arith.constant 0 : i32
    %c0_i32_1 = arith.constant 0 : i32
    return %c0_i32, %c0_i32_0 : i32, i32
  }
  func.func @transform_3(%arg0: i32) -> (i32, i32) {
    %c0_i32 = arith.constant 0 : i32
    %c0_i32_0 = arith.constant 0 : i32
    %c0_i32_1 = arith.constant 0 : i32
    return %c0_i32, %c0_i32_0 : i32, i32
  }
  func.func @transform_4(%arg0: i32) -> (i32, i32) {
    %c0_i32 = arith.constant 0 : i32
    %c0_i32_0 = arith.constant 0 : i32
    %c0_i32_1 = arith.constant 0 : i32
    return %c0_i32, %c0_i32_0 : i32, i32
  }
  func.func @transform_5(%arg0: i32) -> (i32, i32) {
    %c0_i32 = arith.constant 0 : i32
    %c0_i32_0 = arith.constant 0 : i32
    %c0_i32_1 = arith.constant 0 : i32
    return %c0_i32, %c0_i32_0 : i32, i32
  }
  func.func @transform_6(%arg0: i32) -> (i32, i32) {
    %c0_i32 = arith.constant 0 : i32
    %c0_i32_0 = arith.constant 0 : i32
    %c0_i32_1 = arith.constant 0 : i32
    return %c0_i32, %c0_i32_0 : i32, i32
  }
  func.func @transform_7(%arg0: i32) -> (i32, i32, i32, i32) {
    %c0_i32 = arith.constant 0 : i32
    %c0_i32_0 = arith.constant 0 : i32
    %c0_i32_1 = arith.constant 0 : i32
    %c0_i32_2 = arith.constant 0 : i32
    return %arg0, %c0_i32, %c0_i32_0, %c0_i32_1 : i32, i32, i32, i32
  }
}

</mosaic_0001>

<llo_original>
// kernel: tpu_custom_call.1
$region0: #{tpu_custom_call.1}
  #allocation0 [shape = 'u32[]', space=smem, size = 0x4, offset = 0x4, fixed_abs, tag = 'smem constant byte address 0x4 - core index']
  #allocation1 [shape = 'u32[72,128]{1,0:T(1,128)}', space=vmem, size = 0x9000, scoped, tag = 'internal scratch']
  #allocation2 [shape = 'f32[2,10,10,4]{3,2,1,0:T(8,128)}', space=vmem, size = 0x28000, scoped, tag = 'scratch operand']
  #allocation3 [shape = 'f32[2,10,10,8]{3,2,1,0:T(8,128)}', space=vmem, size = 0x28000, scoped, tag = 'scratch operand']
  %s0 = inlined_call_operand.vmem [shape: f32[2,16,16,4], index: 0, kind: input, shape index: {}]
  %s1 = inlined_call_operand.vmem [shape: f32[36,8], index: 1, kind: input, shape index: {}]
  %s2 = inlined_call_operand.vmem [shape: f32[1,8], index: 2, kind: input, shape index: {}]
  %s3 = inlined_call_operand.vmem [shape: f32[1,8], index: 3, kind: input, shape index: {}]
  %s4 = inlined_call_operand.vmem [shape: f32[72,8], index: 4, kind: input, shape index: {}]
  %s5 = inlined_call_operand.vmem [shape: f32[1,8], index: 5, kind: input, shape index: {}]
  %s6 = inlined_call_operand.vmem [shape: f32[1,8], index: 6, kind: input, shape index: {}]
  %s7 = inlined_call_operand.hbm [shape: f32[2,8,8,8], index: 7, kind: output, shape index: {}]
  %s8 = sld [smem:[#allocation0]]
  $region38: #{tpu_custom_call.1} parent=0
    _
  %s10 = ssub.s32 1, %s8
  %s11 = scalar_select 0, %s10, %s8
  $region1: #{tpu_custom_call.1} parent=0
    #allocation4 [shape = 'u8[65536]{0}', space=vmem, size = 0x10000, scoped, tag = 'output window, operand 0, single buffered']
    #allocation5 [shape = 's32[1]{0}', space=sflag, size = 0x4, scoped, tag = 'scoped memory for tpu_custom_call.1']
    %12 = vsyncpa [#allocation5], 0
    // Predicated region
    $region2: #{tpu_custom_call.1} parent=1 // pred_check
      _
    $region3: #{tpu_custom_call.1} parent=1 // pred_check_branch
      %14 = sbr.rel (0) target = $region5
    $region4: #{tpu_custom_call.1} parent=1 // pred_region
      _
    $region5: #{tpu_custom_call.1} parent=1 // pred_fallthru
      _
    // Predicated region
    $region6: #{tpu_custom_call.1} parent=1 // pred_check
      _
    $region7: #{tpu_custom_call.1} parent=1 // pred_check_branch
      %16 = sbr.rel (0) target = $region9
    $region8: #{tpu_custom_call.1} parent=1 // pred_region
      _
    $region9: #{tpu_custom_call.1} parent=1 // pred_fallthru
      _
    // Predicated region
    $region10: #{tpu_custom_call.1} parent=1 // pred_check
      _
    $region11: #{tpu_custom_call.1} parent=1 // pred_check_branch
      %18 = sbr.rel (0) target = $region13
    $region12: #{tpu_custom_call.1} parent=1 // pred_region
      _
    $region13: #{tpu_custom_call.1} parent=1 // pred_fallthru
      _
    // Predicated region
    $region14: #{tpu_custom_call.1} parent=1 // pred_check
      _
    $region15: #{tpu_custom_call.1} parent=1 // pred_check_branch
      %20 = sbr.rel (0) target = $region17
    $region16: #{tpu_custom_call.1} parent=1 // pred_region
      _
    $region17: #{tpu_custom_call.1} parent=1 // pred_fallthru
      _
    // Predicated region
    $region18: #{tpu_custom_call.1} parent=1 // pred_check
      _
    $region19: #{tpu_custom_call.1} parent=1 // pred_check_branch
      %22 = sbr.rel (0) target = $region21
    $region20: #{tpu_custom_call.1} parent=1 // pred_region
      _
    $region21: #{tpu_custom_call.1} parent=1 // pred_fallthru
      _
    // Predicated region
    $region22: #{tpu_custom_call.1} parent=1 // pred_check
      _
    $region23: #{tpu_custom_call.1} parent=1 // pred_check_branch
      %24 = sbr.rel (0) target = $region25
    $region24: #{tpu_custom_call.1} parent=1 // pred_region
      _
    $region25: #{tpu_custom_call.1} parent=1 // pred_fallthru
      _
    // Predicated region
    $region26: #{tpu_custom_call.1} parent=1 // pred_check
      _
    $region27: #{tpu_custom_call.1} parent=1 // pred_check_branch
      %26 = sbr.rel (0) target = $region29
    $region28: #{tpu_custom_call.1} parent=1 // pred_region
      _
    $region29: #{tpu_custom_call.1} parent=1 // pred_fallthru
      _
    %v27 = vld [vmem:[%s0] sm:$0xff]
    %v28 = vld [vmem:[%s0 + $0x8] sm:$0xff]
    %v29 = vld [vmem:[%s0 + $0x10] sm:$0xff]
    %v30 = vld [vmem:[%s0 + $0x18] sm:$0xff]
    %v31 = vld [vmem:[%s0 + $0x20] sm:$0xff]
    %v32 = vld [vmem:[%s0 + $0x28] sm:$0xff]
    %v33 = vld [vmem:[%s0 + $0x30] sm:$0xff]
    %v34 = vld [vmem:[%s0 + $0x38] sm:$0xff]
    %v35 = vld [vmem:[%s0 + $0x40] sm:$0xff]
    %v36 = vld [vmem:[%s0 + $0x48] sm:$0xff]
    %v37 = vld [vmem:[%s0 + $0x50] sm:$0xff]
    %v38 = vld [vmem:[%s0 + $0x58] sm:$0xff]
    %v39 = vld [vmem:[%s0 + $0x60] sm:$0xff]
    %v40 = vld [vmem:[%s0 + $0x68] sm:$0xff]
    %v41 = vld [vmem:[%s0 + $0x70] sm:$0xff]
    %v42 = vld [vmem:[%s0 + $0x78] sm:$0xff]
    %v43 = vld [vmem:[%s0 + $0x80] sm:$0xff]
    %v44 = vld [vmem:[%s0 + $0x88] sm:$0xff]
    %v45 = vld [vmem:[%s0 + $0x90] sm:$0xff]
    %v46 = vld [vmem:[%s0 + $0x98] sm:$0xff]
    %v47 = vld [vmem:[%s0 + $0xa0] sm:$0xff]
    %v48 = vld [vmem:[%s0 + $0xa8] sm:$0xff]
    %v49 = vld [vmem:[%s0 + $0xb0] sm:$0xff]
    %v50 = vld [vmem:[%s0 + $0xb8] sm:$0xff]
    %v51 = vld [vmem:[%s0 + $0xc0] sm:$0xff]
    %v52 = vld [vmem:[%s0 + $0xc8] sm:$0xff]
    %v53 = vld [vmem:[%s0 + $0xd0] sm:$0xff]
    %v54 = vld [vmem:[%s0 + $0xd8] sm:$0xff]
    %v55 = vld [vmem:[%s0 + $0xe0] sm:$0xff]
    %v56 = vld [vmem:[%s0 + $0xe8] sm:$0xff]
    %v57 = vld [vmem:[%s0 + $0xf0] sm:$0xff]
    %v58 = vld [vmem:[%s0 + $0xf8] sm:$0xff]
    %v59 = vld [vmem:[%s0 + $0x100] sm:$0xff]
    %v60 = vld [vmem:[%s0 + $0x108] sm:$0xff]
    %v61 = vld [vmem:[%s0 + $0x110] sm:$0xff]
    %v62 = vld [vmem:[%s0 + $0x118] sm:$0xff]
    %v63 = vld [vmem:[%s0 + $0x120] sm:$0xff]
    %v64 = vld [vmem:[%s0 + $0x128] sm:$0xff]
    %v65 = vld [vmem:[%s0 + $0x130] sm:$0xff]
    %v66 = vld [vmem:[%s0 + $0x138] sm:$0xff]
    %v67 = vld [vmem:[%s0 + $0x140] sm:$0xff]
    %v68 = vld [vmem:[%s0 + $0x148] sm:$0xff]
    %v69 = vld [vmem:[%s0 + $0x150] sm:$0xff]
    %v70 = vld [vmem:[%s0 + $0x158] sm:$0xff]
    %v71 = vld [vmem:[%s0 + $0x160] sm:$0xff]
    %v72 = vld [vmem:[%s0 + $0x168] sm:$0xff]
    %v73 = vld [vmem:[%s0 + $0x170] sm:$0xff]
    %v74 = vld [vmem:[%s0 + $0x178] sm:$0xff]
    %v75 = vld [vmem:[%s0 + $0x180] sm:$0xff]
    %v76 = vld [vmem:[%s0 + $0x188] sm:$0xff]
    %v77 = vld [vmem:[%s0 + $0x190] sm:$0xff]
    %v78 = vld [vmem:[%s0 + $0x198] sm:$0xff]
    %v79 = vld [vmem:[%s0 + $0x1a0] sm:$0xff]
    %v80 = vld [vmem:[%s0 + $0x1a8] sm:$0xff]
    %v81 = vld [vmem:[%s0 + $0x1b0] sm:$0xff]
    %v82 = vld [vmem:[%s0 + $0x1b8] sm:$0xff]
    %v83 = vld [vmem:[%s0 + $0x1c0] sm:$0xff]
    %v84 = vld [vmem:[%s0 + $0x1c8] sm:$0xff]
    %v85 = vld [vmem:[%s0 + $0x1d0] sm:$0xff]
    %v86 = vld [vmem:[%s0 + $0x1d8] sm:$0xff]
    %v87 = vld [vmem:[%s0 + $0x1e0] sm:$0xff]
    %v88 = vld [vmem:[%s0 + $0x1e8] sm:$0xff]
    %v89 = vld [vmem:[%s0 + $0x1f0] sm:$0xff]
    %v90 = vld [vmem:[%s0 + $0x1f8] sm:$0xff]
    %v155 = vrot.slane %v27, 2
    %v156 = vrot.slane %v27, 4
    %v157 = vrot.slane %v27, 6
    %v158 = vrot.slane %v28, 2
    %v159 = vrot.slane %v28, 4
    %v160 = vrot.slane %v28, 6
    %v161 = vrot.slane %v29, 2
    %v162 = vrot.slane %v29, 4
    %v163 = vrot.slane %v29, 6
    %v164 = vrot.slane %v30, 2
    %v165 = vrot.slane %v30, 4
    %v166 = vrot.slane %v30, 6
    %v167 = vrot.slane %v31, 2
    %v168 = vrot.slane %v31, 4
    %v169 = vrot.slane %v31, 6
    %v170 = vrot.slane %v32, 2
    %v171 = vrot.slane %v32, 4
    %v172 = vrot.slane %v32, 6
    %v173 = vrot.slane %v33, 2
    %v174 = vrot.slane %v33, 4
    %v175 = vrot.slane %v33, 6
    %v176 = vrot.slane %v34, 2
    %v177 = vrot.slane %v34, 4
    %v178 = vrot.slane %v34, 6
    %v179 = vrot.slane %v35, 2
    %v180 = vrot.slane %v35, 4
    %v181 = vrot.slane %v35, 6
    %v182 = vrot.slane %v36, 2
    %v183 = vrot.slane %v36, 4
    %v184 = vrot.slane %v36, 6
    %v185 = vrot.slane %v37, 2
    %v186 = vrot.slane %v37, 4
    %v187 = vrot.slane %v37, 6
    %v188 = vrot.slane %v38, 2
    %v189 = vrot.slane %v38, 4
    %v190 = vrot.slane %v38, 6
    %v191 = vrot.slane %v39, 2
    %v192 = vrot.slane %v39, 4
    %v193 = vrot.slane %v39, 6
    %v194 = vrot.slane %v40, 2
    %v195 = vrot.slane %v40, 4
    %v196 = vrot.slane %v40, 6
    %v197 = vrot.slane %v41, 2
    %v198 = vrot.slane %v41, 4
    %v199 = vrot.slane %v41, 6
    %v200 = vrot.slane %v42, 2
    %v201 = vrot.slane %v42, 4
    %v202 = vrot.slane %v42, 6
    %v203 = vrot.slane %v43, 2
    %v204 = vrot.slane %v43, 4
    %v205 = vrot.slane %v43, 6
    %v206 = vrot.slane %v44, 2
    %v207 = vrot.slane %v44, 4
    %v208 = vrot.slane %v44, 6
    %v209 = vrot.slane %v45, 2
    %v210 = vrot.slane %v45, 4
    %v211 = vrot.slane %v45, 6
    %v212 = vrot.slane %v46, 2
    %v213 = vrot.slane %v46, 4
    %v214 = vrot.slane %v46, 6
    %v215 = vrot.slane %v47, 2
    %v216 = vrot.slane %v47, 4
    %v217 = vrot.slane %v47, 6
    %v218 = vrot.slane %v48, 2
    %v219 = vrot.slane %v48, 4
    %v220 = vrot.slane %v48, 6
    %v221 = vrot.slane %v49, 2
    %v222 = vrot.slane %v49, 4
    %v223 = vrot.slane %v49, 6
    %v224 = vrot.slane %v50, 2
    %v225 = vrot.slane %v50, 4
    %v226 = vrot.slane %v50, 6
    %v227 = vrot.slane %v51, 2
    %v228 = vrot.slane %v51, 4
    %v229 = vrot.slane %v51, 6
    %v230 = vrot.slane %v52, 2
    %v231 = vrot.slane %v52, 4
    %v232 = vrot.slane %v52, 6
    %v233 = vrot.slane %v53, 2
    %v234 = vrot.slane %v53, 4
    %v235 = vrot.slane %v53, 6
    %v236 = vrot.slane %v54, 2
    %v237 = vrot.slane %v54, 4
    %v238 = vrot.slane %v54, 6
    %v239 = vrot.slane %v55, 2
    %v240 = vrot.slane %v55, 4
    %v241 = vrot.slane %v55, 6
    %v242 = vrot.slane %v56, 2
    %v243 = vrot.slane %v56, 4
    %v244 = vrot.slane %v56, 6
    %v245 = vrot.slane %v57, 2
    %v246 = vrot.slane %v57, 4
    %v247 = vrot.slane %v57, 6
    %v248 = vrot.slane %v58, 2
    %v249 = vrot.slane %v58, 4
    %v250 = vrot.slane %v58, 6
    %v251 = vrot.slane %v59, 2
    %v252 = vrot.slane %v59, 4
    %v253 = vrot.slane %v59, 6
    %v254 = vrot.slane %v60, 2
    %v255 = vrot.slane %v60, 4
    %v256 = vrot.slane %v60, 6
    %v257 = vrot.slane %v61, 2
    %v258 = vrot.slane %v61, 4
    %v259 = vrot.slane %v61, 6
    %v260 = vrot.slane %v62, 2
    %v261 = vrot.slane %v62, 4
    %v262 = vrot.slane %v62, 6
    %v263 = vrot.slane %v63, 2
    %v264 = vrot.slane %v63, 4
    %v265 = vrot.slane %v63, 6
    %v266 = vrot.slane %v64, 2
    %v267 = vrot.slane %v64, 4
    %v268 = vrot.slane %v64, 6
    %v269 = vrot.slane %v65, 2
    %v270 = vrot.slane %v65, 4
    %v271 = vrot.slane %v65, 6
    %v272 = vrot.slane %v66, 2
    %v273 = vrot.slane %v66, 4
    %v274 = vrot.slane %v66, 6
    %v275 = vrot.slane %v67, 2
    %v276 = vrot.slane %v67, 4
    %v277 = vrot.slane %v67, 6
    %v278 = vrot.slane %v68, 2
    %v279 = vrot.slane %v68, 4
    %v280 = vrot.slane %v68, 6
    %v281 = vrot.slane %v69, 2
    %v282 = vrot.slane %v69, 4
    %v283 = vrot.slane %v69, 6
    %v284 = vrot.slane %v70, 2
    %v285 = vrot.slane %v70, 4
    %v286 = vrot.slane %v70, 6
    %v287 = vrot.slane %v71, 2
    %v288 = vrot.slane %v71, 4
    %v289 = vrot.slane %v71, 6
    %v290 = vrot.slane %v72, 2
    %v291 = vrot.slane %v72, 4
    %v292 = vrot.slane %v72, 6
    %v293 = vrot.slane %v73, 2
    %v294 = vrot.slane %v73, 4
    %v295 = vrot.slane %v73, 6
    %v296 = vrot.slane %v74, 2
    %v297 = vrot.slane %v74, 4
    %v298 = vrot.slane %v74, 6
    %v299 = vrot.slane %v75, 2
    %v300 = vrot.slane %v75, 4
    %v301 = vrot.slane %v75, 6
    %v302 = vrot.slane %v76, 2
    %v303 = vrot.slane %v76, 4
    %v304 = vrot.slane %v76, 6
    %v305 = vrot.slane %v77, 2
    %v306 = vrot.slane %v77, 4
    %v307 = vrot.slane %v77, 6
    %v308 = vrot.slane %v78, 2
    %v309 = vrot.slane %v78, 4
    %v310 = vrot.slane %v78, 6
    %v311 = vrot.slane %v79, 2
    %v312 = vrot.slane %v79, 4
    %v313 = vrot.slane %v79, 6
    %v314 = vrot.slane %v80, 2
    %v315 = vrot.slane %v80, 4
    %v316 = vrot.slane %v80, 6
    %v317 = vrot.slane %v81, 2
    %v318 = vrot.slane %v81, 4
    %v319 = vrot.slane %v81, 6
    %v320 = vrot.slane %v82, 2
    %v321 = vrot.slane %v82, 4
    %v322 = vrot.slane %v82, 6
    %v323 = vrot.slane %v83, 2
    %v324 = vrot.slane %v83, 4
    %v325 = vrot.slane %v83, 6
    %v326 = vrot.slane %v84, 2
    %v327 = vrot.slane %v84, 4
    %v328 = vrot.slane %v84, 6
    %v329 = vrot.slane %v85, 2
    %v330 = vrot.slane %v85, 4
    %v331 = vrot.slane %v85, 6
    %v332 = vrot.slane %v86, 2
    %v333 = vrot.slane %v86, 4
    %v334 = vrot.slane %v86, 6
    %v335 = vrot.slane %v87, 2
    %v336 = vrot.slane %v87, 4
    %v337 = vrot.slane %v87, 6
    %v338 = vrot.slane %v88, 2
    %v339 = vrot.slane %v88, 4
    %v340 = vrot.slane %v88, 6
    %v341 = vrot.slane %v89, 2
    %v342 = vrot.slane %v89, 4
    %v343 = vrot.slane %v89, 6
    %v344 = vrot.slane %v90, 2
    %v345 = vrot.slane %v90, 4
    %v346 = vrot.slane %v90, 6
    %vm539 = vcmask 25600
    %v540 = vsel %vm539, %v27, -inf
    %v541 = vrot.slane %v540, 4
    %v542 = vmax.f32 %v540, %v541
    %v543 = vrot.slane %v542, 2
    %v544 = vmax.f32 %v542, %v543
    %v545 = vrot.slane %v544, 1
    %v546 = vmax.f32 %v544, %v545
    %v547 = vsel %vm539, %v155, -inf
    %v548 = vrot.slane %v547, 4
    %v549 = vmax.f32 %v547, %v548
    %v550 = vrot.slane %v549, 2
    %v551 = vmax.f32 %v549, %v550
    %v552 = vrot.slane %v551, 1
    %v553 = vmax.f32 %v551, %v552
    %v554 = vsel %vm539, %v156, -inf
    %v555 = vrot.slane %v554, 4
    %v556 = vmax.f32 %v554, %v555
    %v557 = vrot.slane %v556, 2
    %v558 = vmax.f32 %v556, %v557
    %v559 = vrot.slane %v558, 1
    %v560 = vmax.f32 %v558, %v559
    %v561 = vsel %vm539, %v157, -inf
    %v562 = vrot.slane %v561, 4
    %v563 = vmax.f32 %v561, %v562
    %v564 = vrot.slane %v563, 2
    %v565 = vmax.f32 %v563, %v564
    %v566 = vrot.slane %v565, 1
    %v567 = vmax.f32 %v565, %v566
    %v568 = vsel %vm539, %v28, -inf
    %v569 = vrot.slane %v568, 4
    %v570 = vmax.f32 %v568, %v569
    %v571 = vrot.slane %v570, 2
    %v572 = vmax.f32 %v570, %v571
    %v573 = vrot.slane %v572, 1
    %v574 = vmax.f32 %v572, %v573
    %v575 = vsel %vm539, %v158, -inf
    %v576 = vrot.slane %v575, 4
    %v577 = vmax.f32 %v575, %v576
    %v578 = vrot.slane %v577, 2
    %v579 = vmax.f32 %v577, %v578
    %v580 = vrot.slane %v579, 1
    %v581 = vmax.f32 %v579, %v580
    %v582 = vsel %vm539, %v159, -inf
    %v583 = vrot.slane %v582, 4
    %v584 = vmax.f32 %v582, %v583
    %v585 = vrot.slane %v584, 2
    %v586 = vmax.f32 %v584, %v585
    %v587 = vrot.slane %v586, 1
    %v588 = vmax.f32 %v586, %v587
    %v589 = vsel %vm539, %v160, -inf
    %v590 = vrot.slane %v589, 4
    %v591 = vmax.f32 %v589, %v590
    %v592 = vrot.slane %v591, 2
    %v593 = vmax.f32 %v591, %v592
    %v594 = vrot.slane %v593, 1
    %v595 = vmax.f32 %v593, %v594
    %v596 = vsel %vm539, %v29, -inf
    %v597 = vrot.slane %v596, 4
    %v598 = vmax.f32 %v596, %v597
    %v599 = vrot.slane %v598, 2
    %v600 = vmax.f32 %v598, %v599
    %v601 = vrot.slane %v600, 1
    %v602 = vmax.f32 %v600, %v601
    %v603 = vsel %vm539, %v161, -inf
    %v604 = vrot.slane %v603, 4
    %v605 = vmax.f32 %v603, %v604
    %v606 = vrot.slane %v605, 2
    %v607 = vmax.f32 %v605, %v606
    %v608 = vrot.slane %v607, 1
    %v609 = vmax.f32 %v607, %v608
    %v610 = vsel %vm539, %v162, -inf
    %v611 = vrot.slane %v610, 4
    %v612 = vmax.f32 %v610, %v611
    %v613 = vrot.slane %v612, 2
    %v614 = vmax.f32 %v612, %v613
    %v615 = vrot.slane %v614, 1
    %v616 = vmax.f32 %v614, %v615
    %v617 = vsel %vm539, %v163, -inf
    %v618 = vrot.slane %v617, 4
    %v619 = vmax.f32 %v617, %v618
    %v620 = vrot.slane %v619, 2
    %v621 = vmax.f32 %v619, %v620
    %v622 = vrot.slane %v621, 1
    %v623 = vmax.f32 %v621, %v622
    %v624 = vsel %vm539, %v30, -inf
    %v625 = vrot.slane %v624, 4
    %v626 = vmax.f32 %v624, %v625
    %v627 = vrot.slane %v626, 2
    %v628 = vmax.f32 %v626, %v627
    %v629 = vrot.slane %v628, 1
    %v630 = vmax.f32 %v628, %v629
    %v631 = vsel %vm539, %v164, -inf
    %v632 = vrot.slane %v631, 4
    %v633 = vmax.f32 %v631, %v632
    %v634 = vrot.slane %v633, 2
    %v635 = vmax.f32 %v633, %v634
    %v636 = vrot.slane %v635, 1
    %v637 = vmax.f32 %v635, %v636
    %v638 = vsel %vm539, %v165, -inf
    %v639 = vrot.slane %v638, 4
    %v640 = vmax.f32 %v638, %v639
    %v641 = vrot.slane %v640, 2
    %v642 = vmax.f32 %v640, %v641
    %v643 = vrot.slane %v642, 1
    %v644 = vmax.f32 %v642, %v643
    %v645 = vsel %vm539, %v166, -inf
    %v646 = vrot.slane %v645, 4
    %v647 = vmax.f32 %v645, %v646
    %v648 = vrot.slane %v647, 2
    %v649 = vmax.f32 %v647, %v648
    %v650 = vrot.slane %v649, 1
    %v651 = vmax.f32 %v649, %v650
    %v652 = vsel %vm539, %v31, -inf
    %v653 = vrot.slane %v652, 4
    %v654 = vmax.f32 %v652, %v653
    %v655 = vrot.slane %v654, 2
    %v656 = vmax.f32 %v654, %v655
    %v657 = vrot.slane %v656, 1
    %v658 = vmax.f32 %v656, %v657
    %v659 = vsel %vm539, %v167, -inf
    %v660 = vrot.slane %v659, 4
    %v661 = vmax.f32 %v659, %v660
    %v662 = vrot.slane %v661, 2
    %v663 = vmax.f32 %v661, %v662
    %v664 = vrot.slane %v663, 1
    %v665 = vmax.f32 %v663, %v664
    %v666 = vsel %vm539, %v168, -inf
    %v667 = vrot.slane %v666, 4
    %v668 = vmax.f32 %v666, %v667
    %v669 = vrot.slane %v668, 2
    %v670 = vmax.f32 %v668, %v669
    %v671 = vrot.slane %v670, 1
    %v672 = vmax.f32 %v670, %v671
    %v673 = vsel %vm539, %v169, -inf
    %v674 = vrot.slane %v673, 4
    %v675 = vmax.f32 %v673, %v674
    %v676 = vrot.slane %v675, 2
    %v677 = vmax.f32 %v675, %v676
    %v678 = vrot.slane %v677, 1
    %v679 = vmax.f32 %v677, %v678
    %v680 = vsel %vm539, %v32, -inf
    %v681 = vrot.slane %v680, 4
    %v682 = vmax.f32 %v680, %v681
    %v683 = vrot.slane %v682, 2
    %v684 = vmax.f32 %v682, %v683
    %v685 = vrot.slane %v684, 1
    %v686 = vmax.f32 %v684, %v685
    %v687 = vsel %vm539, %v170, -inf
    %v688 = vrot.slane %v687, 4
    %v689 = vmax.f32 %v687, %v688
    %v690 = vrot.slane %v689, 2
    %v691 = vmax.f32 %v689, %v690
    %v692 = vrot.slane %v691, 1
    %v693 = vmax.f32 %v691, %v692
    %v694 = vsel %vm539, %v171, -inf
    %v695 = vrot.slane %v694, 4
    %v696 = vmax.f32 %v694, %v695
    %v697 = vrot.slane %v696, 2
    %v698 = vmax.f32 %v696, %v697
    %v699 = vrot.slane %v698, 1
    %v700 = vmax.f32 %v698, %v699
    %v701 = vsel %vm539, %v172, -inf
    %v702 = vrot.slane %v701, 4
    %v703 = vmax.f32 %v701, %v702
    %v704 = vrot.slane %v703, 2
    %v705 = vmax.f32 %v703, %v704
    %v706 = vrot.slane %v705, 1
    %v707 = vmax.f32 %v705, %v706
    %v708 = vsel %vm539, %v33, -inf
    %v709 = vrot.slane %v708, 4
    %v710 = vmax.f32 %v708, %v709
    %v711 = vrot.slane %v710, 2
    %v712 = vmax.f32 %v710, %v711
    %v713 = vrot.slane %v712, 1
    %v714 = vmax.f32 %v712, %v713
    %v715 = vsel %vm539, %v173, -inf
    %v716 = vrot.slane %v715, 4
    %v717 = vmax.f32 %v715, %v716
    %v718 = vrot.slane %v717, 2
    %v719 = vmax.f32 %v717, %v718
    %v720 = vrot.slane %v719, 1
    %v721 = vmax.f32 %v719, %v720
    %v722 = vsel %vm539, %v174, -inf
    %v723 = vrot.slane %v722, 4
    %v724 = vmax.f32 %v722, %v723
    %v725 = vrot.slane %v724, 2
    %v726 = vmax.f32 %v724, %v725
    %v727 = vrot.slane %v726, 1
    %v728 = vmax.f32 %v726, %v727
    %v729 = vsel %vm539, %v175, -inf
    %v730 = vrot.slane %v729, 4
    %v731 = vmax.f32 %v729, %v730
    %v732 = vrot.slane %v731, 2
    %v733 = vmax.f32 %v731, %v732
    %v734 = vrot.slane %v733, 1
    %v735 = vmax.f32 %v733, %v734
    %v736 = vsel %vm539, %v34, -inf
    %v737 = vrot.slane %v736, 4
    %v738 = vmax.f32 %v736, %v737
    %v739 = vrot.slane %v738, 2
    %v740 = vmax.f32 %v738, %v739
    %v741 = vrot.slane %v740, 1
    %v742 = vmax.f32 %v740, %v741
    %v743 = vsel %vm539, %v176, -inf
    %v744 = vrot.slane %v743, 4
    %v745 = vmax.f32 %v743, %v744
    %v746 = vrot.slane %v745, 2
    %v747 = vmax.f32 %v745, %v746
    %v748 = vrot.slane %v747, 1
    %v749 = vmax.f32 %v747, %v748
    %v750 = vsel %vm539, %v177, -inf
    %v751 = vrot.slane %v750, 4
    %v752 = vmax.f32 %v750, %v751
    %v753 = vrot.slane %v752, 2
    %v754 = vmax.f32 %v752, %v753
    %v755 = vrot.slane %v754, 1
    %v756 = vmax.f32 %v754, %v755
    %v757 = vsel %vm539, %v178, -inf
    %v758 = vrot.slane %v757, 4
    %v759 = vmax.f32 %v757, %v758
    %v760 = vrot.slane %v759, 2
    %v761 = vmax.f32 %v759, %v760
    %v762 = vrot.slane %v761, 1
    %v763 = vmax.f32 %v761, %v762
    %v764 = vsel %vm539, %v35, -inf
    %v765 = vrot.slane %v764, 4
    %v766 = vmax.f32 %v764, %v765
    %v767 = vrot.slane %v766, 2
    %v768 = vmax.f32 %v766, %v767
    %v769 = vrot.slane %v768, 1
    %v770 = vmax.f32 %v768, %v769
    %v771 = vsel %vm539, %v179, -inf
    %v772 = vrot.slane %v771, 4
    %v773 = vmax.f32 %v771, %v772
    %v774 = vrot.slane %v773, 2
    %v775 = vmax.f32 %v773, %v774
    %v776 = vrot.slane %v775, 1
    %v777 = vmax.f32 %v775, %v776
    %v778 = vsel %vm539, %v180, -inf
    %v779 = vrot.slane %v778, 4
    %v780 = vmax.f32 %v778, %v779
    %v781 = vrot.slane %v780, 2
    %v782 = vmax.f32 %v780, %v781
    %v783 = vrot.slane %v782, 1
    %v784 = vmax.f32 %v782, %v783
    %v785 = vsel %vm539, %v181, -inf
    %v786 = vrot.slane %v785, 4
    %v787 = vmax.f32 %v785, %v786
    %v788 = vrot.slane %v787, 2
    %v789 = vmax.f32 %v787, %v788
    %v790 = vrot.slane %v789, 1
    %v791 = vmax.f32 %v789, %v790
    %v792 = vsel %vm539, %v36, -inf
    %v793 = vrot.slane %v792, 4
    %v794 = vmax.f32 %v792, %v793
    %v795 = vrot.slane %v794, 2
    %v796 = vmax.f32 %v794, %v795
    %v797 = vrot.slane %v796, 1
    %v798 = vmax.f32 %v796, %v797
    %v799 = vsel %vm539, %v182, -inf
    %v800 = vrot.slane %v799, 4
    %v801 = vmax.f32 %v799, %v800
    %v802 = vrot.slane %v801, 2
    %v803 = vmax.f32 %v801, %v802
    %v804 = vrot.slane %v803, 1
    %v805 = vmax.f32 %v803, %v804
    %v806 = vsel %vm539, %v183, -inf
    %v807 = vrot.slane %v806, 4
    %v808 = vmax.f32 %v806, %v807
    %v809 = vrot.slane %v808, 2
    %v810 = vmax.f32 %v808, %v809
    %v811 = vrot.slane %v810, 1
    %v812 = vmax.f32 %v810, %v811
    %v813 = vsel %vm539, %v184, -inf
    %v814 = vrot.slane %v813, 4
    %v815 = vmax.f32 %v813, %v814
    %v816 = vrot.slane %v815, 2
    %v817 = vmax.f32 %v815, %v816
    %v818 = vrot.slane %v817, 1
    %v819 = vmax.f32 %v817, %v818
    %v820 = vsel %vm539, %v37, -inf
    %v821 = vrot.slane %v820, 4
    %v822 = vmax.f32 %v820, %v821
    %v823 = vrot.slane %v822, 2
    %v824 = vmax.f32 %v822, %v823
    %v825 = vrot.slane %v824, 1
    %v826 = vmax.f32 %v824, %v825
    %v827 = vsel %vm539, %v185, -inf
    %v828 = vrot.slane %v827, 4
    %v829 = vmax.f32 %v827, %v828
    %v830 = vrot.slane %v829, 2
    %v831 = vmax.f32 %v829, %v830
    %v832 = vrot.slane %v831, 1
    %v833 = vmax.f32 %v831, %v832
    %v834 = vsel %vm539, %v186, -inf
    %v835 = vrot.slane %v834, 4
    %v836 = vmax.f32 %v834, %v835
    %v837 = vrot.slane %v836, 2
    %v838 = vmax.f32 %v836, %v837
    %v839 = vrot.slane %v838, 1
    %v840 = vmax.f32 %v838, %v839
    %v841 = vsel %vm539, %v187, -inf
    %v842 = vrot.slane %v841, 4
    %v843 = vmax.f32 %v841, %v842
    %v844 = vrot.slane %v843, 2
    %v845 = vmax.f32 %v843, %v844
    %v846 = vrot.slane %v845, 1
    %v847 = vmax.f32 %v845, %v846
    %v848 = vsel %vm539, %v38, -inf
    %v849 = vrot.slane %v848, 4
    %v850 = vmax.f32 %v848, %v849
    %v851 = vrot.slane %v850, 2
    %v852 = vmax.f32 %v850, %v851
    %v853 = vrot.slane %v852, 1
    %v854 = vmax.f32 %v852, %v853
    %v855 = vsel %vm539, %v188, -inf
    %v856 = vrot.slane %v855, 4
    %v857 = vmax.f32 %v855, %v856
    %v858 = vrot.slane %v857, 2
    %v859 = vmax.f32 %v857, %v858
    %v860 = vrot.slane %v859, 1
    %v861 = vmax.f32 %v859, %v860
    %v862 = vsel %vm539, %v189, -inf
    %v863 = vrot.slane %v862, 4
    %v864 = vmax.f32 %v862, %v863
    %v865 = vrot.slane %v864, 2
    %v866 = vmax.f32 %v864, %v865
    %v867 = vrot.slane %v866, 1
    %v868 = vmax.f32 %v866, %v867
    %v869 = vsel %vm539, %v190, -inf
    %v870 = vrot.slane %v869, 4
    %v871 = vmax.f32 %v869, %v870
    %v872 = vrot.slane %v871, 2
    %v873 = vmax.f32 %v871, %v872
    %v874 = vrot.slane %v873, 1
    %v875 = vmax.f32 %v873, %v874
    %v876 = vsel %vm539, %v39, -inf
    %v877 = vrot.slane %v876, 4
    %v878 = vmax.f32 %v876, %v877
    %v879 = vrot.slane %v878, 2
    %v880 = vmax.f32 %v878, %v879
    %v881 = vrot.slane %v880, 1
    %v882 = vmax.f32 %v880, %v881
    %v883 = vsel %vm539, %v191, -inf
    %v884 = vrot.slane %v883, 4
    %v885 = vmax.f32 %v883, %v884
    %v886 = vrot.slane %v885, 2
    %v887 = vmax.f32 %v885, %v886
    %v888 = vrot.slane %v887, 1
    %v889 = vmax.f32 %v887, %v888
    %v890 = vsel %vm539, %v192, -inf
    %v891 = vrot.slane %v890, 4
    %v892 = vmax.f32 %v890, %v891
    %v893 = vrot.slane %v892, 2
    %v894 = vmax.f32 %v892, %v893
    %v895 = vrot.slane %v894, 1
    %v896 = vmax.f32 %v894, %v895
    %v897 = vsel %vm539, %v193, -inf
    %v898 = vrot.slane %v897, 4
    %v899 = vmax.f32 %v897, %v898
    %v900 = vrot.slane %v899, 2
    %v901 = vmax.f32 %v899, %v900
    %v902 = vrot.slane %v901, 1
    %v903 = vmax.f32 %v901, %v902
    %v904 = vsel %vm539, %v40, -inf
    %v905 = vrot.slane %v904, 4
    %v906 = vmax.f32 %v904, %v905
    %v907 = vrot.slane %v906, 2
    %v908 = vmax.f32 %v906, %v907
    %v909 = vrot.slane %v908, 1
    %v910 = vmax.f32 %v908, %v909
    %v911 = vsel %vm539, %v194, -inf
    %v912 = vrot.slane %v911, 4
    %v913 = vmax.f32 %v911, %v912
    %v914 = vrot.slane %v913, 2
    %v915 = vmax.f32 %v913, %v914
    %v916 = vrot.slane %v915, 1
    %v917 = vmax.f32 %v915, %v916
    %v918 = vsel %vm539, %v195, -inf
    %v919 = vrot.slane %v918, 4
    %v920 = vmax.f32 %v918, %v919
    %v921 = vrot.slane %v920, 2
    %v922 = vmax.f32 %v920, %v921
    %v923 = vrot.slane %v922, 1
    %v924 = vmax.f32 %v922, %v923
    %v925 = vsel %vm539, %v196, -inf
    %v926 = vrot.slane %v925, 4
    %v927 = vmax.f32 %v925, %v926
    %v928 = vrot.slane %v927, 2
    %v929 = vmax.f32 %v927, %v928
    %v930 = vrot.slane %v929, 1
    %v931 = vmax.f32 %v929, %v930
    %v932 = vsel %vm539, %v41, -inf
    %v933 = vrot.slane %v932, 4
    %v934 = vmax.f32 %v932, %v933
    %v935 = vrot.slane %v934, 2
    %v936 = vmax.f32 %v934, %v935
    %v937 = vrot.slane %v936, 1
    %v938 = vmax.f32 %v936, %v937
    %v939 = vsel %vm539, %v197, -inf
    %v940 = vrot.slane %v939, 4
    %v941 = vmax.f32 %v939, %v940
    %v942 = vrot.slane %v941, 2
    %v943 = vmax.f32 %v941, %v942
    %v944 = vrot.slane %v943, 1
    %v945 = vmax.f32 %v943, %v944
    %v946 = vsel %vm539, %v198, -inf
    %v947 = vrot.slane %v946, 4
    %v948 = vmax.f32 %v946, %v947
    %v949 = vrot.slane %v948, 2
    %v950 = vmax.f32 %v948, %v949
    %v951 = vrot.slane %v950, 1
    %v952 = vmax.f32 %v950, %v951
    %v953 = vsel %vm539, %v199, -inf
    %v954 = vrot.slane %v953, 4
    %v955 = vmax.f32 %v953, %v954
    %v956 = vrot.slane %v955, 2
    %v957 = vmax.f32 %v955, %v956
    %v958 = vrot.slane %v957, 1
    %v959 = vmax.f32 %v957, %v958
    %v960 = vsel %vm539, %v42, -inf
    %v961 = vrot.slane %v960, 4
    %v962 = vmax.f32 %v960, %v961
    %v963 = vrot.slane %v962, 2
    %v964 = vmax.f32 %v962, %v963
    %v965 = vrot.slane %v964, 1
    %v966 = vmax.f32 %v964, %v965
    %v967 = vsel %vm539, %v200, -inf
    %v968 = vrot.slane %v967, 4
    %v969 = vmax.f32 %v967, %v968
    %v970 = vrot.slane %v969, 2
    %v971 = vmax.f32 %v969, %v970
    %v972 = vrot.slane %v971, 1
    %v973 = vmax.f32 %v971, %v972
    %v974 = vsel %vm539, %v201, -inf
    %v975 = vrot.slane %v974, 4
    %v976 = vmax.f32 %v974, %v975
    %v977 = vrot.slane %v976, 2
    %v978 = vmax.f32 %v976, %v977
    %v979 = vrot.slane %v978, 1
    %v980 = vmax.f32 %v978, %v979
    %v981 = vsel %vm539, %v202, -inf
    %v982 = vrot.slane %v981, 4
    %v983 = vmax.f32 %v981, %v982
    %v984 = vrot.slane %v983, 2
    %v985 = vmax.f32 %v983, %v984
    %v986 = vrot.slane %v985, 1
    %v987 = vmax.f32 %v985, %v986
    %v988 = vsel %vm539, %v43, -inf
    %v989 = vrot.slane %v988, 4
    %v990 = vmax.f32 %v988, %v989
    %v991 = vrot.slane %v990, 2
    %v992 = vmax.f32 %v990, %v991
    %v993 = vrot.slane %v992, 1
    %v994 = vmax.f32 %v992, %v993
    %v995 = vsel %vm539, %v203, -inf
    %v996 = vrot.slane %v995, 4
    %v997 = vmax.f32 %v995, %v996
    %v998 = vrot.slane %v997, 2
    %v999 = vmax.f32 %v997, %v998
    %v1000 = vrot.slane %v999, 1
    %v1001 = vmax.f32 %v999, %v1000
    %v1002 = vsel %vm539, %v204, -inf
    %v1003 = vrot.slane %v1002, 4
    %v1004 = vmax.f32 %v1002, %v1003
    %v1005 = vrot.slane %v1004, 2
    %v1006 = vmax.f32 %v1004, %v1005
    %v1007 = vrot.slane %v1006, 1
    %v1008 = vmax.f32 %v1006, %v1007
    %v1009 = vsel %vm539, %v205, -inf
    %v1010 = vrot.slane %v1009, 4
    %v1011 = vmax.f32 %v1009, %v1010
    %v1012 = vrot.slane %v1011, 2
    %v1013 = vmax.f32 %v1011, %v1012
    %v1014 = vrot.slane %v1013, 1
    %v1015 = vmax.f32 %v1013, %v1014
    %v1016 = vsel %vm539, %v44, -inf
    %v1017 = vrot.slane %v1016, 4
    %v1018 = vmax.f32 %v1016, %v1017
    %v1019 = vrot.slane %v1018, 2
    %v1020 = vmax.f32 %v1018, %v1019
    %v1021 = vrot.slane %v1020, 1
    %v1022 = vmax.f32 %v1020, %v1021
    %v1023 = vsel %vm539, %v206, -inf
    %v1024 = vrot.slane %v1023, 4
    %v1025 = vmax.f32 %v1023, %v1024
    %v1026 = vrot.slane %v1025, 2
    %v1027 = vmax.f32 %v1025, %v1026
    %v1028 = vrot.slane %v1027, 1
    %v1029 = vmax.f32 %v1027, %v1028
    %v1030 = vsel %vm539, %v207, -inf
    %v1031 = vrot.slane %v1030, 4
    %v1032 = vmax.f32 %v1030, %v1031
    %v1033 = vrot.slane %v1032, 2
    %v1034 = vmax.f32 %v1032, %v1033
    %v1035 = vrot.slane %v1034, 1
    %v1036 = vmax.f32 %v1034, %v1035
    %v1037 = vsel %vm539, %v208, -inf
    %v1038 = vrot.slane %v1037, 4
    %v1039 = vmax.f32 %v1037, %v1038
    %v1040 = vrot.slane %v1039, 2
    %v1041 = vmax.f32 %v1039, %v1040
    %v1042 = vrot.slane %v1041, 1
    %v1043 = vmax.f32 %v1041, %v1042
    %v1044 = vsel %vm539, %v45, -inf
    %v1045 = vrot.slane %v1044, 4
    %v1046 = vmax.f32 %v1044, %v1045
    %v1047 = vrot.slane %v1046, 2
    %v1048 = vmax.f32 %v1046, %v1047
    %v1049 = vrot.slane %v1048, 1
    %v1050 = vmax.f32 %v1048, %v1049
    %v1051 = vsel %vm539, %v209, -inf
    %v1052 = vrot.slane %v1051, 4
    %v1053 = vmax.f32 %v1051, %v1052
    %v1054 = vrot.slane %v1053, 2
    %v1055 = vmax.f32 %v1053, %v1054
    %v1056 = vrot.slane %v1055, 1
    %v1057 = vmax.f32 %v1055, %v1056
    %v1058 = vsel %vm539, %v210, -inf
    %v1059 = vrot.slane %v1058, 4
    %v1060 = vmax.f32 %v1058, %v1059
    %v1061 = vrot.slane %v1060, 2
    %v1062 = vmax.f32 %v1060, %v1061
    %v1063 = vrot.slane %v1062, 1
    %v1064 = vmax.f32 %v1062, %v1063
    %v1065 = vsel %vm539, %v211, -inf
    %v1066 = vrot.slane %v1065, 4
    %v1067 = vmax.f32 %v1065, %v1066
    %v1068 = vrot.slane %v1067, 2
    %v1069 = vmax.f32 %v1067, %v1068
    %v1070 = vrot.slane %v1069, 1
    %v1071 = vmax.f32 %v1069, %v1070
    %v1072 = vsel %vm539, %v46, -inf
    %v1073 = vrot.slane %v1072, 4
    %v1074 = vmax.f32 %v1072, %v1073
    %v1075 = vrot.slane %v1074, 2
    %v1076 = vmax.f32 %v1074, %v1075
    %v1077 = vrot.slane %v1076, 1
    %v1078 = vmax.f32 %v1076, %v1077
    %v1079 = vsel %vm539, %v212, -inf
    %v1080 = vrot.slane %v1079, 4
    %v1081 = vmax.f32 %v1079, %v1080
    %v1082 = vrot.slane %v1081, 2
    %v1083 = vmax.f32 %v1081, %v1082
    %v1084 = vrot.slane %v1083, 1
    %v1085 = vmax.f32 %v1083, %v1084
    %v1086 = vsel %vm539, %v213, -inf
    %v1087 = vrot.slane %v1086, 4
    %v1088 = vmax.f32 %v1086, %v1087
    %v1089 = vrot.slane %v1088, 2
    %v1090 = vmax.f32 %v1088, %v1089
    %v1091 = vrot.slane %v1090, 1
    %v1092 = vmax.f32 %v1090, %v1091
    %v1093 = vsel %vm539, %v214, -inf
    %v1094 = vrot.slane %v1093, 4
    %v1095 = vmax.f32 %v1093, %v1094
    %v1096 = vrot.slane %v1095, 2
    %v1097 = vmax.f32 %v1095, %v1096
    %v1098 = vrot.slane %v1097, 1
    %v1099 = vmax.f32 %v1097, %v1098
    %v1100 = vsel %vm539, %v47, -inf
    %v1101 = vrot.slane %v1100, 4
    %v1102 = vmax.f32 %v1100, %v1101
    %v1103 = vrot.slane %v1102, 2
    %v1104 = vmax.f32 %v1102, %v1103
    %v1105 = vrot.slane %v1104, 1
    %v1106 = vmax.f32 %v1104, %v1105
    %v1107 = vsel %vm539, %v215, -inf
    %v1108 = vrot.slane %v1107, 4
    %v1109 = vmax.f32 %v1107, %v1108
    %v1110 = vrot.slane %v1109, 2
    %v1111 = vmax.f32 %v1109, %v1110
    %v1112 = vrot.slane %v1111, 1
    %v1113 = vmax.f32 %v1111, %v1112
    %v1114 = vsel %vm539, %v216, -inf
    %v1115 = vrot.slane %v1114, 4
    %v1116 = vmax.f32 %v1114, %v1115
    %v1117 = vrot.slane %v1116, 2
    %v1118 = vmax.f32 %v1116, %v1117
    %v1119 = vrot.slane %v1118, 1
    %v1120 = vmax.f32 %v1118, %v1119
    %v1121 = vsel %vm539, %v217, -inf
    %v1122 = vrot.slane %v1121, 4
    %v1123 = vmax.f32 %v1121, %v1122
    %v1124 = vrot.slane %v1123, 2
    %v1125 = vmax.f32 %v1123, %v1124
    %v1126 = vrot.slane %v1125, 1
    %v1127 = vmax.f32 %v1125, %v1126
    %v1128 = vsel %vm539, %v48, -inf
    %v1129 = vrot.slane %v1128, 4
    %v1130 = vmax.f32 %v1128, %v1129
    %v1131 = vrot.slane %v1130, 2
    %v1132 = vmax.f32 %v1130, %v1131
    %v1133 = vrot.slane %v1132, 1
    %v1134 = vmax.f32 %v1132, %v1133
    %v1135 = vsel %vm539, %v218, -inf
    %v1136 = vrot.slane %v1135, 4
    %v1137 = vmax.f32 %v1135, %v1136
    %v1138 = vrot.slane %v1137, 2
    %v1139 = vmax.f32 %v1137, %v1138
    %v1140 = vrot.slane %v1139, 1
    %v1141 = vmax.f32 %v1139, %v1140
    %v1142 = vsel %vm539, %v219, -inf
    %v1143 = vrot.slane %v1142, 4
    %v1144 = vmax.f32 %v1142, %v1143
    %v1145 = vrot.slane %v1144, 2
    %v1146 = vmax.f32 %v1144, %v1145
    %v1147 = vrot.slane %v1146, 1
    %v1148 = vmax.f32 %v1146, %v1147
    %v1149 = vsel %vm539, %v220, -inf
    %v1150 = vrot.slane %v1149, 4
    %v1151 = vmax.f32 %v1149, %v1150
    %v1152 = vrot.slane %v1151, 2
    %v1153 = vmax.f32 %v1151, %v1152
    %v1154 = vrot.slane %v1153, 1
    %v1155 = vmax.f32 %v1153, %v1154
    %v1156 = vsel %vm539, %v49, -inf
    %v1157 = vrot.slane %v1156, 4
    %v1158 = vmax.f32 %v1156, %v1157
    %v1159 = vrot.slane %v1158, 2
    %v1160 = vmax.f32 %v1158, %v1159
    %v1161 = vrot.slane %v1160, 1
    %v1162 = vmax.f32 %v1160, %v1161
    %v1163 = vsel %vm539, %v221, -inf
    %v1164 = vrot.slane %v1163, 4
    %v1165 = vmax.f32 %v1163, %v1164
    %v1166 = vrot.slane %v1165, 2
    %v1167 = vmax.f32 %v1165, %v1166
    %v1168 = vrot.slane %v1167, 1
    %v1169 = vmax.f32 %v1167, %v1168
    %v1170 = vsel %vm539, %v222, -inf
    %v1171 = vrot.slane %v1170, 4
    %v1172 = vmax.f32 %v1170, %v1171
    %v1173 = vrot.slane %v1172, 2
    %v1174 = vmax.f32 %v1172, %v1173
    %v1175 = vrot.slane %v1174, 1
    %v1176 = vmax.f32 %v1174, %v1175
    %v1177 = vsel %vm539, %v223, -inf
    %v1178 = vrot.slane %v1177, 4
    %v1179 = vmax.f32 %v1177, %v1178
    %v1180 = vrot.slane %v1179, 2
    %v1181 = vmax.f32 %v1179, %v1180
    %v1182 = vrot.slane %v1181, 1
    %v1183 = vmax.f32 %v1181, %v1182
    %v1184 = vsel %vm539, %v50, -inf
    %v1185 = vrot.slane %v1184, 4
    %v1186 = vmax.f32 %v1184, %v1185
    %v1187 = vrot.slane %v1186, 2
    %v1188 = vmax.f32 %v1186, %v1187
    %v1189 = vrot.slane %v1188, 1
    %v1190 = vmax.f32 %v1188, %v1189
    %v1191 = vsel %vm539, %v224, -inf
    %v1192 = vrot.slane %v1191, 4
    %v1193 = vmax.f32 %v1191, %v1192
    %v1194 = vrot.slane %v1193, 2
    %v1195 = vmax.f32 %v1193, %v1194
    %v1196 = vrot.slane %v1195, 1
    %v1197 = vmax.f32 %v1195, %v1196
    %v1198 = vsel %vm539, %v225, -inf
    %v1199 = vrot.slane %v1198, 4
    %v1200 = vmax.f32 %v1198, %v1199
    %v1201 = vrot.slane %v1200, 2
    %v1202 = vmax.f32 %v1200, %v1201
    %v1203 = vrot.slane %v1202, 1
    %v1204 = vmax.f32 %v1202, %v1203
    %v1205 = vsel %vm539, %v226, -inf
    %v1206 = vrot.slane %v1205, 4
    %v1207 = vmax.f32 %v1205, %v1206
    %v1208 = vrot.slane %v1207, 2
    %v1209 = vmax.f32 %v1207, %v1208
    %v1210 = vrot.slane %v1209, 1
    %v1211 = vmax.f32 %v1209, %v1210
    %v1212 = vsel %vm539, %v51, -inf
    %v1213 = vrot.slane %v1212, 4
    %v1214 = vmax.f32 %v1212, %v1213
    %v1215 = vrot.slane %v1214, 2
    %v1216 = vmax.f32 %v1214, %v1215
    %v1217 = vrot.slane %v1216, 1
    %v1218 = vmax.f32 %v1216, %v1217
    %v1219 = vsel %vm539, %v227, -inf
    %v1220 = vrot.slane %v1219, 4
    %v1221 = vmax.f32 %v1219, %v1220
    %v1222 = vrot.slane %v1221, 2
    %v1223 = vmax.f32 %v1221, %v1222
    %v1224 = vrot.slane %v1223, 1
    %v1225 = vmax.f32 %v1223, %v1224
    %v1226 = vsel %vm539, %v228, -inf
    %v1227 = vrot.slane %v1226, 4
    %v1228 = vmax.f32 %v1226, %v1227
    %v1229 = vrot.slane %v1228, 2
    %v1230 = vmax.f32 %v1228, %v1229
    %v1231 = vrot.slane %v1230, 1
    %v1232 = vmax.f32 %v1230, %v1231
    %v1233 = vsel %vm539, %v229, -inf
    %v1234 = vrot.slane %v1233, 4
    %v1235 = vmax.f32 %v1233, %v1234
    %v1236 = vrot.slane %v1235, 2
    %v1237 = vmax.f32 %v1235, %v1236
    %v1238 = vrot.slane %v1237, 1
    %v1239 = vmax.f32 %v1237, %v1238
    %v1240 = vsel %vm539, %v52, -inf
    %v1241 = vrot.slane %v1240, 4
    %v1242 = vmax.f32 %v1240, %v1241
    %v1243 = vrot.slane %v1242, 2
    %v1244 = vmax.f32 %v1242, %v1243
    %v1245 = vrot.slane %v1244, 1
    %v1246 = vmax.f32 %v1244, %v1245
    %v1247 = vsel %vm539, %v230, -inf
    %v1248 = vrot.slane %v1247, 4
    %v1249 = vmax.f32 %v1247, %v1248
    %v1250 = vrot.slane %v1249, 2
    %v1251 = vmax.f32 %v1249, %v1250
    %v1252 = vrot.slane %v1251, 1
    %v1253 = vmax.f32 %v1251, %v1252
    %v1254 = vsel %vm539, %v231, -inf
    %v1255 = vrot.slane %v1254, 4
    %v1256 = vmax.f32 %v1254, %v1255
    %v1257 = vrot.slane %v1256, 2
    %v1258 = vmax.f32 %v1256, %v1257
    %v1259 = vrot.slane %v1258, 1
    %v1260 = vmax.f32 %v1258, %v1259
    %v1261 = vsel %vm539, %v232, -inf
    %v1262 = vrot.slane %v1261, 4
    %v1263 = vmax.f32 %v1261, %v1262
    %v1264 = vrot.slane %v1263, 2
    %v1265 = vmax.f32 %v1263, %v1264
    %v1266 = vrot.slane %v1265, 1
    %v1267 = vmax.f32 %v1265, %v1266
    %v1268 = vsel %vm539, %v53, -inf
    %v1269 = vrot.slane %v1268, 4
    %v1270 = vmax.f32 %v1268, %v1269
    %v1271 = vrot.slane %v1270, 2
    %v1272 = vmax.f32 %v1270, %v1271
    %v1273 = vrot.slane %v1272, 1
    %v1274 = vmax.f32 %v1272, %v1273
    %v1275 = vsel %vm539, %v233, -inf
    %v1276 = vrot.slane %v1275, 4
    %v1277 = vmax.f32 %v1275, %v1276
    %v1278 = vrot.slane %v1277, 2
    %v1279 = vmax.f32 %v1277, %v1278
    %v1280 = vrot.slane %v1279, 1
    %v1281 = vmax.f32 %v1279, %v1280
    %v1282 = vsel %vm539, %v234, -inf
    %v1283 = vrot.slane %v1282, 4
    %v1284 = vmax.f32 %v1282, %v1283
    %v1285 = vrot.slane %v1284, 2
    %v1286 = vmax.f32 %v1284, %v1285
    %v1287 = vrot.slane %v1286, 1
    %v1288 = vmax.f32 %v1286, %v1287
    %v1289 = vsel %vm539, %v235, -inf
    %v1290 = vrot.slane %v1289, 4
    %v1291 = vmax.f32 %v1289, %v1290
    %v1292 = vrot.slane %v1291, 2
    %v1293 = vmax.f32 %v1291, %v1292
    %v1294 = vrot.slane %v1293, 1
    %v1295 = vmax.f32 %v1293, %v1294
    %v1296 = vsel %vm539, %v54, -inf
    %v1297 = vrot.slane %v1296, 4
    %v1298 = vmax.f32 %v1296, %v1297
    %v1299 = vrot.slane %v1298, 2
    %v1300 = vmax.f32 %v1298, %v1299
    %v1301 = vrot.slane %v1300, 1
    %v1302 = vmax.f32 %v1300, %v1301
    %v1303 = vsel %vm539, %v236, -inf
    %v1304 = vrot.slane %v1303, 4
    %v1305 = vmax.f32 %v1303, %v1304
    %v1306 = vrot.slane %v1305, 2
    %v1307 = vmax.f32 %v1305, %v1306
    %v1308 = vrot.slane %v1307, 1
    %v1309 = vmax.f32 %v1307, %v1308
    %v1310 = vsel %vm539, %v237, -inf
    %v1311 = vrot.slane %v1310, 4
    %v1312 = vmax.f32 %v1310, %v1311
    %v1313 = vrot.slane %v1312, 2
    %v1314 = vmax.f32 %v1312, %v1313
    %v1315 = vrot.slane %v1314, 1
    %v1316 = vmax.f32 %v1314, %v1315
    %v1317 = vsel %vm539, %v238, -inf
    %v1318 = vrot.slane %v1317, 4
    %v1319 = vmax.f32 %v1317, %v1318
    %v1320 = vrot.slane %v1319, 2
    %v1321 = vmax.f32 %v1319, %v1320
    %v1322 = vrot.slane %v1321, 1
    %v1323 = vmax.f32 %v1321, %v1322
    %v1324 = vsel %vm539, %v55, -inf
    %v1325 = vrot.slane %v1324, 4
    %v1326 = vmax.f32 %v1324, %v1325
    %v1327 = vrot.slane %v1326, 2
    %v1328 = vmax.f32 %v1326, %v1327
    %v1329 = vrot.slane %v1328, 1
    %v1330 = vmax.f32 %v1328, %v1329
    %v1331 = vsel %vm539, %v239, -inf
    %v1332 = vrot.slane %v1331, 4
    %v1333 = vmax.f32 %v1331, %v1332
    %v1334 = vrot.slane %v1333, 2
    %v1335 = vmax.f32 %v1333, %v1334
    %v1336 = vrot.slane %v1335, 1
    %v1337 = vmax.f32 %v1335, %v1336
    %v1338 = vsel %vm539, %v240, -inf
    %v1339 = vrot.slane %v1338, 4
    %v1340 = vmax.f32 %v1338, %v1339
    %v1341 = vrot.slane %v1340, 2
    %v1342 = vmax.f32 %v1340, %v1341
    %v1343 = vrot.slane %v1342, 1
    %v1344 = vmax.f32 %v1342, %v1343
    %v1345 = vsel %vm539, %v241, -inf
    %v1346 = vrot.slane %v1345, 4
    %v1347 = vmax.f32 %v1345, %v1346
    %v1348 = vrot.slane %v1347, 2
    %v1349 = vmax.f32 %v1347, %v1348
    %v1350 = vrot.slane %v1349, 1
    %v1351 = vmax.f32 %v1349, %v1350
    %v1352 = vsel %vm539, %v56, -inf
    %v1353 = vrot.slane %v1352, 4
    %v1354 = vmax.f32 %v1352, %v1353
    %v1355 = vrot.slane %v1354, 2
    %v1356 = vmax.f32 %v1354, %v1355
    %v1357 = vrot.slane %v1356, 1
    %v1358 = vmax.f32 %v1356, %v1357
    %v1359 = vsel %vm539, %v242, -inf
    %v1360 = vrot.slane %v1359, 4
    %v1361 = vmax.f32 %v1359, %v1360
    %v1362 = vrot.slane %v1361, 2
    %v1363 = vmax.f32 %v1361, %v1362
    %v1364 = vrot.slane %v1363, 1
    %v1365 = vmax.f32 %v1363, %v1364
    %v1366 = vsel %vm539, %v243, -inf
    %v1367 = vrot.slane %v1366, 4
    %v1368 = vmax.f32 %v1366, %v1367
    %v1369 = vrot.slane %v1368, 2
    %v1370 = vmax.f32 %v1368, %v1369
    %v1371 = vrot.slane %v1370, 1
    %v1372 = vmax.f32 %v1370, %v1371
    %v1373 = vsel %vm539, %v244, -inf
    %v1374 = vrot.slane %v1373, 4
    %v1375 = vmax.f32 %v1373, %v1374
    %v1376 = vrot.slane %v1375, 2
    %v1377 = vmax.f32 %v1375, %v1376
    %v1378 = vrot.slane %v1377, 1
    %v1379 = vmax.f32 %v1377, %v1378
    %v1380 = vsel %vm539, %v57, -inf
    %v1381 = vrot.slane %v1380, 4
    %v1382 = vmax.f32 %v1380, %v1381
    %v1383 = vrot.slane %v1382, 2
    %v1384 = vmax.f32 %v1382, %v1383
    %v1385 = vrot.slane %v1384, 1
    %v1386 = vmax.f32 %v1384, %v1385
    %v1387 = vsel %vm539, %v245, -inf
    %v1388 = vrot.slane %v1387, 4
    %v1389 = vmax.f32 %v1387, %v1388
    %v1390 = vrot.slane %v1389, 2
    %v1391 = vmax.f32 %v1389, %v1390
    %v1392 = vrot.slane %v1391, 1
    %v1393 = vmax.f32 %v1391, %v1392
    %v1394 = vsel %vm539, %v246, -inf
    %v1395 = vrot.slane %v1394, 4
    %v1396 = vmax.f32 %v1394, %v1395
    %v1397 = vrot.slane %v1396, 2
    %v1398 = vmax.f32 %v1396, %v1397
    %v1399 = vrot.slane %v1398, 1
    %v1400 = vmax.f32 %v1398, %v1399
    %v1401 = vsel %vm539, %v247, -inf
    %v1402 = vrot.slane %v1401, 4
    %v1403 = vmax.f32 %v1401, %v1402
    %v1404 = vrot.slane %v1403, 2
    %v1405 = vmax.f32 %v1403, %v1404
    %v1406 = vrot.slane %v1405, 1
    %v1407 = vmax.f32 %v1405, %v1406
    %v1408 = vsel %vm539, %v58, -inf
    %v1409 = vrot.slane %v1408, 4
    %v1410 = vmax.f32 %v1408, %v1409
    %v1411 = vrot.slane %v1410, 2
    %v1412 = vmax.f32 %v1410, %v1411
    %v1413 = vrot.slane %v1412, 1
    %v1414 = vmax.f32 %v1412, %v1413
    %v1415 = vsel %vm539, %v248, -inf
    %v1416 = vrot.slane %v1415, 4
    %v1417 = vmax.f32 %v1415, %v1416
    %v1418 = vrot.slane %v1417, 2
    %v1419 = vmax.f32 %v1417, %v1418
    %v1420 = vrot.slane %v1419, 1
    %v1421 = vmax.f32 %v1419, %v1420
    %v1422 = vsel %vm539, %v249, -inf
    %v1423 = vrot.slane %v1422, 4
    %v1424 = vmax.f32 %v1422, %v1423
    %v1425 = vrot.slane %v1424, 2
    %v1426 = vmax.f32 %v1424, %v1425
    %v1427 = vrot.slane %v1426, 1
    %v1428 = vmax.f32 %v1426, %v1427
    %v1429 = vsel %vm539, %v250, -inf
    %v1430 = vrot.slane %v1429, 4
    %v1431 = vmax.f32 %v1429, %v1430
    %v1432 = vrot.slane %v1431, 2
    %v1433 = vmax.f32 %v1431, %v1432
    %v1434 = vrot.slane %v1433, 1
    %v1435 = vmax.f32 %v1433, %v1434
    %v1436 = vsel %vm539, %v59, -inf
    %v1437 = vrot.slane %v1436, 4
    %v1438 = vmax.f32 %v1436, %v1437
    %v1439 = vrot.slane %v1438, 2
    %v1440 = vmax.f32 %v1438, %v1439
    %v1441 = vrot.slane %v1440, 1
    %v1442 = vmax.f32 %v1440, %v1441
    %v1443 = vsel %vm539, %v251, -inf
    %v1444 = vrot.slane %v1443, 4
    %v1445 = vmax.f32 %v1443, %v1444
    %v1446 = vrot.slane %v1445, 2
    %v1447 = vmax.f32 %v1445, %v1446
    %v1448 = vrot.slane %v1447, 1
    %v1449 = vmax.f32 %v1447, %v1448
    %v1450 = vsel %vm539, %v252, -inf
    %v1451 = vrot.slane %v1450, 4
    %v1452 = vmax.f32 %v1450, %v1451
    %v1453 = vrot.slane %v1452, 2
    %v1454 = vmax.f32 %v1452, %v1453
    %v1455 = vrot.slane %v1454, 1
    %v1456 = vmax.f32 %v1454, %v1455
    %v1457 = vsel %vm539, %v253, -inf
    %v1458 = vrot.slane %v1457, 4
    %v1459 = vmax.f32 %v1457, %v1458
    %v1460 = vrot.slane %v1459, 2
    %v1461 = vmax.f32 %v1459, %v1460
    %v1462 = vrot.slane %v1461, 1
    %v1463 = vmax.f32 %v1461, %v1462
    %v1464 = vsel %vm539, %v60, -inf
    %v1465 = vrot.slane %v1464, 4
    %v1466 = vmax.f32 %v1464, %v1465
    %v1467 = vrot.slane %v1466, 2
    %v1468 = vmax.f32 %v1466, %v1467
    %v1469 = vrot.slane %v1468, 1
    %v1470 = vmax.f32 %v1468, %v1469
    %v1471 = vsel %vm539, %v254, -inf
    %v1472 = vrot.slane %v1471, 4
    %v1473 = vmax.f32 %v1471, %v1472
    %v1474 = vrot.slane %v1473, 2
    %v1475 = vmax.f32 %v1473, %v1474
    %v1476 = vrot.slane %v1475, 1
    %v1477 = vmax.f32 %v1475, %v1476
    %v1478 = vsel %vm539, %v255, -inf
    %v1479 = vrot.slane %v1478, 4
    %v1480 = vmax.f32 %v1478, %v1479
    %v1481 = vrot.slane %v1480, 2
    %v1482 = vmax.f32 %v1480, %v1481
    %v1483 = vrot.slane %v1482, 1
    %v1484 = vmax.f32 %v1482, %v1483
    %v1485 = vsel %vm539, %v256, -inf
    %v1486 = vrot.slane %v1485, 4
    %v1487 = vmax.f32 %v1485, %v1486
    %v1488 = vrot.slane %v1487, 2
    %v1489 = vmax.f32 %v1487, %v1488
    %v1490 = vrot.slane %v1489, 1
    %v1491 = vmax.f32 %v1489, %v1490
    %v1492 = vsel %vm539, %v61, -inf
    %v1493 = vrot.slane %v1492, 4
    %v1494 = vmax.f32 %v1492, %v1493
    %v1495 = vrot.slane %v1494, 2
    %v1496 = vmax.f32 %v1494, %v1495
    %v1497 = vrot.slane %v1496, 1
    %v1498 = vmax.f32 %v1496, %v1497
    %v1499 = vsel %vm539, %v257, -inf
    %v1500 = vrot.slane %v1499, 4
    %v1501 = vmax.f32 %v1499, %v1500
    %v1502 = vrot.slane %v1501, 2
    %v1503 = vmax.f32 %v1501, %v1502
    %v1504 = vrot.slane %v1503, 1
    %v1505 = vmax.f32 %v1503, %v1504
    %v1506 = vsel %vm539, %v258, -inf
    %v1507 = vrot.slane %v1506, 4
    %v1508 = vmax.f32 %v1506, %v1507
    %v1509 = vrot.slane %v1508, 2
    %v1510 = vmax.f32 %v1508, %v1509
    %v1511 = vrot.slane %v1510, 1
    %v1512 = vmax.f32 %v1510, %v1511
    %v1513 = vsel %vm539, %v259, -inf
    %v1514 = vrot.slane %v1513, 4
    %v1515 = vmax.f32 %v1513, %v1514
    %v1516 = vrot.slane %v1515, 2
    %v1517 = vmax.f32 %v1515, %v1516
    %v1518 = vrot.slane %v1517, 1
    %v1519 = vmax.f32 %v1517, %v1518
    %v1520 = vsel %vm539, %v62, -inf
    %v1521 = vrot.slane %v1520, 4
    %v1522 = vmax.f32 %v1520, %v1521
    %v1523 = vrot.slane %v1522, 2
    %v1524 = vmax.f32 %v1522, %v1523
    %v1525 = vrot.slane %v1524, 1
    %v1526 = vmax.f32 %v1524, %v1525
    %v1527 = vsel %vm539, %v260, -inf
    %v1528 = vrot.slane %v1527, 4
    %v1529 = vmax.f32 %v1527, %v1528
    %v1530 = vrot.slane %v1529, 2
    %v1531 = vmax.f32 %v1529, %v1530
    %v1532 = vrot.slane %v1531, 1
    %v1533 = vmax.f32 %v1531, %v1532
    %v1534 = vsel %vm539, %v261, -inf
    %v1535 = vrot.slane %v1534, 4
    %v1536 = vmax.f32 %v1534, %v1535
    %v1537 = vrot.slane %v1536, 2
    %v1538 = vmax.f32 %v1536, %v1537
    %v1539 = vrot.slane %v1538, 1
    %v1540 = vmax.f32 %v1538, %v1539
    %v1541 = vsel %vm539, %v262, -inf
    %v1542 = vrot.slane %v1541, 4
    %v1543 = vmax.f32 %v1541, %v1542
    %v1544 = vrot.slane %v1543, 2
    %v1545 = vmax.f32 %v1543, %v1544
    %v1546 = vrot.slane %v1545, 1
    %v1547 = vmax.f32 %v1545, %v1546
    %v1548 = vsel %vm539, %v63, -inf
    %v1549 = vrot.slane %v1548, 4
    %v1550 = vmax.f32 %v1548, %v1549
    %v1551 = vrot.slane %v1550, 2
    %v1552 = vmax.f32 %v1550, %v1551
    %v1553 = vrot.slane %v1552, 1
    %v1554 = vmax.f32 %v1552, %v1553
    %v1555 = vsel %vm539, %v263, -inf
    %v1556 = vrot.slane %v1555, 4
    %v1557 = vmax.f32 %v1555, %v1556
    %v1558 = vrot.slane %v1557, 2
    %v1559 = vmax.f32 %v1557, %v1558
    %v1560 = vrot.slane %v1559, 1
    %v1561 = vmax.f32 %v1559, %v1560
    %v1562 = vsel %vm539, %v264, -inf
    %v1563 = vrot.slane %v1562, 4
    %v1564 = vmax.f32 %v1562, %v1563
    %v1565 = vrot.slane %v1564, 2
    %v1566 = vmax.f32 %v1564, %v1565
    %v1567 = vrot.slane %v1566, 1
    %v1568 = vmax.f32 %v1566, %v1567
    %v1569 = vsel %vm539, %v265, -inf
    %v1570 = vrot.slane %v1569, 4
    %v1571 = vmax.f32 %v1569, %v1570
    %v1572 = vrot.slane %v1571, 2
    %v1573 = vmax.f32 %v1571, %v1572
    %v1574 = vrot.slane %v1573, 1
    %v1575 = vmax.f32 %v1573, %v1574
    %v1576 = vsel %vm539, %v64, -inf
    %v1577 = vrot.slane %v1576, 4
    %v1578 = vmax.f32 %v1576, %v1577
    %v1579 = vrot.slane %v1578, 2
    %v1580 = vmax.f32 %v1578, %v1579
    %v1581 = vrot.slane %v1580, 1
    %v1582 = vmax.f32 %v1580, %v1581
    %v1583 = vsel %vm539, %v266, -inf
    %v1584 = vrot.slane %v1583, 4
    %v1585 = vmax.f32 %v1583, %v1584
    %v1586 = vrot.slane %v1585, 2
    %v1587 = vmax.f32 %v1585, %v1586
    %v1588 = vrot.slane %v1587, 1
    %v1589 = vmax.f32 %v1587, %v1588
    %v1590 = vsel %vm539, %v267, -inf
    %v1591 = vrot.slane %v1590, 4
    %v1592 = vmax.f32 %v1590, %v1591
    %v1593 = vrot.slane %v1592, 2
    %v1594 = vmax.f32 %v1592, %v1593
    %v1595 = vrot.slane %v1594, 1
    %v1596 = vmax.f32 %v1594, %v1595
    %v1597 = vsel %vm539, %v268, -inf
    %v1598 = vrot.slane %v1597, 4
    %v1599 = vmax.f32 %v1597, %v1598
    %v1600 = vrot.slane %v1599, 2
    %v1601 = vmax.f32 %v1599, %v1600
    %v1602 = vrot.slane %v1601, 1
    %v1603 = vmax.f32 %v1601, %v1602
    %v1604 = vsel %vm539, %v65, -inf
    %v1605 = vrot.slane %v1604, 4
    %v1606 = vmax.f32 %v1604, %v1605
    %v1607 = vrot.slane %v1606, 2
    %v1608 = vmax.f32 %v1606, %v1607
    %v1609 = vrot.slane %v1608, 1
    %v1610 = vmax.f32 %v1608, %v1609
    %v1611 = vsel %vm539, %v269, -inf
    %v1612 = vrot.slane %v1611, 4
    %v1613 = vmax.f32 %v1611, %v1612
    %v1614 = vrot.slane %v1613, 2
    %v1615 = vmax.f32 %v1613, %v1614
    %v1616 = vrot.slane %v1615, 1
    %v1617 = vmax.f32 %v1615, %v1616
    %v1618 = vsel %vm539, %v270, -inf
    %v1619 = vrot.slane %v1618, 4
    %v1620 = vmax.f32 %v1618, %v1619
    %v1621 = vrot.slane %v1620, 2
    %v1622 = vmax.f32 %v1620, %v1621
    %v1623 = vrot.slane %v1622, 1
    %v1624 = vmax.f32 %v1622, %v1623
    %v1625 = vsel %vm539, %v271, -inf
    %v1626 = vrot.slane %v1625, 4
    %v1627 = vmax.f32 %v1625, %v1626
    %v1628 = vrot.slane %v1627, 2
    %v1629 = vmax.f32 %v1627, %v1628
    %v1630 = vrot.slane %v1629, 1
    %v1631 = vmax.f32 %v1629, %v1630
    %v1632 = vsel %vm539, %v66, -inf
    %v1633 = vrot.slane %v1632, 4
    %v1634 = vmax.f32 %v1632, %v1633
    %v1635 = vrot.slane %v1634, 2
    %v1636 = vmax.f32 %v1634, %v1635
    %v1637 = vrot.slane %v1636, 1
    %v1638 = vmax.f32 %v1636, %v1637
    %v1639 = vsel %vm539, %v272, -inf
    %v1640 = vrot.slane %v1639, 4
    %v1641 = vmax.f32 %v1639, %v1640
    %v1642 = vrot.slane %v1641, 2
    %v1643 = vmax.f32 %v1641, %v1642
    %v1644 = vrot.slane %v1643, 1
    %v1645 = vmax.f32 %v1643, %v1644
    %v1646 = vsel %vm539, %v273, -inf
    %v1647 = vrot.slane %v1646, 4
    %v1648 = vmax.f32 %v1646, %v1647
    %v1649 = vrot.slane %v1648, 2
    %v1650 = vmax.f32 %v1648, %v1649
    %v1651 = vrot.slane %v1650, 1
    %v1652 = vmax.f32 %v1650, %v1651
    %v1653 = vsel %vm539, %v274, -inf
    %v1654 = vrot.slane %v1653, 4
    %v1655 = vmax.f32 %v1653, %v1654
    %v1656 = vrot.slane %v1655, 2
    %v1657 = vmax.f32 %v1655, %v1656
    %v1658 = vrot.slane %v1657, 1
    %v1659 = vmax.f32 %v1657, %v1658
    %v1660 = vsel %vm539, %v67, -inf
    %v1661 = vrot.slane %v1660, 4
    %v1662 = vmax.f32 %v1660, %v1661
    %v1663 = vrot.slane %v1662, 2
    %v1664 = vmax.f32 %v1662, %v1663
    %v1665 = vrot.slane %v1664, 1
    %v1666 = vmax.f32 %v1664, %v1665
    %v1667 = vsel %vm539, %v275, -inf
    %v1668 = vrot.slane %v1667, 4
    %v1669 = vmax.f32 %v1667, %v1668
    %v1670 = vrot.slane %v1669, 2
    %v1671 = vmax.f32 %v1669, %v1670
    %v1672 = vrot.slane %v1671, 1
    %v1673 = vmax.f32 %v1671, %v1672
    %v1674 = vsel %vm539, %v276, -inf
    %v1675 = vrot.slane %v1674, 4
    %v1676 = vmax.f32 %v1674, %v1675
    %v1677 = vrot.slane %v1676, 2
    %v1678 = vmax.f32 %v1676, %v1677
    %v1679 = vrot.slane %v1678, 1
    %v1680 = vmax.f32 %v1678, %v1679
    %v1681 = vsel %vm539, %v277, -inf
    %v1682 = vrot.slane %v1681, 4
    %v1683 = vmax.f32 %v1681, %v1682
    %v1684 = vrot.slane %v1683, 2
    %v1685 = vmax.f32 %v1683, %v1684
    %v1686 = vrot.slane %v1685, 1
    %v1687 = vmax.f32 %v1685, %v1686
    %v1688 = vsel %vm539, %v68, -inf
    %v1689 = vrot.slane %v1688, 4
    %v1690 = vmax.f32 %v1688, %v1689
    %v1691 = vrot.slane %v1690, 2
    %v1692 = vmax.f32 %v1690, %v1691
    %v1693 = vrot.slane %v1692, 1
    %v1694 = vmax.f32 %v1692, %v1693
    %v1695 = vsel %vm539, %v278, -inf
    %v1696 = vrot.slane %v1695, 4
    %v1697 = vmax.f32 %v1695, %v1696
    %v1698 = vrot.slane %v1697, 2
    %v1699 = vmax.f32 %v1697, %v1698
    %v1700 = vrot.slane %v1699, 1
    %v1701 = vmax.f32 %v1699, %v1700
    %v1702 = vsel %vm539, %v279, -inf
    %v1703 = vrot.slane %v1702, 4
    %v1704 = vmax.f32 %v1702, %v1703
    %v1705 = vrot.slane %v1704, 2
    %v1706 = vmax.f32 %v1704, %v1705
    %v1707 = vrot.slane %v1706, 1
    %v1708 = vmax.f32 %v1706, %v1707
    %v1709 = vsel %vm539, %v280, -inf
    %v1710 = vrot.slane %v1709, 4
    %v1711 = vmax.f32 %v1709, %v1710
    %v1712 = vrot.slane %v1711, 2
    %v1713 = vmax.f32 %v1711, %v1712
    %v1714 = vrot.slane %v1713, 1
    %v1715 = vmax.f32 %v1713, %v1714
    %v1716 = vsel %vm539, %v69, -inf
    %v1717 = vrot.slane %v1716, 4
    %v1718 = vmax.f32 %v1716, %v1717
    %v1719 = vrot.slane %v1718, 2
    %v1720 = vmax.f32 %v1718, %v1719
    %v1721 = vrot.slane %v1720, 1
    %v1722 = vmax.f32 %v1720, %v1721
    %v1723 = vsel %vm539, %v281, -inf
    %v1724 = vrot.slane %v1723, 4
    %v1725 = vmax.f32 %v1723, %v1724
    %v1726 = vrot.slane %v1725, 2
    %v1727 = vmax.f32 %v1725, %v1726
    %v1728 = vrot.slane %v1727, 1
    %v1729 = vmax.f32 %v1727, %v1728
    %v1730 = vsel %vm539, %v282, -inf
    %v1731 = vrot.slane %v1730, 4
    %v1732 = vmax.f32 %v1730, %v1731
    %v1733 = vrot.slane %v1732, 2
    %v1734 = vmax.f32 %v1732, %v1733
    %v1735 = vrot.slane %v1734, 1
    %v1736 = vmax.f32 %v1734, %v1735
    %v1737 = vsel %vm539, %v283, -inf
    %v1738 = vrot.slane %v1737, 4
    %v1739 = vmax.f32 %v1737, %v1738
    %v1740 = vrot.slane %v1739, 2
    %v1741 = vmax.f32 %v1739, %v1740
    %v1742 = vrot.slane %v1741, 1
    %v1743 = vmax.f32 %v1741, %v1742
    %v1744 = vsel %vm539, %v70, -inf
    %v1745 = vrot.slane %v1744, 4
    %v1746 = vmax.f32 %v1744, %v1745
    %v1747 = vrot.slane %v1746, 2
    %v1748 = vmax.f32 %v1746, %v1747
    %v1749 = vrot.slane %v1748, 1
    %v1750 = vmax.f32 %v1748, %v1749
    %v1751 = vsel %vm539, %v284, -inf
    %v1752 = vrot.slane %v1751, 4
    %v1753 = vmax.f32 %v1751, %v1752
    %v1754 = vrot.slane %v1753, 2
    %v1755 = vmax.f32 %v1753, %v1754
    %v1756 = vrot.slane %v1755, 1
    %v1757 = vmax.f32 %v1755, %v1756
    %v1758 = vsel %vm539, %v285, -inf
    %v1759 = vrot.slane %v1758, 4
    %v1760 = vmax.f32 %v1758, %v1759
    %v1761 = vrot.slane %v1760, 2
    %v1762 = vmax.f32 %v1760, %v1761
    %v1763 = vrot.slane %v1762, 1
    %v1764 = vmax.f32 %v1762, %v1763
    %v1765 = vsel %vm539, %v286, -inf
    %v1766 = vrot.slane %v1765, 4
    %v1767 = vmax.f32 %v1765, %v1766
    %v1768 = vrot.slane %v1767, 2
    %v1769 = vmax.f32 %v1767, %v1768
    %v1770 = vrot.slane %v1769, 1
    %v1771 = vmax.f32 %v1769, %v1770
    %v1772 = vsel %vm539, %v71, -inf
    %v1773 = vrot.slane %v1772, 4
    %v1774 = vmax.f32 %v1772, %v1773
    %v1775 = vrot.slane %v1774, 2
    %v1776 = vmax.f32 %v1774, %v1775
    %v1777 = vrot.slane %v1776, 1
    %v1778 = vmax.f32 %v1776, %v1777
    %v1779 = vsel %vm539, %v287, -inf
    %v1780 = vrot.slane %v1779, 4
    %v1781 = vmax.f32 %v1779, %v1780
    %v1782 = vrot.slane %v1781, 2
    %v1783 = vmax.f32 %v1781, %v1782
    %v1784 = vrot.slane %v1783, 1
    %v1785 = vmax.f32 %v1783, %v1784
    %v1786 = vsel %vm539, %v288, -inf
    %v1787 = vrot.slane %v1786, 4
    %v1788 = vmax.f32 %v1786, %v1787
    %v1789 = vrot.slane %v1788, 2
    %v1790 = vmax.f32 %v1788, %v1789
    %v1791 = vrot.slane %v1790, 1
    %v1792 = vmax.f32 %v1790, %v1791
    %v1793 = vsel %vm539, %v289, -inf
    %v1794 = vrot.slane %v1793, 4
    %v1795 = vmax.f32 %v1793, %v1794
    %v1796 = vrot.slane %v1795, 2
    %v1797 = vmax.f32 %v1795, %v1796
    %v1798 = vrot.slane %v1797, 1
    %v1799 = vmax.f32 %v1797, %v1798
    %v1800 = vsel %vm539, %v72, -inf
    %v1801 = vrot.slane %v1800, 4
    %v1802 = vmax.f32 %v1800, %v1801
    %v1803 = vrot.slane %v1802, 2
    %v1804 = vmax.f32 %v1802, %v1803
    %v1805 = vrot.slane %v1804, 1
    %v1806 = vmax.f32 %v1804, %v1805
    %v1807 = vsel %vm539, %v290, -inf
    %v1808 = vrot.slane %v1807, 4
    %v1809 = vmax.f32 %v1807, %v1808
    %v1810 = vrot.slane %v1809, 2
    %v1811 = vmax.f32 %v1809, %v1810
    %v1812 = vrot.slane %v1811, 1
    %v1813 = vmax.f32 %v1811, %v1812
    %v1814 = vsel %vm539, %v291, -inf
    %v1815 = vrot.slane %v1814, 4
    %v1816 = vmax.f32 %v1814, %v1815
    %v1817 = vrot.slane %v1816, 2
    %v1818 = vmax.f32 %v1816, %v1817
    %v1819 = vrot.slane %v1818, 1
    %v1820 = vmax.f32 %v1818, %v1819
    %v1821 = vsel %vm539, %v292, -inf
    %v1822 = vrot.slane %v1821, 4
    %v1823 = vmax.f32 %v1821, %v1822
    %v1824 = vrot.slane %v1823, 2
    %v1825 = vmax.f32 %v1823, %v1824
    %v1826 = vrot.slane %v1825, 1
    %v1827 = vmax.f32 %v1825, %v1826
    %v1828 = vsel %vm539, %v73, -inf
    %v1829 = vrot.slane %v1828, 4
    %v1830 = vmax.f32 %v1828, %v1829
    %v1831 = vrot.slane %v1830, 2
    %v1832 = vmax.f32 %v1830, %v1831
    %v1833 = vrot.slane %v1832, 1
    %v1834 = vmax.f32 %v1832, %v1833
    %v1835 = vsel %vm539, %v293, -inf
    %v1836 = vrot.slane %v1835, 4
    %v1837 = vmax.f32 %v1835, %v1836
    %v1838 = vrot.slane %v1837, 2
    %v1839 = vmax.f32 %v1837, %v1838
    %v1840 = vrot.slane %v1839, 1
    %v1841 = vmax.f32 %v1839, %v1840
    %v1842 = vsel %vm539, %v294, -inf
    %v1843 = vrot.slane %v1842, 4
    %v1844 = vmax.f32 %v1842, %v1843
    %v1845 = vrot.slane %v1844, 2
    %v1846 = vmax.f32 %v1844, %v1845
    %v1847 = vrot.slane %v1846, 1
    %v1848 = vmax.f32 %v1846, %v1847
    %v1849 = vsel %vm539, %v295, -inf
    %v1850 = vrot.slane %v1849, 4
    %v1851 = vmax.f32 %v1849, %v1850
    %v1852 = vrot.slane %v1851, 2
    %v1853 = vmax.f32 %v1851, %v1852
    %v1854 = vrot.slane %v1853, 1
    %v1855 = vmax.f32 %v1853, %v1854
    %v1856 = vsel %vm539, %v74, -inf
    %v1857 = vrot.slane %v1856, 4
    %v1858 = vmax.f32 %v1856, %v1857
    %v1859 = vrot.slane %v1858, 2
    %v1860 = vmax.f32 %v1858, %v1859
    %v1861 = vrot.slane %v1860, 1
    %v1862 = vmax.f32 %v1860, %v1861
    %v1863 = vsel %vm539, %v296, -inf
    %v1864 = vrot.slane %v1863, 4
    %v1865 = vmax.f32 %v1863, %v1864
    %v1866 = vrot.slane %v1865, 2
    %v1867 = vmax.f32 %v1865, %v1866
    %v1868 = vrot.slane %v1867, 1
    %v1869 = vmax.f32 %v1867, %v1868
    %v1870 = vsel %vm539, %v297, -inf
    %v1871 = vrot.slane %v1870, 4
    %v1872 = vmax.f32 %v1870, %v1871
    %v1873 = vrot.slane %v1872, 2
    %v1874 = vmax.f32 %v1872, %v1873
    %v1875 = vrot.slane %v1874, 1
    %v1876 = vmax.f32 %v1874, %v1875
    %v1877 = vsel %vm539, %v298, -inf
    %v1878 = vrot.slane %v1877, 4
    %v1879 = vmax.f32 %v1877, %v1878
    %v1880 = vrot.slane %v1879, 2
    %v1881 = vmax.f32 %v1879, %v1880
    %v1882 = vrot.slane %v1881, 1
    %v1883 = vmax.f32 %v1881, %v1882
    %v1884 = vsel %vm539, %v75, -inf
    %v1885 = vrot.slane %v1884, 4
    %v1886 = vmax.f32 %v1884, %v1885
    %v1887 = vrot.slane %v1886, 2
    %v1888 = vmax.f32 %v1886, %v1887
    %v1889 = vrot.slane %v1888, 1
    %v1890 = vmax.f32 %v1888, %v1889
    %v1891 = vsel %vm539, %v299, -inf
    %v1892 = vrot.slane %v1891, 4
    %v1893 = vmax.f32 %v1891, %v1892
    %v1894 = vrot.slane %v1893, 2
    %v1895 = vmax.f32 %v1893, %v1894
    %v1896 = vrot.slane %v1895, 1
    %v1897 = vmax.f32 %v1895, %v1896
    %v1898 = vsel %vm539, %v300, -inf
    %v1899 = vrot.slane %v1898, 4
    %v1900 = vmax.f32 %v1898, %v1899
    %v1901 = vrot.slane %v1900, 2
    %v1902 = vmax.f32 %v1900, %v1901
    %v1903 = vrot.slane %v1902, 1
    %v1904 = vmax.f32 %v1902, %v1903
    %v1905 = vsel %vm539, %v301, -inf
    %v1906 = vrot.slane %v1905, 4
    %v1907 = vmax.f32 %v1905, %v1906
    %v1908 = vrot.slane %v1907, 2
    %v1909 = vmax.f32 %v1907, %v1908
    %v1910 = vrot.slane %v1909, 1
    %v1911 = vmax.f32 %v1909, %v1910
    %v1912 = vsel %vm539, %v76, -inf
    %v1913 = vrot.slane %v1912, 4
    %v1914 = vmax.f32 %v1912, %v1913
    %v1915 = vrot.slane %v1914, 2
    %v1916 = vmax.f32 %v1914, %v1915
    %v1917 = vrot.slane %v1916, 1
    %v1918 = vmax.f32 %v1916, %v1917
    %v1919 = vsel %vm539, %v302, -inf
    %v1920 = vrot.slane %v1919, 4
    %v1921 = vmax.f32 %v1919, %v1920
    %v1922 = vrot.slane %v1921, 2
    %v1923 = vmax.f32 %v1921, %v1922
    %v1924 = vrot.slane %v1923, 1
    %v1925 = vmax.f32 %v1923, %v1924
    %v1926 = vsel %vm539, %v303, -inf
    %v1927 = vrot.slane %v1926, 4
    %v1928 = vmax.f32 %v1926, %v1927
    %v1929 = vrot.slane %v1928, 2
    %v1930 = vmax.f32 %v1928, %v1929
    %v1931 = vrot.slane %v1930, 1
    %v1932 = vmax.f32 %v1930, %v1931
    %v1933 = vsel %vm539, %v304, -inf
    %v1934 = vrot.slane %v1933, 4
    %v1935 = vmax.f32 %v1933, %v1934
    %v1936 = vrot.slane %v1935, 2
    %v1937 = vmax.f32 %v1935, %v1936
    %v1938 = vrot.slane %v1937, 1
    %v1939 = vmax.f32 %v1937, %v1938
    %v1940 = vsel %vm539, %v77, -inf
    %v1941 = vrot.slane %v1940, 4
    %v1942 = vmax.f32 %v1940, %v1941
    %v1943 = vrot.slane %v1942, 2
    %v1944 = vmax.f32 %v1942, %v1943
    %v1945 = vrot.slane %v1944, 1
    %v1946 = vmax.f32 %v1944, %v1945
    %v1947 = vsel %vm539, %v305, -inf
    %v1948 = vrot.slane %v1947, 4
    %v1949 = vmax.f32 %v1947, %v1948
    %v1950 = vrot.slane %v1949, 2
    %v1951 = vmax.f32 %v1949, %v1950
    %v1952 = vrot.slane %v1951, 1
    %v1953 = vmax.f32 %v1951, %v1952
    %v1954 = vsel %vm539, %v306, -inf
    %v1955 = vrot.slane %v1954, 4
    %v1956 = vmax.f32 %v1954, %v1955
    %v1957 = vrot.slane %v1956, 2
    %v1958 = vmax.f32 %v1956, %v1957
    %v1959 = vrot.slane %v1958, 1
    %v1960 = vmax.f32 %v1958, %v1959
    %v1961 = vsel %vm539, %v307, -inf
    %v1962 = vrot.slane %v1961, 4
    %v1963 = vmax.f32 %v1961, %v1962
    %v1964 = vrot.slane %v1963, 2
    %v1965 = vmax.f32 %v1963, %v1964
    %v1966 = vrot.slane %v1965, 1
    %v1967 = vmax.f32 %v1965, %v1966
    %v1968 = vsel %vm539, %v78, -inf
    %v1969 = vrot.slane %v1968, 4
    %v1970 = vmax.f32 %v1968, %v1969
    %v1971 = vrot.slane %v1970, 2
    %v1972 = vmax.f32 %v1970, %v1971
    %v1973 = vrot.slane %v1972, 1
    %v1974 = vmax.f32 %v1972, %v1973
    %v1975 = vsel %vm539, %v308, -inf
    %v1976 = vrot.slane %v1975, 4
    %v1977 = vmax.f32 %v1975, %v1976
    %v1978 = vrot.slane %v1977, 2
    %v1979 = vmax.f32 %v1977, %v1978
    %v1980 = vrot.slane %v1979, 1
    %v1981 = vmax.f32 %v1979, %v1980
    %v1982 = vsel %vm539, %v309, -inf
    %v1983 = vrot.slane %v1982, 4
    %v1984 = vmax.f32 %v1982, %v1983
    %v1985 = vrot.slane %v1984, 2
    %v1986 = vmax.f32 %v1984, %v1985
    %v1987 = vrot.slane %v1986, 1
    %v1988 = vmax.f32 %v1986, %v1987
    %v1989 = vsel %vm539, %v310, -inf
    %v1990 = vrot.slane %v1989, 4
    %v1991 = vmax.f32 %v1989, %v1990
    %v1992 = vrot.slane %v1991, 2
    %v1993 = vmax.f32 %v1991, %v1992
    %v1994 = vrot.slane %v1993, 1
    %v1995 = vmax.f32 %v1993, %v1994
    %v1996 = vsel %vm539, %v79, -inf
    %v1997 = vrot.slane %v1996, 4
    %v1998 = vmax.f32 %v1996, %v1997
    %v1999 = vrot.slane %v1998, 2
    %v2000 = vmax.f32 %v1998, %v1999
    %v2001 = vrot.slane %v2000, 1
    %v2002 = vmax.f32 %v2000, %v2001
    %v2003 = vsel %vm539, %v311, -inf
    %v2004 = vrot.slane %v2003, 4
    %v2005 = vmax.f32 %v2003, %v2004
    %v2006 = vrot.slane %v2005, 2
    %v2007 = vmax.f32 %v2005, %v2006
    %v2008 = vrot.slane %v2007, 1
    %v2009 = vmax.f32 %v2007, %v2008
    %v2010 = vsel %vm539, %v312, -inf
    %v2011 = vrot.slane %v2010, 4
    %v2012 = vmax.f32 %v2010, %v2011
    %v2013 = vrot.slane %v2012, 2
    %v2014 = vmax.f32 %v2012, %v2013
    %v2015 = vrot.slane %v2014, 1
    %v2016 = vmax.f32 %v2014, %v2015
    %v2017 = vsel %vm539, %v313, -inf
    %v2018 = vrot.slane %v2017, 4
    %v2019 = vmax.f32 %v2017, %v2018
    %v2020 = vrot.slane %v2019, 2
    %v2021 = vmax.f32 %v2019, %v2020
    %v2022 = vrot.slane %v2021, 1
    %v2023 = vmax.f32 %v2021, %v2022
    %v2024 = vsel %vm539, %v80, -inf
    %v2025 = vrot.slane %v2024, 4
    %v2026 = vmax.f32 %v2024, %v2025
    %v2027 = vrot.slane %v2026, 2
    %v2028 = vmax.f32 %v2026, %v2027
    %v2029 = vrot.slane %v2028, 1
    %v2030 = vmax.f32 %v2028, %v2029
    %v2031 = vsel %vm539, %v314, -inf
    %v2032 = vrot.slane %v2031, 4
    %v2033 = vmax.f32 %v2031, %v2032
    %v2034 = vrot.slane %v2033, 2
    %v2035 = vmax.f32 %v2033, %v2034
    %v2036 = vrot.slane %v2035, 1
    %v2037 = vmax.f32 %v2035, %v2036
    %v2038 = vsel %vm539, %v315, -inf
    %v2039 = vrot.slane %v2038, 4
    %v2040 = vmax.f32 %v2038, %v2039
    %v2041 = vrot.slane %v2040, 2
    %v2042 = vmax.f32 %v2040, %v2041
    %v2043 = vrot.slane %v2042, 1
    %v2044 = vmax.f32 %v2042, %v2043
    %v2045 = vsel %vm539, %v316, -inf
    %v2046 = vrot.slane %v2045, 4
    %v2047 = vmax.f32 %v2045, %v2046
    %v2048 = vrot.slane %v2047, 2
    %v2049 = vmax.f32 %v2047, %v2048
    %v2050 = vrot.slane %v2049, 1
    %v2051 = vmax.f32 %v2049, %v2050
    %v2052 = vsel %vm539, %v81, -inf
    %v2053 = vrot.slane %v2052, 4
    %v2054 = vmax.f32 %v2052, %v2053
    %v2055 = vrot.slane %v2054, 2
    %v2056 = vmax.f32 %v2054, %v2055
    %v2057 = vrot.slane %v2056, 1
    %v2058 = vmax.f32 %v2056, %v2057
    %v2059 = vsel %vm539, %v317, -inf
    %v2060 = vrot.slane %v2059, 4
    %v2061 = vmax.f32 %v2059, %v2060
    %v2062 = vrot.slane %v2061, 2
    %v2063 = vmax.f32 %v2061, %v2062
    %v2064 = vrot.slane %v2063, 1
    %v2065 = vmax.f32 %v2063, %v2064
    %v2066 = vsel %vm539, %v318, -inf
    %v2067 = vrot.slane %v2066, 4
    %v2068 = vmax.f32 %v2066, %v2067
    %v2069 = vrot.slane %v2068, 2
    %v2070 = vmax.f32 %v2068, %v2069
    %v2071 = vrot.slane %v2070, 1
    %v2072 = vmax.f32 %v2070, %v2071
    %v2073 = vsel %vm539, %v319, -inf
    %v2074 = vrot.slane %v2073, 4
    %v2075 = vmax.f32 %v2073, %v2074
    %v2076 = vrot.slane %v2075, 2
    %v2077 = vmax.f32 %v2075, %v2076
    %v2078 = vrot.slane %v2077, 1
    %v2079 = vmax.f32 %v2077, %v2078
    %v2080 = vsel %vm539, %v82, -inf
    %v2081 = vrot.slane %v2080, 4
    %v2082 = vmax.f32 %v2080, %v2081
    %v2083 = vrot.slane %v2082, 2
    %v2084 = vmax.f32 %v2082, %v2083
    %v2085 = vrot.slane %v2084, 1
    %v2086 = vmax.f32 %v2084, %v2085
    %v2087 = vsel %vm539, %v320, -inf
    %v2088 = vrot.slane %v2087, 4
    %v2089 = vmax.f32 %v2087, %v2088
    %v2090 = vrot.slane %v2089, 2
    %v2091 = vmax.f32 %v2089, %v2090
    %v2092 = vrot.slane %v2091, 1
    %v2093 = vmax.f32 %v2091, %v2092
    %v2094 = vsel %vm539, %v321, -inf
    %v2095 = vrot.slane %v2094, 4
    %v2096 = vmax.f32 %v2094, %v2095
    %v2097 = vrot.slane %v2096, 2
    %v2098 = vmax.f32 %v2096, %v2097
    %v2099 = vrot.slane %v2098, 1
    %v2100 = vmax.f32 %v2098, %v2099
    %v2101 = vsel %vm539, %v322, -inf
    %v2102 = vrot.slane %v2101, 4
    %v2103 = vmax.f32 %v2101, %v2102
    %v2104 = vrot.slane %v2103, 2
    %v2105 = vmax.f32 %v2103, %v2104
    %v2106 = vrot.slane %v2105, 1
    %v2107 = vmax.f32 %v2105, %v2106
    %v2108 = vsel %vm539, %v83, -inf
    %v2109 = vrot.slane %v2108, 4
    %v2110 = vmax.f32 %v2108, %v2109
    %v2111 = vrot.slane %v2110, 2
    %v2112 = vmax.f32 %v2110, %v2111
    %v2113 = vrot.slane %v2112, 1
    %v2114 = vmax.f32 %v2112, %v2113
    %v2115 = vsel %vm539, %v323, -inf
    %v2116 = vrot.slane %v2115, 4
    %v2117 = vmax.f32 %v2115, %v2116
    %v2118 = vrot.slane %v2117, 2
    %v2119 = vmax.f32 %v2117, %v2118
    %v2120 = vrot.slane %v2119, 1
    %v2121 = vmax.f32 %v2119, %v2120
    %v2122 = vsel %vm539, %v324, -inf
    %v2123 = vrot.slane %v2122, 4
    %v2124 = vmax.f32 %v2122, %v2123
    %v2125 = vrot.slane %v2124, 2
    %v2126 = vmax.f32 %v2124, %v2125
    %v2127 = vrot.slane %v2126, 1
    %v2128 = vmax.f32 %v2126, %v2127
    %v2129 = vsel %vm539, %v325, -inf
    %v2130 = vrot.slane %v2129, 4
    %v2131 = vmax.f32 %v2129, %v2130
    %v2132 = vrot.slane %v2131, 2
    %v2133 = vmax.f32 %v2131, %v2132
    %v2134 = vrot.slane %v2133, 1
    %v2135 = vmax.f32 %v2133, %v2134
    %v2136 = vsel %vm539, %v84, -inf
    %v2137 = vrot.slane %v2136, 4
    %v2138 = vmax.f32 %v2136, %v2137
    %v2139 = vrot.slane %v2138, 2
    %v2140 = vmax.f32 %v2138, %v2139
    %v2141 = vrot.slane %v2140, 1
    %v2142 = vmax.f32 %v2140, %v2141
    %v2143 = vsel %vm539, %v326, -inf
    %v2144 = vrot.slane %v2143, 4
    %v2145 = vmax.f32 %v2143, %v2144
    %v2146 = vrot.slane %v2145, 2
    %v2147 = vmax.f32 %v2145, %v2146
    %v2148 = vrot.slane %v2147, 1
    %v2149 = vmax.f32 %v2147, %v2148
    %v2150 = vsel %vm539, %v327, -inf
    %v2151 = vrot.slane %v2150, 4
    %v2152 = vmax.f32 %v2150, %v2151
    %v2153 = vrot.slane %v2152, 2
    %v2154 = vmax.f32 %v2152, %v2153
    %v2155 = vrot.slane %v2154, 1
    %v2156 = vmax.f32 %v2154, %v2155
    %v2157 = vsel %vm539, %v328, -inf
    %v2158 = vrot.slane %v2157, 4
    %v2159 = vmax.f32 %v2157, %v2158
    %v2160 = vrot.slane %v2159, 2
    %v2161 = vmax.f32 %v2159, %v2160
    %v2162 = vrot.slane %v2161, 1
    %v2163 = vmax.f32 %v2161, %v2162
    %v2164 = vsel %vm539, %v85, -inf
    %v2165 = vrot.slane %v2164, 4
    %v2166 = vmax.f32 %v2164, %v2165
    %v2167 = vrot.slane %v2166, 2
    %v2168 = vmax.f32 %v2166, %v2167
    %v2169 = vrot.slane %v2168, 1
    %v2170 = vmax.f32 %v2168, %v2169
    %v2171 = vsel %vm539, %v329, -inf
    %v2172 = vrot.slane %v2171, 4
    %v2173 = vmax.f32 %v2171, %v2172
    %v2174 = vrot.slane %v2173, 2
    %v2175 = vmax.f32 %v2173, %v2174
    %v2176 = vrot.slane %v2175, 1
    %v2177 = vmax.f32 %v2175, %v2176
    %v2178 = vsel %vm539, %v330, -inf
    %v2179 = vrot.slane %v2178, 4
    %v2180 = vmax.f32 %v2178, %v2179
    %v2181 = vrot.slane %v2180, 2
    %v2182 = vmax.f32 %v2180, %v2181
    %v2183 = vrot.slane %v2182, 1
    %v2184 = vmax.f32 %v2182, %v2183
    %v2185 = vsel %vm539, %v331, -inf
    %v2186 = vrot.slane %v2185, 4
    %v2187 = vmax.f32 %v2185, %v2186
    %v2188 = vrot.slane %v2187, 2
    %v2189 = vmax.f32 %v2187, %v2188
    %v2190 = vrot.slane %v2189, 1
    %v2191 = vmax.f32 %v2189, %v2190
    %v2192 = vsel %vm539, %v86, -inf
    %v2193 = vrot.slane %v2192, 4
    %v2194 = vmax.f32 %v2192, %v2193
    %v2195 = vrot.slane %v2194, 2
    %v2196 = vmax.f32 %v2194, %v2195
    %v2197 = vrot.slane %v2196, 1
    %v2198 = vmax.f32 %v2196, %v2197
    %v2199 = vsel %vm539, %v332, -inf
    %v2200 = vrot.slane %v2199, 4
    %v2201 = vmax.f32 %v2199, %v2200
    %v2202 = vrot.slane %v2201, 2
    %v2203 = vmax.f32 %v2201, %v2202
    %v2204 = vrot.slane %v2203, 1
    %v2205 = vmax.f32 %v2203, %v2204
    %v2206 = vsel %vm539, %v333, -inf
    %v2207 = vrot.slane %v2206, 4
    %v2208 = vmax.f32 %v2206, %v2207
    %v2209 = vrot.slane %v2208, 2
    %v2210 = vmax.f32 %v2208, %v2209
    %v2211 = vrot.slane %v2210, 1
    %v2212 = vmax.f32 %v2210, %v2211
    %v2213 = vsel %vm539, %v334, -inf
    %v2214 = vrot.slane %v2213, 4
    %v2215 = vmax.f32 %v2213, %v2214
    %v2216 = vrot.slane %v2215, 2
    %v2217 = vmax.f32 %v2215, %v2216
    %v2218 = vrot.slane %v2217, 1
    %v2219 = vmax.f32 %v2217, %v2218
    %v2220 = vsel %vm539, %v87, -inf
    %v2221 = vrot.slane %v2220, 4
    %v2222 = vmax.f32 %v2220, %v2221
    %v2223 = vrot.slane %v2222, 2
    %v2224 = vmax.f32 %v2222, %v2223
    %v2225 = vrot.slane %v2224, 1
    %v2226 = vmax.f32 %v2224, %v2225
    %v2227 = vsel %vm539, %v335, -inf
    %v2228 = vrot.slane %v2227, 4
    %v2229 = vmax.f32 %v2227, %v2228
    %v2230 = vrot.slane %v2229, 2
    %v2231 = vmax.f32 %v2229, %v2230
    %v2232 = vrot.slane %v2231, 1
    %v2233 = vmax.f32 %v2231, %v2232
    %v2234 = vsel %vm539, %v336, -inf
    %v2235 = vrot.slane %v2234, 4
    %v2236 = vmax.f32 %v2234, %v2235
    %v2237 = vrot.slane %v2236, 2
    %v2238 = vmax.f32 %v2236, %v2237
    %v2239 = vrot.slane %v2238, 1
    %v2240 = vmax.f32 %v2238, %v2239
    %v2241 = vsel %vm539, %v337, -inf
    %v2242 = vrot.slane %v2241, 4
    %v2243 = vmax.f32 %v2241, %v2242
    %v2244 = vrot.slane %v2243, 2
    %v2245 = vmax.f32 %v2243, %v2244
    %v2246 = vrot.slane %v2245, 1
    %v2247 = vmax.f32 %v2245, %v2246
    %v2248 = vsel %vm539, %v88, -inf
    %v2249 = vrot.slane %v2248, 4
    %v2250 = vmax.f32 %v2248, %v2249
    %v2251 = vrot.slane %v2250, 2
    %v2252 = vmax.f32 %v2250, %v2251
    %v2253 = vrot.slane %v2252, 1
    %v2254 = vmax.f32 %v2252, %v2253
    %v2255 = vsel %vm539, %v338, -inf
    %v2256 = vrot.slane %v2255, 4
    %v2257 = vmax.f32 %v2255, %v2256
    %v2258 = vrot.slane %v2257, 2
    %v2259 = vmax.f32 %v2257, %v2258
    %v2260 = vrot.slane %v2259, 1
    %v2261 = vmax.f32 %v2259, %v2260
    %v2262 = vsel %vm539, %v339, -inf
    %v2263 = vrot.slane %v2262, 4
    %v2264 = vmax.f32 %v2262, %v2263
    %v2265 = vrot.slane %v2264, 2
    %v2266 = vmax.f32 %v2264, %v2265
    %v2267 = vrot.slane %v2266, 1
    %v2268 = vmax.f32 %v2266, %v2267
    %v2269 = vsel %vm539, %v340, -inf
    %v2270 = vrot.slane %v2269, 4
    %v2271 = vmax.f32 %v2269, %v2270
    %v2272 = vrot.slane %v2271, 2
    %v2273 = vmax.f32 %v2271, %v2272
    %v2274 = vrot.slane %v2273, 1
    %v2275 = vmax.f32 %v2273, %v2274
    %v2276 = vsel %vm539, %v89, -inf
    %v2277 = vrot.slane %v2276, 4
    %v2278 = vmax.f32 %v2276, %v2277
    %v2279 = vrot.slane %v2278, 2
    %v2280 = vmax.f32 %v2278, %v2279
    %v2281 = vrot.slane %v2280, 1
    %v2282 = vmax.f32 %v2280, %v2281
    %v2283 = vsel %vm539, %v341, -inf
    %v2284 = vrot.slane %v2283, 4
    %v2285 = vmax.f32 %v2283, %v2284
    %v2286 = vrot.slane %v2285, 2
    %v2287 = vmax.f32 %v2285, %v2286
    %v2288 = vrot.slane %v2287, 1
    %v2289 = vmax.f32 %v2287, %v2288
    %v2290 = vsel %vm539, %v342, -inf
    %v2291 = vrot.slane %v2290, 4
    %v2292 = vmax.f32 %v2290, %v2291
    %v2293 = vrot.slane %v2292, 2
    %v2294 = vmax.f32 %v2292, %v2293
    %v2295 = vrot.slane %v2294, 1
    %v2296 = vmax.f32 %v2294, %v2295
    %v2297 = vsel %vm539, %v343, -inf
    %v2298 = vrot.slane %v2297, 4
    %v2299 = vmax.f32 %v2297, %v2298
    %v2300 = vrot.slane %v2299, 2
    %v2301 = vmax.f32 %v2299, %v2300
    %v2302 = vrot.slane %v2301, 1
    %v2303 = vmax.f32 %v2301, %v2302
    %v2304 = vsel %vm539, %v90, -inf
    %v2305 = vrot.slane %v2304, 4
    %v2306 = vmax.f32 %v2304, %v2305
    %v2307 = vrot.slane %v2306, 2
    %v2308 = vmax.f32 %v2306, %v2307
    %v2309 = vrot.slane %v2308, 1
    %v2310 = vmax.f32 %v2308, %v2309
    %v2311 = vsel %vm539, %v344, -inf
    %v2312 = vrot.slane %v2311, 4
    %v2313 = vmax.f32 %v2311, %v2312
    %v2314 = vrot.slane %v2313, 2
    %v2315 = vmax.f32 %v2313, %v2314
    %v2316 = vrot.slane %v2315, 1
    %v2317 = vmax.f32 %v2315, %v2316
    %v2318 = vsel %vm539, %v345, -inf
    %v2319 = vrot.slane %v2318, 4
    %v2320 = vmax.f32 %v2318, %v2319
    %v2321 = vrot.slane %v2320, 2
    %v2322 = vmax.f32 %v2320, %v2321
    %v2323 = vrot.slane %v2322, 1
    %v2324 = vmax.f32 %v2322, %v2323
    %v2325 = vsel %vm539, %v346, -inf
    %v2326 = vrot.slane %v2325, 4
    %v2327 = vmax.f32 %v2325, %v2326
    %v2328 = vrot.slane %v2327, 2
    %v2329 = vmax.f32 %v2327, %v2328
    %v2330 = vrot.slane %v2329, 1
    %v2331 = vmax.f32 %v2329, %v2330
    %vm2332 = vcmask 31744
    %v2333 = vsel %vm2332, %v546, -inf
    %v2334 = vsel %vm2332, %v602, -inf
    %v2335 = vmax.f32 %v2333, %v2334
    %v2336 = vsel %vm2332, %v553, -inf
    %v2337 = vsel %vm2332, %v609, -inf
    %v2338 = vmax.f32 %v2336, %v2337
    %v2339 = vsel %vm2332, %v560, -inf
    %v2340 = vsel %vm2332, %v616, -inf
    %v2341 = vmax.f32 %v2339, %v2340
    %v2342 = vsel %vm2332, %v567, -inf
    %v2343 = vsel %vm2332, %v623, -inf
    %v2344 = vmax.f32 %v2342, %v2343
    %v2345 = vsel %vm2332, %v574, -inf
    %v2346 = vsel %vm2332, %v630, -inf
    %v2347 = vmax.f32 %v2345, %v2346
    %v2348 = vsel %vm2332, %v581, -inf
    %v2349 = vsel %vm2332, %v637, -inf
    %v2350 = vmax.f32 %v2348, %v2349
    %v2351 = vsel %vm2332, %v588, -inf
    %v2352 = vsel %vm2332, %v644, -inf
    %v2353 = vmax.f32 %v2351, %v2352
    %v2354 = vsel %vm2332, %v595, -inf
    %v2355 = vsel %vm2332, %v651, -inf
    %v2356 = vmax.f32 %v2354, %v2355
    %v2357 = vsel %vm2332, %v658, -inf
    %v2358 = vsel %vm2332, %v714, -inf
    %v2359 = vmax.f32 %v2357, %v2358
    %v2360 = vsel %vm2332, %v665, -inf
    %v2361 = vsel %vm2332, %v721, -inf
    %v2362 = vmax.f32 %v2360, %v2361
    %v2363 = vsel %vm2332, %v672, -inf
    %v2364 = vsel %vm2332, %v728, -inf
    %v2365 = vmax.f32 %v2363, %v2364
    %v2366 = vsel %vm2332, %v679, -inf
    %v2367 = vsel %vm2332, %v735, -inf
    %v2368 = vmax.f32 %v2366, %v2367
    %v2369 = vsel %vm2332, %v686, -inf
    %v2370 = vsel %vm2332, %v742, -inf
    %v2371 = vmax.f32 %v2369, %v2370
    %v2372 = vsel %vm2332, %v693, -inf
    %v2373 = vsel %vm2332, %v749, -inf
    %v2374 = vmax.f32 %v2372, %v2373
    %v2375 = vsel %vm2332, %v700, -inf
    %v2376 = vsel %vm2332, %v756, -inf
    %v2377 = vmax.f32 %v2375, %v2376
    %v2378 = vsel %vm2332, %v707, -inf
    %v2379 = vsel %vm2332, %v763, -inf
    %v2380 = vmax.f32 %v2378, %v2379
    %v2381 = vsel %vm2332, %v770, -inf
    %v2382 = vsel %vm2332, %v826, -inf
    %v2383 = vmax.f32 %v2381, %v2382
    %v2384 = vsel %vm2332, %v777, -inf
    %v2385 = vsel %vm2332, %v833, -inf
    %v2386 = vmax.f32 %v2384, %v2385
    %v2387 = vsel %vm2332, %v784, -inf
    %v2388 = vsel %vm2332, %v840, -inf
    %v2389 = vmax.f32 %v2387, %v2388
    %v2390 = vsel %vm2332, %v791, -inf
    %v2391 = vsel %vm2332, %v847, -inf
    %v2392 = vmax.f32 %v2390, %v2391
    %v2393 = vsel %vm2332, %v798, -inf
    %v2394 = vsel %vm2332, %v854, -inf
    %v2395 = vmax.f32 %v2393, %v2394
    %v2396 = vsel %vm2332, %v805, -inf
    %v2397 = vsel %vm2332, %v861, -inf
    %v2398 = vmax.f32 %v2396, %v2397
    %v2399 = vsel %vm2332, %v812, -inf
    %v2400 = vsel %vm2332, %v868, -inf
    %v2401 = vmax.f32 %v2399, %v2400
    %v2402 = vsel %vm2332, %v819, -inf
    %v2403 = vsel %vm2332, %v875, -inf
    %v2404 = vmax.f32 %v2402, %v2403
    %v2405 = vsel %vm2332, %v882, -inf
    %v2406 = vsel %vm2332, %v938, -inf
    %v2407 = vmax.f32 %v2405, %v2406
    %v2408 = vsel %vm2332, %v889, -inf
    %v2409 = vsel %vm2332, %v945, -inf
    %v2410 = vmax.f32 %v2408, %v2409
    %v2411 = vsel %vm2332, %v896, -inf
    %v2412 = vsel %vm2332, %v952, -inf
    %v2413 = vmax.f32 %v2411, %v2412
    %v2414 = vsel %vm2332, %v903, -inf
    %v2415 = vsel %vm2332, %v959, -inf
    %v2416 = vmax.f32 %v2414, %v2415
    %v2417 = vsel %vm2332, %v910, -inf
    %v2418 = vsel %vm2332, %v966, -inf
    %v2419 = vmax.f32 %v2417, %v2418
    %v2420 = vsel %vm2332, %v917, -inf
    %v2421 = vsel %vm2332, %v973, -inf
    %v2422 = vmax.f32 %v2420, %v2421
    %v2423 = vsel %vm2332, %v924, -inf
    %v2424 = vsel %vm2332, %v980, -inf
    %v2425 = vmax.f32 %v2423, %v2424
    %v2426 = vsel %vm2332, %v931, -inf
    %v2427 = vsel %vm2332, %v987, -inf
    %v2428 = vmax.f32 %v2426, %v2427
    %v2429 = vsel %vm2332, %v994, -inf
    %v2430 = vsel %vm2332, %v1050, -inf
    %v2431 = vmax.f32 %v2429, %v2430
    %v2432 = vsel %vm2332, %v1001, -inf
    %v2433 = vsel %vm2332, %v1057, -inf
    %v2434 = vmax.f32 %v2432, %v2433
    %v2435 = vsel %vm2332, %v1008, -inf
    %v2436 = vsel %vm2332, %v1064, -inf
    %v2437 = vmax.f32 %v2435, %v2436
    %v2438 = vsel %vm2332, %v1015, -inf
    %v2439 = vsel %vm2332, %v1071, -inf
    %v2440 = vmax.f32 %v2438, %v2439
    %v2441 = vsel %vm2332, %v1022, -inf
    %v2442 = vsel %vm2332, %v1078, -inf
    %v2443 = vmax.f32 %v2441, %v2442
    %v2444 = vsel %vm2332, %v1029, -inf
    %v2445 = vsel %vm2332, %v1085, -inf
    %v2446 = vmax.f32 %v2444, %v2445
    %v2447 = vsel %vm2332, %v1036, -inf
    %v2448 = vsel %vm2332, %v1092, -inf
    %v2449 = vmax.f32 %v2447, %v2448
    %v2450 = vsel %vm2332, %v1043, -inf
    %v2451 = vsel %vm2332, %v1099, -inf
    %v2452 = vmax.f32 %v2450, %v2451
    %v2453 = vsel %vm2332, %v1106, -inf
    %v2454 = vsel %vm2332, %v1162, -inf
    %v2455 = vmax.f32 %v2453, %v2454
    %v2456 = vsel %vm2332, %v1113, -inf
    %v2457 = vsel %vm2332, %v1169, -inf
    %v2458 = vmax.f32 %v2456, %v2457
    %v2459 = vsel %vm2332, %v1120, -inf
    %v2460 = vsel %vm2332, %v1176, -inf
    %v2461 = vmax.f32 %v2459, %v2460
    %v2462 = vsel %vm2332, %v1127, -inf
    %v2463 = vsel %vm2332, %v1183, -inf
    %v2464 = vmax.f32 %v2462, %v2463
    %v2465 = vsel %vm2332, %v1134, -inf
    %v2466 = vsel %vm2332, %v1190, -inf
    %v2467 = vmax.f32 %v2465, %v2466
    %v2468 = vsel %vm2332, %v1141, -inf
    %v2469 = vsel %vm2332, %v1197, -inf
    %v2470 = vmax.f32 %v2468, %v2469
    %v2471 = vsel %vm2332, %v1148, -inf
    %v2472 = vsel %vm2332, %v1204, -inf
    %v2473 = vmax.f32 %v2471, %v2472
    %v2474 = vsel %vm2332, %v1155, -inf
    %v2475 = vsel %vm2332, %v1211, -inf
    %v2476 = vmax.f32 %v2474, %v2475
    %v2477 = vsel %vm2332, %v1218, -inf
    %v2478 = vsel %vm2332, %v1274, -inf
    %v2479 = vmax.f32 %v2477, %v2478
    %v2480 = vsel %vm2332, %v1225, -inf
    %v2481 = vsel %vm2332, %v1281, -inf
    %v2482 = vmax.f32 %v2480, %v2481
    %v2483 = vsel %vm2332, %v1232, -inf
    %v2484 = vsel %vm2332, %v1288, -inf
    %v2485 = vmax.f32 %v2483, %v2484
    %v2486 = vsel %vm2332, %v1239, -inf
    %v2487 = vsel %vm2332, %v1295, -inf
    %v2488 = vmax.f32 %v2486, %v2487
    %v2489 = vsel %vm2332, %v1246, -inf
    %v2490 = vsel %vm2332, %v1302, -inf
    %v2491 = vmax.f32 %v2489, %v2490
    %v2492 = vsel %vm2332, %v1253, -inf
    %v2493 = vsel %vm2332, %v1309, -inf
    %v2494 = vmax.f32 %v2492, %v2493
    %v2495 = vsel %vm2332, %v1260, -inf
    %v2496 = vsel %vm2332, %v1316, -inf
    %v2497 = vmax.f32 %v2495, %v2496
    %v2498 = vsel %vm2332, %v1267, -inf
    %v2499 = vsel %vm2332, %v1323, -inf
    %v2500 = vmax.f32 %v2498, %v2499
    %v2501 = vsel %vm2332, %v1330, -inf
    %v2502 = vsel %vm2332, %v1386, -inf
    %v2503 = vmax.f32 %v2501, %v2502
    %v2504 = vsel %vm2332, %v1337, -inf
    %v2505 = vsel %vm2332, %v1393, -inf
    %v2506 = vmax.f32 %v2504, %v2505
    %v2507 = vsel %vm2332, %v1344, -inf
    %v2508 = vsel %vm2332, %v1400, -inf
    %v2509 = vmax.f32 %v2507, %v2508
    %v2510 = vsel %vm2332, %v1351, -inf
    %v2511 = vsel %vm2332, %v1407, -inf
    %v2512 = vmax.f32 %v2510, %v2511
    %v2513 = vsel %vm2332, %v1358, -inf
    %v2514 = vsel %vm2332, %v1414, -inf
    %v2515 = vmax.f32 %v2513, %v2514
    %v2516 = vsel %vm2332, %v1365, -inf
    %v2517 = vsel %vm2332, %v1421, -inf
    %v2518 = vmax.f32 %v2516, %v2517
    %v2519 = vsel %vm2332, %v1372, -inf
    %v2520 = vsel %vm2332, %v1428, -inf
    %v2521 = vmax.f32 %v2519, %v2520
    %v2522 = vsel %vm2332, %v1379, -inf
    %v2523 = vsel %vm2332, %v1435, -inf
    %v2524 = vmax.f32 %v2522, %v2523
    %v2525 = vsel %vm2332, %v1442, -inf
    %v2526 = vsel %vm2332, %v1498, -inf
    %v2527 = vmax.f32 %v2525, %v2526
    %v2528 = vsel %vm2332, %v1449, -inf
    %v2529 = vsel %vm2332, %v1505, -inf
    %v2530 = vmax.f32 %v2528, %v2529
    %v2531 = vsel %vm2332, %v1456, -inf
    %v2532 = vsel %vm2332, %v1512, -inf
    %v2533 = vmax.f32 %v2531, %v2532
    %v2534 = vsel %vm2332, %v1463, -inf
    %v2535 = vsel %vm2332, %v1519, -inf
    %v2536 = vmax.f32 %v2534, %v2535
    %v2537 = vsel %vm2332, %v1470, -inf
    %v2538 = vsel %vm2332, %v1526, -inf
    %v2539 = vmax.f32 %v2537, %v2538
    %v2540 = vsel %vm2332, %v1477, -inf
    %v2541 = vsel %vm2332, %v1533, -inf
    %v2542 = vmax.f32 %v2540, %v2541
    %v2543 = vsel %vm2332, %v1484, -inf
    %v2544 = vsel %vm2332, %v1540, -inf
    %v2545 = vmax.f32 %v2543, %v2544
    %v2546 = vsel %vm2332, %v1491, -inf
    %v2547 = vsel %vm2332, %v1547, -inf
    %v2548 = vmax.f32 %v2546, %v2547
    %v2549 = vsel %vm2332, %v1554, -inf
    %v2550 = vsel %vm2332, %v1610, -inf
    %v2551 = vmax.f32 %v2549, %v2550
    %v2552 = vsel %vm2332, %v1561, -inf
    %v2553 = vsel %vm2332, %v1617, -inf
    %v2554 = vmax.f32 %v2552, %v2553
    %v2555 = vsel %vm2332, %v1568, -inf
    %v2556 = vsel %vm2332, %v1624, -inf
    %v2557 = vmax.f32 %v2555, %v2556
    %v2558 = vsel %vm2332, %v1575, -inf
    %v2559 = vsel %vm2332, %v1631, -inf
    %v2560 = vmax.f32 %v2558, %v2559
    %v2561 = vsel %vm2332, %v1582, -inf
    %v2562 = vsel %vm2332, %v1638, -inf
    %v2563 = vmax.f32 %v2561, %v2562
    %v2564 = vsel %vm2332, %v1589, -inf
    %v2565 = vsel %vm2332, %v1645, -inf
    %v2566 = vmax.f32 %v2564, %v2565
    %v2567 = vsel %vm2332, %v1596, -inf
    %v2568 = vsel %vm2332, %v1652, -inf
    %v2569 = vmax.f32 %v2567, %v2568
    %v2570 = vsel %vm2332, %v1603, -inf
    %v2571 = vsel %vm2332, %v1659, -inf
    %v2572 = vmax.f32 %v2570, %v2571
    %v2573 = vsel %vm2332, %v1666, -inf
    %v2574 = vsel %vm2332, %v1722, -inf
    %v2575 = vmax.f32 %v2573, %v2574
    %v2576 = vsel %vm2332, %v1673, -inf
    %v2577 = vsel %vm2332, %v1729, -inf
    %v2578 = vmax.f32 %v2576, %v2577
    %v2579 = vsel %vm2332, %v1680, -inf
    %v2580 = vsel %vm2332, %v1736, -inf
    %v2581 = vmax.f32 %v2579, %v2580
    %v2582 = vsel %vm2332, %v1687, -inf
    %v2583 = vsel %vm2332, %v1743, -inf
    %v2584 = vmax.f32 %v2582, %v2583
    %v2585 = vsel %vm2332, %v1694, -inf
    %v2586 = vsel %vm2332, %v1750, -inf
    %v2587 = vmax.f32 %v2585, %v2586
    %v2588 = vsel %vm2332, %v1701, -inf
    %v2589 = vsel %vm2332, %v1757, -inf
    %v2590 = vmax.f32 %v2588, %v2589
    %v2591 = vsel %vm2332, %v1708, -inf
    %v2592 = vsel %vm2332, %v1764, -inf
    %v2593 = vmax.f32 %v2591, %v2592
    %v2594 = vsel %vm2332, %v1715, -inf
    %v2595 = vsel %vm2332, %v1771, -inf
    %v2596 = vmax.f32 %v2594, %v2595
    %v2597 = vsel %vm2332, %v1778, -inf
    %v2598 = vsel %vm2332, %v1834, -inf
    %v2599 = vmax.f32 %v2597, %v2598
    %v2600 = vsel %vm2332, %v1785, -inf
    %v2601 = vsel %vm2332, %v1841, -inf
    %v2602 = vmax.f32 %v2600, %v2601
    %v2603 = vsel %vm2332, %v1792, -inf
    %v2604 = vsel %vm2332, %v1848, -inf
    %v2605 = vmax.f32 %v2603, %v2604
    %v2606 = vsel %vm2332, %v1799, -inf
    %v2607 = vsel %vm2332, %v1855, -inf
    %v2608 = vmax.f32 %v2606, %v2607
    %v2609 = vsel %vm2332, %v1806, -inf
    %v2610 = vsel %vm2332, %v1862, -inf
    %v2611 = vmax.f32 %v2609, %v2610
    %v2612 = vsel %vm2332, %v1813, -inf
    %v2613 = vsel %vm2332, %v1869, -inf
    %v2614 = vmax.f32 %v2612, %v2613
    %v2615 = vsel %vm2332, %v1820, -inf
    %v2616 = vsel %vm2332, %v1876, -inf
    %v2617 = vmax.f32 %v2615, %v2616
    %v2618 = vsel %vm2332, %v1827, -inf
    %v2619 = vsel %vm2332, %v1883, -inf
    %v2620 = vmax.f32 %v2618, %v2619
    %v2621 = vsel %vm2332, %v1890, -inf
    %v2622 = vsel %vm2332, %v1946, -inf
    %v2623 = vmax.f32 %v2621, %v2622
    %v2624 = vsel %vm2332, %v1897, -inf
    %v2625 = vsel %vm2332, %v1953, -inf
    %v2626 = vmax.f32 %v2624, %v2625
    %v2627 = vsel %vm2332, %v1904, -inf
    %v2628 = vsel %vm2332, %v1960, -inf
    %v2629 = vmax.f32 %v2627, %v2628
    %v2630 = vsel %vm2332, %v1911, -inf
    %v2631 = vsel %vm2332, %v1967, -inf
    %v2632 = vmax.f32 %v2630, %v2631
    %v2633 = vsel %vm2332, %v1918, -inf
    %v2634 = vsel %vm2332, %v1974, -inf
    %v2635 = vmax.f32 %v2633, %v2634
    %v2636 = vsel %vm2332, %v1925, -inf
    %v2637 = vsel %vm2332, %v1981, -inf
    %v2638 = vmax.f32 %v2636, %v2637
    %v2639 = vsel %vm2332, %v1932, -inf
    %v2640 = vsel %vm2332, %v1988, -inf
    %v2641 = vmax.f32 %v2639, %v2640
    %v2642 = vsel %vm2332, %v1939, -inf
    %v2643 = vsel %vm2332, %v1995, -inf
    %v2644 = vmax.f32 %v2642, %v2643
    %v2645 = vsel %vm2332, %v2002, -inf
    %v2646 = vsel %vm2332, %v2058, -inf
    %v2647 = vmax.f32 %v2645, %v2646
    %v2648 = vsel %vm2332, %v2009, -inf
    %v2649 = vsel %vm2332, %v2065, -inf
    %v2650 = vmax.f32 %v2648, %v2649
    %v2651 = vsel %vm2332, %v2016, -inf
    %v2652 = vsel %vm2332, %v2072, -inf
    %v2653 = vmax.f32 %v2651, %v2652
    %v2654 = vsel %vm2332, %v2023, -inf
    %v2655 = vsel %vm2332, %v2079, -inf
    %v2656 = vmax.f32 %v2654, %v2655
    %v2657 = vsel %vm2332, %v2030, -inf
    %v2658 = vsel %vm2332, %v2086, -inf
    %v2659 = vmax.f32 %v2657, %v2658
    %v2660 = vsel %vm2332, %v2037, -inf
    %v2661 = vsel %vm2332, %v2093, -inf
    %v2662 = vmax.f32 %v2660, %v2661
    %v2663 = vsel %vm2332, %v2044, -inf
    %v2664 = vsel %vm2332, %v2100, -inf
    %v2665 = vmax.f32 %v2663, %v2664
    %v2666 = vsel %vm2332, %v2051, -inf
    %v2667 = vsel %vm2332, %v2107, -inf
    %v2668 = vmax.f32 %v2666, %v2667
    %v2669 = vsel %vm2332, %v2114, -inf
    %v2670 = vsel %vm2332, %v2170, -inf
    %v2671 = vmax.f32 %v2669, %v2670
    %v2672 = vsel %vm2332, %v2121, -inf
    %v2673 = vsel %vm2332, %v2177, -inf
    %v2674 = vmax.f32 %v2672, %v2673
    %v2675 = vsel %vm2332, %v2128, -inf
    %v2676 = vsel %vm2332, %v2184, -inf
    %v2677 = vmax.f32 %v2675, %v2676
    %v2678 = vsel %vm2332, %v2135, -inf
    %v2679 = vsel %vm2332, %v2191, -inf
    %v2680 = vmax.f32 %v2678, %v2679
    %v2681 = vsel %vm2332, %v2142, -inf
    %v2682 = vsel %vm2332, %v2198, -inf
    %v2683 = vmax.f32 %v2681, %v2682
    %v2684 = vsel %vm2332, %v2149, -inf
    %v2685 = vsel %vm2332, %v2205, -inf
    %v2686 = vmax.f32 %v2684, %v2685
    %v2687 = vsel %vm2332, %v2156, -inf
    %v2688 = vsel %vm2332, %v2212, -inf
    %v2689 = vmax.f32 %v2687, %v2688
    %v2690 = vsel %vm2332, %v2163, -inf
    %v2691 = vsel %vm2332, %v2219, -inf
    %v2692 = vmax.f32 %v2690, %v2691
    %v2693 = vsel %vm2332, %v2226, -inf
    %v2694 = vsel %vm2332, %v2282, -inf
    %v2695 = vmax.f32 %v2693, %v2694
    %v2696 = vsel %vm2332, %v2233, -inf
    %v2697 = vsel %vm2332, %v2289, -inf
    %v2698 = vmax.f32 %v2696, %v2697
    %v2699 = vsel %vm2332, %v2240, -inf
    %v2700 = vsel %vm2332, %v2296, -inf
    %v2701 = vmax.f32 %v2699, %v2700
    %v2702 = vsel %vm2332, %v2247, -inf
    %v2703 = vsel %vm2332, %v2303, -inf
    %v2704 = vmax.f32 %v2702, %v2703
    %v2705 = vsel %vm2332, %v2254, -inf
    %v2706 = vsel %vm2332, %v2310, -inf
    %v2707 = vmax.f32 %v2705, %v2706
    %v2708 = vsel %vm2332, %v2261, -inf
    %v2709 = vsel %vm2332, %v2317, -inf
    %v2710 = vmax.f32 %v2708, %v2709
    %v2711 = vsel %vm2332, %v2268, -inf
    %v2712 = vsel %vm2332, %v2324, -inf
    %v2713 = vmax.f32 %v2711, %v2712
    %v2714 = vsel %vm2332, %v2275, -inf
    %v2715 = vsel %vm2332, %v2331, -inf
    %v2716 = vmax.f32 %v2714, %v2715
    %vm2717 = vcmask 24576
    %2718 = vst.msk [vmem:[#allocation2] sm:$0x1] %vm2717, 0.0
    %2719 = vst.msk [vmem:[#allocation2 + $0x10] sm:$0x1] %vm2717, 0.0
    %2720 = vst.msk [vmem:[#allocation2 + $0x20] sm:$0x1] %vm2717, 0.0
    %2721 = vst.msk [vmem:[#allocation2 + $0x30] sm:$0x1] %vm2717, 0.0
    %2722 = vst.msk [vmem:[#allocation2 + $0x40] sm:$0x1] %vm2717, 0.0
    %2723 = vst.msk [vmem:[#allocation2 + $0x50] sm:$0x1] %vm2717, 0.0
    %2724 = vst.msk [vmem:[#allocation2 + $0x60] sm:$0x1] %vm2717, 0.0
    %2725 = vst.msk [vmem:[#allocation2 + $0x70] sm:$0x1] %vm2717, 0.0
    %2726 = vst.msk [vmem:[#allocation2 + $0x80] sm:$0x1] %vm2717, 0.0
    %2727 = vst.msk [vmem:[#allocation2 + $0x90] sm:$0x1] %vm2717, 0.0
    %2728 = vst.msk [vmem:[#allocation2 + $0xa0] sm:$0x1] %vm2717, 0.0
    %2729 = vst.msk [vmem:[#allocation2 + $0xb0] sm:$0x1] %vm2717, 0.0
    %2730 = vst.msk [vmem:[#allocation2 + $0xc0] sm:$0x1] %vm2717, 0.0
    %2731 = vst.msk [vmem:[#allocation2 + $0xd0] sm:$0x1] %vm2717, 0.0
    %2732 = vst.msk [vmem:[#allocation2 + $0xe0] sm:$0x1] %vm2717, 0.0
    %2733 = vst.msk [vmem:[#allocation2 + $0xf0] sm:$0x1] %vm2717, 0.0
    %2734 = vst.msk [vmem:[#allocation2 + $0x100] sm:$0x1] %vm2717, 0.0
    %2735 = vst.msk [vmem:[#allocation2 + $0x110] sm:$0x1] %vm2717, 0.0
    %2736 = vst.msk [vmem:[#allocation2 + $0x120] sm:$0x1] %vm2717, 0.0
    %2737 = vst.msk [vmem:[#allocation2 + $0x130] sm:$0x1] %vm2717, 0.0
    %2738 = vst.msk [vmem:[#allocation2 + $0x9] sm:$0x1] %vm2717, 0.0
    %2739 = vst.msk [vmem:[#allocation2 + $0x19] sm:$0x1] %vm2717, 0.0
    %2740 = vst.msk [vmem:[#allocation2 + $0x29] sm:$0x1] %vm2717, 0.0
    %2741 = vst.msk [vmem:[#allocation2 + $0x39] sm:$0x1] %vm2717, 0.0
    %2742 = vst.msk [vmem:[#allocation2 + $0x49] sm:$0x1] %vm2717, 0.0
    %2743 = vst.msk [vmem:[#allocation2 + $0x59] sm:$0x1] %vm2717, 0.0
    %2744 = vst.msk [vmem:[#allocation2 + $0x69] sm:$0x1] %vm2717, 0.0
    %2745 = vst.msk [vmem:[#allocation2 + $0x79] sm:$0x1] %vm2717, 0.0
    %2746 = vst.msk [vmem:[#allocation2 + $0x89] sm:$0x1] %vm2717, 0.0
    %2747 = vst.msk [vmem:[#allocation2 + $0x99] sm:$0x1] %vm2717, 0.0
    %2748 = vst.msk [vmem:[#allocation2 + $0xa9] sm:$0x1] %vm2717, 0.0
    %2749 = vst.msk [vmem:[#allocation2 + $0xb9] sm:$0x1] %vm2717, 0.0
    %2750 = vst.msk [vmem:[#allocation2 + $0xc9] sm:$0x1] %vm2717, 0.0
    %2751 = vst.msk [vmem:[#allocation2 + $0xd9] sm:$0x1] %vm2717, 0.0
    %2752 = vst.msk [vmem:[#allocation2 + $0xe9] sm:$0x1] %vm2717, 0.0
    %2753 = vst.msk [vmem:[#allocation2 + $0xf9] sm:$0x1] %vm2717, 0.0
    %2754 = vst.msk [vmem:[#allocation2 + $0x109] sm:$0x1] %vm2717, 0.0
    %2755 = vst.msk [vmem:[#allocation2 + $0x119] sm:$0x1] %vm2717, 0.0
    %2756 = vst.msk [vmem:[#allocation2 + $0x129] sm:$0x1] %vm2717, 0.0
    %2757 = vst.msk [vmem:[#allocation2 + $0x139] sm:$0x1] %vm2717, 0.0
    %2758 = vst.msk [vmem:[#allocation2] sm:$0xff] %vm2332, 0.0
    %2759 = vst.msk [vmem:[#allocation2 + $0x8] sm:$0x3] %vm539, 0.0
    %2760 = vst.msk [vmem:[#allocation2 + $0xa0] sm:$0xff] %vm2332, 0.0
    %2761 = vst.msk [vmem:[#allocation2 + $0xa8] sm:$0x3] %vm539, 0.0
    %s2762 = scalar_lea.vmem [#allocation2], 144
    %2763 = vst.msk [vmem:[%s2762] sm:$0xff] %vm2332, 0.0
    %2764 = vst.msk [vmem:[%s2762 + $0x8] sm:$0x3] %vm539, 0.0
    %2765 = vst.msk [vmem:[%s2762 + $0xa0] sm:$0xff] %vm2332, 0.0
    %2766 = vst.msk [vmem:[%s2762 + $0xa8] sm:$0x3] %vm539, 0.0
    %vm2767 = vcmask 57344
    %2768 = vst.msk [vmem:[#allocation3] sm:$0x1] %vm2767, 0.0
    %2769 = vst.msk [vmem:[#allocation3 + $0x10] sm:$0x1] %vm2767, 0.0
    %2770 = vst.msk [vmem:[#allocation3 + $0x20] sm:$0x1] %vm2767, 0.0
    %2771 = vst.msk [vmem:[#allocation3 + $0x30] sm:$0x1] %vm2767, 0.0
    %2772 = vst.msk [vmem:[#allocation3 + $0x40] sm:$0x1] %vm2767, 0.0
    %2773 = vst.msk [vmem:[#allocation3 + $0x50] sm:$0x1] %vm2767, 0.0
    %2774 = vst.msk [vmem:[#allocation3 + $0x60] sm:$0x1] %vm2767, 0.0
    %2775 = vst.msk [vmem:[#allocation3 + $0x70] sm:$0x1] %vm2767, 0.0
    %2776 = vst.msk [vmem:[#allocation3 + $0x80] sm:$0x1] %vm2767, 0.0
    %2777 = vst.msk [vmem:[#allocation3 + $0x90] sm:$0x1] %vm2767, 0.0
    %2778 = vst.msk [vmem:[#allocation3 + $0xa0] sm:$0x1] %vm2767, 0.0
    %2779 = vst.msk [vmem:[#allocation3 + $0xb0] sm:$0x1] %vm2767, 0.0
    %2780 = vst.msk [vmem:[#allocation3 + $0xc0] sm:$0x1] %vm2767, 0.0
    %2781 = vst.msk [vmem:[#allocation3 + $0xd0] sm:$0x1] %vm2767, 0.0
    %2782 = vst.msk [vmem:[#allocation3 + $0xe0] sm:$0x1] %vm2767, 0.0
    %2783 = vst.msk [vmem:[#allocation3 + $0xf0] sm:$0x1] %vm2767, 0.0
    %2784 = vst.msk [vmem:[#allocation3 + $0x100] sm:$0x1] %vm2767, 0.0
    %2785 = vst.msk [vmem:[#allocation3 + $0x110] sm:$0x1] %vm2767, 0.0
    %2786 = vst.msk [vmem:[#allocation3 + $0x120] sm:$0x1] %vm2767, 0.0
    %2787 = vst.msk [vmem:[#allocation3 + $0x130] sm:$0x1] %vm2767, 0.0
    %2788 = vst.msk [vmem:[#allocation3 + $0x9] sm:$0x1] %vm2767, 0.0
    %2789 = vst.msk [vmem:[#allocation3 + $0x19] sm:$0x1] %vm2767, 0.0
    %2790 = vst.msk [vmem:[#allocation3 + $0x29] sm:$0x1] %vm2767, 0.0
    %2791 = vst.msk [vmem:[#allocation3 + $0x39] sm:$0x1] %vm2767, 0.0
    %2792 = vst.msk [vmem:[#allocation3 + $0x49] sm:$0x1] %vm2767, 0.0
    %2793 = vst.msk [vmem:[#allocation3 + $0x59] sm:$0x1] %vm2767, 0.0
    %2794 = vst.msk [vmem:[#allocation3 + $0x69] sm:$0x1] %vm2767, 0.0
    %2795 = vst.msk [vmem:[#allocation3 + $0x79] sm:$0x1] %vm2767, 0.0
    %2796 = vst.msk [vmem:[#allocation3 + $0x89] sm:$0x1] %vm2767, 0.0
    %2797 = vst.msk [vmem:[#allocation3 + $0x99] sm:$0x1] %vm2767, 0.0
    %2798 = vst.msk [vmem:[#allocation3 + $0xa9] sm:$0x1] %vm2767, 0.0
    %2799 = vst.msk [vmem:[#allocation3 + $0xb9] sm:$0x1] %vm2767, 0.0
    %2800 = vst.msk [vmem:[#allocation3 + $0xc9] sm:$0x1] %vm2767, 0.0
    %2801 = vst.msk [vmem:[#allocation3 + $0xd9] sm:$0x1] %vm2767, 0.0
    %2802 = vst.msk [vmem:[#allocation3 + $0xe9] sm:$0x1] %vm2767, 0.0
    %2803 = vst.msk [vmem:[#allocation3 + $0xf9] sm:$0x1] %vm2767, 0.0
    %2804 = vst.msk [vmem:[#allocation3 + $0x109] sm:$0x1] %vm2767, 0.0
    %2805 = vst.msk [vmem:[#allocation3 + $0x119] sm:$0x1] %vm2767, 0.0
    %2806 = vst.msk [vmem:[#allocation3 + $0x129] sm:$0x1] %vm2767, 0.0
    %2807 = vst.msk [vmem:[#allocation3 + $0x139] sm:$0x1] %vm2767, 0.0
    %vm2808 = vcmask 64512
    %2809 = vst.msk [vmem:[#allocation3] sm:$0xff] %vm2808, 0.0
    %vm2810 = vcmask 58368
    %2811 = vst.msk [vmem:[#allocation3 + $0x8] sm:$0x3] %vm2810, 0.0
    %2812 = vst.msk [vmem:[#allocation3 + $0xa0] sm:$0xff] %vm2808, 0.0
    %2813 = vst.msk [vmem:[#allocation3 + $0xa8] sm:$0x3] %vm2810, 0.0
    %s2814 = scalar_lea.vmem [#allocation3], 144
    %2815 = vst.msk [vmem:[%s2814] sm:$0xff] %vm2808, 0.0
    %2816 = vst.msk [vmem:[%s2814 + $0x8] sm:$0x3] %vm2810, 0.0
    %2817 = vst.msk [vmem:[%s2814 + $0xa0] sm:$0xff] %vm2808, 0.0
    %2818 = vst.msk [vmem:[%s2814 + $0xa8] sm:$0x3] %vm2810, 0.0
    %vm2947 = vcmask 1041409
    %v2948 = vsel %vm2947, %v2338, %v2335
    %vm2949 = vcmask 1042434
    %v2950 = vsel %vm2949, %v2341, %v2948
    %vm2951 = vcmask 1043459
    %v2952 = vsel %vm2951, %v2344, %v2950
    %vm2953 = vcmask 1044484
    %v2954 = vsel %vm2953, %v2347, %v2952
    %vm2955 = vcmask 1045509
    %v2956 = vsel %vm2955, %v2350, %v2954
    %vm2957 = vcmask 1046534
    %v2958 = vsel %vm2957, %v2353, %v2956
    %vm2959 = vcmask 1047559
    %v2960 = vsel %vm2959, %v2356, %v2958
    %v2961 = vsel %vm2947, %v2362, %v2359
    %v2962 = vsel %vm2949, %v2365, %v2961
    %v2963 = vsel %vm2951, %v2368, %v2962
    %v2964 = vsel %vm2953, %v2371, %v2963
    %v2965 = vsel %vm2955, %v2374, %v2964
    %v2966 = vsel %vm2957, %v2377, %v2965
    %v2967 = vsel %vm2959, %v2380, %v2966
    %v2968 = vsel %vm2947, %v2386, %v2383
    %v2969 = vsel %vm2949, %v2389, %v2968
    %v2970 = vsel %vm2951, %v2392, %v2969
    %v2971 = vsel %vm2953, %v2395, %v2970
    %v2972 = vsel %vm2955, %v2398, %v2971
    %v2973 = vsel %vm2957, %v2401, %v2972
    %v2974 = vsel %vm2959, %v2404, %v2973
    %v2975 = vsel %vm2947, %v2410, %v2407
    %v2976 = vsel %vm2949, %v2413, %v2975
    %v2977 = vsel %vm2951, %v2416, %v2976
    %v2978 = vsel %vm2953, %v2419, %v2977
    %v2979 = vsel %vm2955, %v2422, %v2978
    %v2980 = vsel %vm2957, %v2425, %v2979
    %v2981 = vsel %vm2959, %v2428, %v2980
    %v2982 = vsel %vm2947, %v2434, %v2431
    %v2983 = vsel %vm2949, %v2437, %v2982
    %v2984 = vsel %vm2951, %v2440, %v2983
    %v2985 = vsel %vm2953, %v2443, %v2984
    %v2986 = vsel %vm2955, %v2446, %v2985
    %v2987 = vsel %vm2957, %v2449, %v2986
    %v2988 = vsel %vm2959, %v2452, %v2987
    %v2989 = vsel %vm2947, %v2458, %v2455
    %v2990 = vsel %vm2949, %v2461, %v2989
    %v2991 = vsel %vm2951, %v2464, %v2990
    %v2992 = vsel %vm2953, %v2467, %v2991
    %v2993 = vsel %vm2955, %v2470, %v2992
    %v2994 = vsel %vm2957, %v2473, %v2993
    %v2995 = vsel %vm2959, %v2476, %v2994
    %v2996 = vsel %vm2947, %v2482, %v2479
    %v2997 = vsel %vm2949, %v2485, %v2996
    %v2998 = vsel %vm2951, %v2488, %v2997
    %v2999 = vsel %vm2953, %v2491, %v2998
    %v3000 = vsel %vm2955, %v2494, %v2999
    %v3001 = vsel %vm2957, %v2497, %v3000
    %v3002 = vsel %vm2959, %v2500, %v3001
    %v3003 = vsel %vm2947, %v2506, %v2503
    %v3004 = vsel %vm2949, %v2509, %v3003
    %v3005 = vsel %vm2951, %v2512, %v3004
    %v3006 = vsel %vm2953, %v2515, %v3005
    %v3007 = vsel %vm2955, %v2518, %v3006
    %v3008 = vsel %vm2957, %v2521, %v3007
    %v3009 = vsel %vm2959, %v2524, %v3008
    %v3010 = vsel %vm2947, %v2530, %v2527
    %v3011 = vsel %vm2949, %v2533, %v3010
    %v3012 = vsel %vm2951, %v2536, %v3011
    %v3013 = vsel %vm2953, %v2539, %v3012
    %v3014 = vsel %vm2955, %v2542, %v3013
    %v3015 = vsel %vm2957, %v2545, %v3014
    %v3016 = vsel %vm2959, %v2548, %v3015
    %v3017 = vsel %vm2947, %v2554, %v2551
    %v3018 = vsel %vm2949, %v2557, %v3017
    %v3019 = vsel %vm2951, %v2560, %v3018
    %v3020 = vsel %vm2953, %v2563, %v3019
    %v3021 = vsel %vm2955, %v2566, %v3020
    %v3022 = vsel %vm2957, %v2569, %v3021
    %v3023 = vsel %vm2959, %v2572, %v3022
    %v3024 = vsel %vm2947, %v2578, %v2575
    %v3025 = vsel %vm2949, %v2581, %v3024
    %v3026 = vsel %vm2951, %v2584, %v3025
    %v3027 = vsel %vm2953, %v2587, %v3026
    %v3028 = vsel %vm2955, %v2590, %v3027
    %v3029 = vsel %vm2957, %v2593, %v3028
    %v3030 = vsel %vm2959, %v2596, %v3029
    %v3031 = vsel %vm2947, %v2602, %v2599
    %v3032 = vsel %vm2949, %v2605, %v3031
    %v3033 = vsel %vm2951, %v2608, %v3032
    %v3034 = vsel %vm2953, %v2611, %v3033
    %v3035 = vsel %vm2955, %v2614, %v3034
    %v3036 = vsel %vm2957, %v2617, %v3035
    %v3037 = vsel %vm2959, %v2620, %v3036
    %v3038 = vsel %vm2947, %v2626, %v2623
    %v3039 = vsel %vm2949, %v2629, %v3038
    %v3040 = vsel %vm2951, %v2632, %v3039
    %v3041 = vsel %vm2953, %v2635, %v3040
    %v3042 = vsel %vm2955, %v2638, %v3041
    %v3043 = vsel %vm2957, %v2641, %v3042
    %v3044 = vsel %vm2959, %v2644, %v3043
    %v3045 = vsel %vm2947, %v2650, %v2647
    %v3046 = vsel %vm2949, %v2653, %v3045
    %v3047 = vsel %vm2951, %v2656, %v3046
    %v3048 = vsel %vm2953, %v2659, %v3047
    %v3049 = vsel %vm2955, %v2662, %v3048
    %v3050 = vsel %vm2957, %v2665, %v3049
    %v3051 = vsel %vm2959, %v2668, %v3050
    %v3052 = vsel %vm2947, %v2674, %v2671
    %v3053 = vsel %vm2949, %v2677, %v3052
    %v3054 = vsel %vm2951, %v2680, %v3053
    %v3055 = vsel %vm2953, %v2683, %v3054
    %v3056 = vsel %vm2955, %v2686, %v3055
    %v3057 = vsel %vm2957, %v2689, %v3056
    %v3058 = vsel %vm2959, %v2692, %v3057
    %v3059 = vsel %vm2947, %v2698, %v2695
    %v3060 = vsel %vm2949, %v2701, %v3059
    %v3061 = vsel %vm2951, %v2704, %v3060
    %v3062 = vsel %vm2953, %v2707, %v3061
    %v3063 = vsel %vm2955, %v2710, %v3062
    %v3064 = vsel %vm2957, %v2713, %v3063
    %v3065 = vsel %vm2959, %v2716, %v3064
    %s3082 = scalar_lea.vmem [#allocation2], 16
    %3083 = vst.msk [vmem:[%s3082 + $0x1] sm:$0xff] %vm2332, %v2960
    %3084 = vst.msk [vmem:[%s3082 + $0x11] sm:$0xff] %vm2332, %v2967
    %3085 = vst.msk [vmem:[%s3082 + $0x21] sm:$0xff] %vm2332, %v2974
    %3086 = vst.msk [vmem:[%s3082 + $0x31] sm:$0xff] %vm2332, %v2981
    %3087 = vst.msk [vmem:[%s3082 + $0x41] sm:$0xff] %vm2332, %v2988
    %3088 = vst.msk [vmem:[%s3082 + $0x51] sm:$0xff] %vm2332, %v2995
    %3089 = vst.msk [vmem:[%s3082 + $0x61] sm:$0xff] %vm2332, %v3002
    %3090 = vst.msk [vmem:[%s3082 + $0x71] sm:$0xff] %vm2332, %v3009
    %3091 = vst.msk [vmem:[%s3082 + $0xa1] sm:$0xff] %vm2332, %v3016
    %3092 = vst.msk [vmem:[%s3082 + $0xb1] sm:$0xff] %vm2332, %v3023
    %3093 = vst.msk [vmem:[%s3082 + $0xc1] sm:$0xff] %vm2332, %v3030
    %3094 = vst.msk [vmem:[%s3082 + $0xd1] sm:$0xff] %vm2332, %v3037
    %3095 = vst.msk [vmem:[%s3082 + $0xe1] sm:$0xff] %vm2332, %v3044
    %3096 = vst.msk [vmem:[%s3082 + $0xf1] sm:$0xff] %vm2332, %v3051
    %3097 = vst.msk [vmem:[%s3082 + $0x101] sm:$0xff] %vm2332, %v3058
    %3098 = vst.msk [vmem:[%s3082 + $0x111] sm:$0xff] %vm2332, %v3065
    %v3099 = vld [vmem:[#allocation2] sm:$0xff]
    %v3100 = vld [vmem:[#allocation2 + $0x10] sm:$0xff]
    %v3101 = vld [vmem:[#allocation2 + $0x20] sm:$0xff]
    %v3102 = vld [vmem:[#allocation2 + $0x30] sm:$0xff]
    %v3103 = vld [vmem:[#allocation2 + $0x40] sm:$0xff]
    %v3104 = vld [vmem:[#allocation2 + $0x50] sm:$0xff]
    %v3105 = vld [vmem:[#allocation2 + $0x60] sm:$0xff]
    %v3106 = vld [vmem:[#allocation2 + $0x70] sm:$0xff]
    %v3107 = vld [vmem:[#allocation2 + $0xa0] sm:$0xff]
    %v3108 = vld [vmem:[#allocation2 + $0xb0] sm:$0xff]
    %v3109 = vld [vmem:[#allocation2 + $0xc0] sm:$0xff]
    %v3110 = vld [vmem:[#allocation2 + $0xd0] sm:$0xff]
    %v3111 = vld [vmem:[#allocation2 + $0xe0] sm:$0xff]
    %v3112 = vld [vmem:[#allocation2 + $0xf0] sm:$0xff]
    %v3113 = vld [vmem:[#allocation2 + $0x100] sm:$0xff]
    %v3114 = vld [vmem:[#allocation2 + $0x110] sm:$0xff]
    %v3115 = vld [vmem:[#allocation2 + $0x1] sm:$0xff]
    %v3116 = vld [vmem:[#allocation2 + $0x11] sm:$0xff]
    %v3117 = vld [vmem:[#allocation2 + $0x21] sm:$0xff]
    %v3118 = vld [vmem:[#allocation2 + $0x31] sm:$0xff]
    %v3119 = vld [vmem:[#allocation2 + $0x41] sm:$0xff]
    %v3120 = vld [vmem:[#allocation2 + $0x51] sm:$0xff]
    %v3121 = vld [vmem:[#allocation2 + $0x61] sm:$0xff]
    %v3122 = vld [vmem:[#allocation2 + $0x71] sm:$0xff]
    %v3123 = vld [vmem:[#allocation2 + $0xa1] sm:$0xff]
    %v3124 = vld [vmem:[#allocation2 + $0xb1] sm:$0xff]
    %v3125 = vld [vmem:[#allocation2 + $0xc1] sm:$0xff]
    %v3126 = vld [vmem:[#allocation2 + $0xd1] sm:$0xff]
    %v3127 = vld [vmem:[#allocation2 + $0xe1] sm:$0xff]
    %v3128 = vld [vmem:[#allocation2 + $0xf1] sm:$0xff]
    %v3129 = vld [vmem:[#allocation2 + $0x101] sm:$0xff]
    %v3130 = vld [vmem:[#allocation2 + $0x111] sm:$0xff]
    %v3131 = vld [vmem:[#allocation2 + $0x2] sm:$0xff]
    %v3132 = vld [vmem:[#allocation2 + $0x12] sm:$0xff]
    %v3133 = vld [vmem:[#allocation2 + $0x22] sm:$0xff]
    %v3134 = vld [vmem:[#allocation2 + $0x32] sm:$0xff]
    %v3135 = vld [vmem:[#allocation2 + $0x42] sm:$0xff]
    %v3136 = vld [vmem:[#allocation2 + $0x52] sm:$0xff]
    %v3137 = vld [vmem:[#allocation2 + $0x62] sm:$0xff]
    %v3138 = vld [vmem:[#allocation2 + $0x72] sm:$0xff]
    %v3139 = vld [vmem:[#allocation2 + $0xa2] sm:$0xff]
    %v3140 = vld [vmem:[#allocation2 + $0xb2] sm:$0xff]
    %v3141 = vld [vmem:[#allocation2 + $0xc2] sm:$0xff]
    %v3142 = vld [vmem:[#allocation2 + $0xd2] sm:$0xff]
    %v3143 = vld [vmem:[#allocation2 + $0xe2] sm:$0xff]
    %v3144 = vld [vmem:[#allocation2 + $0xf2] sm:$0xff]
    %v3145 = vld [vmem:[#allocation2 + $0x102] sm:$0xff]
    %v3146 = vld [vmem:[#allocation2 + $0x112] sm:$0xff]
    %v3147 = vld [vmem:[%s3082] sm:$0xff]
    %v3148 = vld [vmem:[%s3082 + $0x10] sm:$0xff]
    %v3149 = vld [vmem:[%s3082 + $0x20] sm:$0xff]
    %v3150 = vld [vmem:[%s3082 + $0x30] sm:$0xff]
    %v3151 = vld [vmem:[%s3082 + $0x40] sm:$0xff]
    %v3152 = vld [vmem:[%s3082 + $0x50] sm:$0xff]
    %v3153 = vld [vmem:[%s3082 + $0x60] sm:$0xff]
    %v3154 = vld [vmem:[%s3082 + $0x70] sm:$0xff]
    %v3155 = vld [vmem:[%s3082 + $0xa0] sm:$0xff]
    %v3156 = vld [vmem:[%s3082 + $0xb0] sm:$0xff]
    %v3157 = vld [vmem:[%s3082 + $0xc0] sm:$0xff]
    %v3158 = vld [vmem:[%s3082 + $0xd0] sm:$0xff]
    %v3159 = vld [vmem:[%s3082 + $0xe0] sm:$0xff]
    %v3160 = vld [vmem:[%s3082 + $0xf0] sm:$0xff]
    %v3161 = vld [vmem:[%s3082 + $0x100] sm:$0xff]
    %v3162 = vld [vmem:[%s3082 + $0x110] sm:$0xff]
    %v3163 = vld [vmem:[%s3082 + $0x1] sm:$0xff]
    %v3164 = vld [vmem:[%s3082 + $0x11] sm:$0xff]
    %v3165 = vld [vmem:[%s3082 + $0x21] sm:$0xff]
    %v3166 = vld [vmem:[%s3082 + $0x31] sm:$0xff]
    %v3167 = vld [vmem:[%s3082 + $0x41] sm:$0xff]
    %v3168 = vld [vmem:[%s3082 + $0x51] sm:$0xff]
    %v3169 = vld [vmem:[%s3082 + $0x61] sm:$0xff]
    %v3170 = vld [vmem:[%s3082 + $0x71] sm:$0xff]
    %v3171 = vld [vmem:[%s3082 + $0xa1] sm:$0xff]
    %v3172 = vld [vmem:[%s3082 + $0xb1] sm:$0xff]
    %v3173 = vld [vmem:[%s3082 + $0xc1] sm:$0xff]
    %v3174 = vld [vmem:[%s3082 + $0xd1] sm:$0xff]
    %v3175 = vld [vmem:[%s3082 + $0xe1] sm:$0xff]
    %v3176 = vld [vmem:[%s3082 + $0xf1] sm:$0xff]
    %v3177 = vld [vmem:[%s3082 + $0x101] sm:$0xff]
    %v3178 = vld [vmem:[%s3082 + $0x111] sm:$0xff]
    %v3179 = vld [vmem:[%s3082 + $0x2] sm:$0xff]
    %v3180 = vld [vmem:[%s3082 + $0x12] sm:$0xff]
    %v3181 = vld [vmem:[%s3082 + $0x22] sm:$0xff]
    %v3182 = vld [vmem:[%s3082 + $0x32] sm:$0xff]
    %v3183 = vld [vmem:[%s3082 + $0x42] sm:$0xff]
    %v3184 = vld [vmem:[%s3082 + $0x52] sm:$0xff]
    %v3185 = vld [vmem:[%s3082 + $0x62] sm:$0xff]
    %v3186 = vld [vmem:[%s3082 + $0x72] sm:$0xff]
    %v3187 = vld [vmem:[%s3082 + $0xa2] sm:$0xff]
    %v3188 = vld [vmem:[%s3082 + $0xb2] sm:$0xff]
    %v3189 = vld [vmem:[%s3082 + $0xc2] sm:$0xff]
    %v3190 = vld [vmem:[%s3082 + $0xd2] sm:$0xff]
    %v3191 = vld [vmem:[%s3082 + $0xe2] sm:$0xff]
    %v3192 = vld [vmem:[%s3082 + $0xf2] sm:$0xff]
    %v3193 = vld [vmem:[%s3082 + $0x102] sm:$0xff]
    %v3194 = vld [vmem:[%s3082 + $0x112] sm:$0xff]
    %s3195 = scalar_lea.vmem [#allocation2], 32
    %v3196 = vld [vmem:[%s3195] sm:$0xff]
    %v3197 = vld [vmem:[%s3195 + $0x10] sm:$0xff]
    %v3198 = vld [vmem:[%s3195 + $0x20] sm:$0xff]
    %v3199 = vld [vmem:[%s3195 + $0x30] sm:$0xff]
    %v3200 = vld [vmem:[%s3195 + $0x40] sm:$0xff]
    %v3201 = vld [vmem:[%s3195 + $0x50] sm:$0xff]
    %v3202 = vld [vmem:[%s3195 + $0x60] sm:$0xff]
    %v3203 = vld [vmem:[%s3195 + $0x70] sm:$0xff]
    %v3204 = vld [vmem:[%s3195 + $0xa0] sm:$0xff]
    %v3205 = vld [vmem:[%s3195 + $0xb0] sm:$0xff]
    %v3206 = vld [vmem:[%s3195 + $0xc0] sm:$0xff]
    %v3207 = vld [vmem:[%s3195 + $0xd0] sm:$0xff]
    %v3208 = vld [vmem:[%s3195 + $0xe0] sm:$0xff]
    %v3209 = vld [vmem:[%s3195 + $0xf0] sm:$0xff]
    %v3210 = vld [vmem:[%s3195 + $0x100] sm:$0xff]
    %v3211 = vld [vmem:[%s3195 + $0x110] sm:$0xff]
    %v3212 = vld [vmem:[%s3195 + $0x1] sm:$0xff]
    %v3213 = vld [vmem:[%s3195 + $0x11] sm:$0xff]
    %v3214 = vld [vmem:[%s3195 + $0x21] sm:$0xff]
    %v3215 = vld [vmem:[%s3195 + $0x31] sm:$0xff]
    %v3216 = vld [vmem:[%s3195 + $0x41] sm:$0xff]
    %v3217 = vld [vmem:[%s3195 + $0x51] sm:$0xff]
    %v3218 = vld [vmem:[%s3195 + $0x61] sm:$0xff]
    %v3219 = vld [vmem:[%s3195 + $0x71] sm:$0xff]
    %v3220 = vld [vmem:[%s3195 + $0xa1] sm:$0xff]
    %v3221 = vld [vmem:[%s3195 + $0xb1] sm:$0xff]
    %v3222 = vld [vmem:[%s3195 + $0xc1] sm:$0xff]
    %v3223 = vld [vmem:[%s3195 + $0xd1] sm:$0xff]
    %v3224 = vld [vmem:[%s3195 + $0xe1] sm:$0xff]
    %v3225 = vld [vmem:[%s3195 + $0xf1] sm:$0xff]
    %v3226 = vld [vmem:[%s3195 + $0x101] sm:$0xff]
    %v3227 = vld [vmem:[%s3195 + $0x111] sm:$0xff]
    %v3228 = vld [vmem:[%s3195 + $0x2] sm:$0xff]
    %v3229 = vld [vmem:[%s3195 + $0x12] sm:$0xff]
    %v3230 = vld [vmem:[%s3195 + $0x22] sm:$0xff]
    %v3231 = vld [vmem:[%s3195 + $0x32] sm:$0xff]
    %v3232 = vld [vmem:[%s3195 + $0x42] sm:$0xff]
    %v3233 = vld [vmem:[%s3195 + $0x52] sm:$0xff]
    %v3234 = vld [vmem:[%s3195 + $0x62] sm:$0xff]
    %v3235 = vld [vmem:[%s3195 + $0x72] sm:$0xff]
    %v3236 = vld [vmem:[%s3195 + $0xa2] sm:$0xff]
    %v3237 = vld [vmem:[%s3195 + $0xb2] sm:$0xff]
    %v3238 = vld [vmem:[%s3195 + $0xc2] sm:$0xff]
    %v3239 = vld [vmem:[%s3195 + $0xd2] sm:$0xff]
    %v3240 = vld [vmem:[%s3195 + $0xe2] sm:$0xff]
    %v3241 = vld [vmem:[%s3195 + $0xf2] sm:$0xff]
    %v3242 = vld [vmem:[%s3195 + $0x102] sm:$0xff]
    %v3243 = vld [vmem:[%s3195 + $0x112] sm:$0xff]
    %3260 = vrot.lane.b32.xlu0 %v3115, 4
    %v3261 = vpop.permute.xlu0 %3260
    %3262 = vrot.lane.b32.xlu0 %v3116, 4
    %v3263 = vpop.permute.xlu0 %3262
    %3264 = vrot.lane.b32.xlu0 %v3117, 4
    %v3265 = vpop.permute.xlu0 %3264
    %3266 = vrot.lane.b32.xlu0 %v3118, 4
    %v3267 = vpop.permute.xlu0 %3266
    %3268 = vrot.lane.b32.xlu0 %v3119, 4
    %v3269 = vpop.permute.xlu0 %3268
    %3270 = vrot.lane.b32.xlu0 %v3120, 4
    %v3271 = vpop.permute.xlu0 %3270
    %3272 = vrot.lane.b32.xlu0 %v3121, 4
    %v3273 = vpop.permute.xlu0 %3272
    %3274 = vrot.lane.b32.xlu0 %v3122, 4
    %v3275 = vpop.permute.xlu0 %3274
    %3276 = vrot.lane.b32.xlu0 %v3123, 4
    %v3277 = vpop.permute.xlu0 %3276
    %3278 = vrot.lane.b32.xlu0 %v3124, 4
    %v3279 = vpop.permute.xlu0 %3278
    %3280 = vrot.lane.b32.xlu0 %v3125, 4
    %v3281 = vpop.permute.xlu0 %3280
    %3282 = vrot.lane.b32.xlu0 %v3126, 4
    %v3283 = vpop.permute.xlu0 %3282
    %3284 = vrot.lane.b32.xlu0 %v3127, 4
    %v3285 = vpop.permute.xlu0 %3284
    %3286 = vrot.lane.b32.xlu0 %v3128, 4
    %v3287 = vpop.permute.xlu0 %3286
    %3288 = vrot.lane.b32.xlu0 %v3129, 4
    %v3289 = vpop.permute.xlu0 %3288
    %3290 = vrot.lane.b32.xlu0 %v3130, 4
    %v3291 = vpop.permute.xlu0 %3290
    %3324 = vrot.lane.b32.xlu0 %v3131, 8
    %v3325 = vpop.permute.xlu0 %3324
    %3326 = vrot.lane.b32.xlu0 %v3132, 8
    %v3327 = vpop.permute.xlu0 %3326
    %3328 = vrot.lane.b32.xlu0 %v3133, 8
    %v3329 = vpop.permute.xlu0 %3328
    %3330 = vrot.lane.b32.xlu0 %v3134, 8
    %v3331 = vpop.permute.xlu0 %3330
    %3332 = vrot.lane.b32.xlu0 %v3135, 8
    %v3333 = vpop.permute.xlu0 %3332
    %3334 = vrot.lane.b32.xlu0 %v3136, 8
    %v3335 = vpop.permute.xlu0 %3334
    %3336 = vrot.lane.b32.xlu0 %v3137, 8
    %v3337 = vpop.permute.xlu0 %3336
    %3338 = vrot.lane.b32.xlu0 %v3138, 8
    %v3339 = vpop.permute.xlu0 %3338
    %3340 = vrot.lane.b32.xlu0 %v3139, 8
    %v3341 = vpop.permute.xlu0 %3340
    %3342 = vrot.lane.b32.xlu0 %v3140, 8
    %v3343 = vpop.permute.xlu0 %3342
    %3344 = vrot.lane.b32.xlu0 %v3141, 8
    %v3345 = vpop.permute.xlu0 %3344
    %3346 = vrot.lane.b32.xlu0 %v3142, 8
    %v3347 = vpop.permute.xlu0 %3346
    %3348 = vrot.lane.b32.xlu0 %v3143, 8
    %v3349 = vpop.permute.xlu0 %3348
    %3350 = vrot.lane.b32.xlu0 %v3144, 8
    %v3351 = vpop.permute.xlu0 %3350
    %3352 = vrot.lane.b32.xlu0 %v3145, 8
    %v3353 = vpop.permute.xlu0 %3352
    %3354 = vrot.lane.b32.xlu0 %v3146, 8
    %v3355 = vpop.permute.xlu0 %3354
    %3388 = vrot.lane.b32.xlu0 %v3147, 12
    %v3389 = vpop.permute.xlu0 %3388
    %3390 = vrot.lane.b32.xlu0 %v3148, 12
    %v3391 = vpop.permute.xlu0 %3390
    %3392 = vrot.lane.b32.xlu0 %v3149, 12
    %v3393 = vpop.permute.xlu0 %3392
    %3394 = vrot.lane.b32.xlu0 %v3150, 12
    %v3395 = vpop.permute.xlu0 %3394
    %3396 = vrot.lane.b32.xlu0 %v3151, 12
    %v3397 = vpop.permute.xlu0 %3396
    %3398 = vrot.lane.b32.xlu0 %v3152, 12
    %v3399 = vpop.permute.xlu0 %3398
    %3400 = vrot.lane.b32.xlu0 %v3153, 12
    %v3401 = vpop.permute.xlu0 %3400
    %3402 = vrot.lane.b32.xlu0 %v3154, 12
    %v3403 = vpop.permute.xlu0 %3402
    %3404 = vrot.lane.b32.xlu0 %v3155, 12
    %v3405 = vpop.permute.xlu0 %3404
    %3406 = vrot.lane.b32.xlu0 %v3156, 12
    %v3407 = vpop.permute.xlu0 %3406
    %3408 = vrot.lane.b32.xlu0 %v3157, 12
    %v3409 = vpop.permute.xlu0 %3408
    %3410 = vrot.lane.b32.xlu0 %v3158, 12
    %v3411 = vpop.permute.xlu0 %3410
    %3412 = vrot.lane.b32.xlu0 %v3159, 12
    %v3413 = vpop.permute.xlu0 %3412
    %3414 = vrot.lane.b32.xlu0 %v3160, 12
    %v3415 = vpop.permute.xlu0 %3414
    %3416 = vrot.lane.b32.xlu0 %v3161, 12
    %v3417 = vpop.permute.xlu0 %3416
    %3418 = vrot.lane.b32.xlu0 %v3162, 12
    %v3419 = vpop.permute.xlu0 %3418
    %3452 = vrot.lane.b32.xlu0 %v3163, 16
    %v3453 = vpop.permute.xlu0 %3452
    %3454 = vrot.lane.b32.xlu0 %v3164, 16
    %v3455 = vpop.permute.xlu0 %3454
    %3456 = vrot.lane.b32.xlu0 %v3165, 16
    %v3457 = vpop.permute.xlu0 %3456
    %3458 = vrot.lane.b32.xlu0 %v3166, 16
    %v3459 = vpop.permute.xlu0 %3458
    %3460 = vrot.lane.b32.xlu0 %v3167, 16
    %v3461 = vpop.permute.xlu0 %3460
    %3462 = vrot.lane.b32.xlu0 %v3168, 16
    %v3463 = vpop.permute.xlu0 %3462
    %3464 = vrot.lane.b32.xlu0 %v3169, 16
    %v3465 = vpop.permute.xlu0 %3464
    %3466 = vrot.lane.b32.xlu0 %v3170, 16
    %v3467 = vpop.permute.xlu0 %3466
    %3468 = vrot.lane.b32.xlu0 %v3171, 16
    %v3469 = vpop.permute.xlu0 %3468
    %3470 = vrot.lane.b32.xlu0 %v3172, 16
    %v3471 = vpop.permute.xlu0 %3470
    %3472 = vrot.lane.b32.xlu0 %v3173, 16
    %v3473 = vpop.permute.xlu0 %3472
    %3474 = vrot.lane.b32.xlu0 %v3174, 16
    %v3475 = vpop.permute.xlu0 %3474
    %3476 = vrot.lane.b32.xlu0 %v3175, 16
    %v3477 = vpop.permute.xlu0 %3476
    %3478 = vrot.lane.b32.xlu0 %v3176, 16
    %v3479 = vpop.permute.xlu0 %3478
    %3480 = vrot.lane.b32.xlu0 %v3177, 16
    %v3481 = vpop.permute.xlu0 %3480
    %3482 = vrot.lane.b32.xlu0 %v3178, 16
    %v3483 = vpop.permute.xlu0 %3482
    %3516 = vrot.lane.b32.xlu0 %v3179, 20
    %v3517 = vpop.permute.xlu0 %3516
    %3518 = vrot.lane.b32.xlu0 %v3180, 20
    %v3519 = vpop.permute.xlu0 %3518
    %3520 = vrot.lane.b32.xlu0 %v3181, 20
    %v3521 = vpop.permute.xlu0 %3520
    %3522 = vrot.lane.b32.xlu0 %v3182, 20
    %v3523 = vpop.permute.xlu0 %3522
    %3524 = vrot.lane.b32.xlu0 %v3183, 20
    %v3525 = vpop.permute.xlu0 %3524
    %3526 = vrot.lane.b32.xlu0 %v3184, 20
    %v3527 = vpop.permute.xlu0 %3526
    %3528 = vrot.lane.b32.xlu0 %v3185, 20
    %v3529 = vpop.permute.xlu0 %3528
    %3530 = vrot.lane.b32.xlu0 %v3186, 20
    %v3531 = vpop.permute.xlu0 %3530
    %3532 = vrot.lane.b32.xlu0 %v3187, 20
    %v3533 = vpop.permute.xlu0 %3532
    %3534 = vrot.lane.b32.xlu0 %v3188, 20
    %v3535 = vpop.permute.xlu0 %3534
    %3536 = vrot.lane.b32.xlu0 %v3189, 20
    %v3537 = vpop.permute.xlu0 %3536
    %3538 = vrot.lane.b32.xlu0 %v3190, 20
    %v3539 = vpop.permute.xlu0 %3538
    %3540 = vrot.lane.b32.xlu0 %v3191, 20
    %v3541 = vpop.permute.xlu0 %3540
    %3542 = vrot.lane.b32.xlu0 %v3192, 20
    %v3543 = vpop.permute.xlu0 %3542
    %3544 = vrot.lane.b32.xlu0 %v3193, 20
    %v3545 = vpop.permute.xlu0 %3544
    %3546 = vrot.lane.b32.xlu0 %v3194, 20
    %v3547 = vpop.permute.xlu0 %3546
    %3580 = vrot.lane.b32.xlu0 %v3196, 24
    %v3581 = vpop.permute.xlu0 %3580
    %3582 = vrot.lane.b32.xlu0 %v3197, 24
    %v3583 = vpop.permute.xlu0 %3582
    %3584 = vrot.lane.b32.xlu0 %v3198, 24
    %v3585 = vpop.permute.xlu0 %3584
    %3586 = vrot.lane.b32.xlu0 %v3199, 24
    %v3587 = vpop.permute.xlu0 %3586
    %3588 = vrot.lane.b32.xlu0 %v3200, 24
    %v3589 = vpop.permute.xlu0 %3588
    %3590 = vrot.lane.b32.xlu0 %v3201, 24
    %v3591 = vpop.permute.xlu0 %3590
    %3592 = vrot.lane.b32.xlu0 %v3202, 24
    %v3593 = vpop.permute.xlu0 %3592
    %3594 = vrot.lane.b32.xlu0 %v3203, 24
    %v3595 = vpop.permute.xlu0 %3594
    %3596 = vrot.lane.b32.xlu0 %v3204, 24
    %v3597 = vpop.permute.xlu0 %3596
    %3598 = vrot.lane.b32.xlu0 %v3205, 24
    %v3599 = vpop.permute.xlu0 %3598
    %3600 = vrot.lane.b32.xlu0 %v3206, 24
    %v3601 = vpop.permute.xlu0 %3600
    %3602 = vrot.lane.b32.xlu0 %v3207, 24
    %v3603 = vpop.permute.xlu0 %3602
    %3604 = vrot.lane.b32.xlu0 %v3208, 24
    %v3605 = vpop.permute.xlu0 %3604
    %3606 = vrot.lane.b32.xlu0 %v3209, 24
    %v3607 = vpop.permute.xlu0 %3606
    %3608 = vrot.lane.b32.xlu0 %v3210, 24
    %v3609 = vpop.permute.xlu0 %3608
    %3610 = vrot.lane.b32.xlu0 %v3211, 24
    %v3611 = vpop.permute.xlu0 %3610
    %3644 = vrot.lane.b32.xlu0 %v3212, 28
    %v3645 = vpop.permute.xlu0 %3644
    %3646 = vrot.lane.b32.xlu0 %v3213, 28
    %v3647 = vpop.permute.xlu0 %3646
    %3648 = vrot.lane.b32.xlu0 %v3214, 28
    %v3649 = vpop.permute.xlu0 %3648
    %3650 = vrot.lane.b32.xlu0 %v3215, 28
    %v3651 = vpop.permute.xlu0 %3650
    %3652 = vrot.lane.b32.xlu0 %v3216, 28
    %v3653 = vpop.permute.xlu0 %3652
    %3654 = vrot.lane.b32.xlu0 %v3217, 28
    %v3655 = vpop.permute.xlu0 %3654
    %3656 = vrot.lane.b32.xlu0 %v3218, 28
    %v3657 = vpop.permute.xlu0 %3656
    %3658 = vrot.lane.b32.xlu0 %v3219, 28
    %v3659 = vpop.permute.xlu0 %3658
    %3660 = vrot.lane.b32.xlu0 %v3220, 28
    %v3661 = vpop.permute.xlu0 %3660
    %3662 = vrot.lane.b32.xlu0 %v3221, 28
    %v3663 = vpop.permute.xlu0 %3662
    %3664 = vrot.lane.b32.xlu0 %v3222, 28
    %v3665 = vpop.permute.xlu0 %3664
    %3666 = vrot.lane.b32.xlu0 %v3223, 28
    %v3667 = vpop.permute.xlu0 %3666
    %3668 = vrot.lane.b32.xlu0 %v3224, 28
    %v3669 = vpop.permute.xlu0 %3668
    %3670 = vrot.lane.b32.xlu0 %v3225, 28
    %v3671 = vpop.permute.xlu0 %3670
    %3672 = vrot.lane.b32.xlu0 %v3226, 28
    %v3673 = vpop.permute.xlu0 %3672
    %3674 = vrot.lane.b32.xlu0 %v3227, 28
    %v3675 = vpop.permute.xlu0 %3674
    %3708 = vrot.lane.b32.xlu0 %v3228, 32
    %v3709 = vpop.permute.xlu0 %3708
    %3710 = vrot.lane.b32.xlu0 %v3229, 32
    %v3711 = vpop.permute.xlu0 %3710
    %3712 = vrot.lane.b32.xlu0 %v3230, 32
    %v3713 = vpop.permute.xlu0 %3712
    %3714 = vrot.lane.b32.xlu0 %v3231, 32
    %v3715 = vpop.permute.xlu0 %3714
    %3716 = vrot.lane.b32.xlu0 %v3232, 32
    %v3717 = vpop.permute.xlu0 %3716
    %3718 = vrot.lane.b32.xlu0 %v3233, 32
    %v3719 = vpop.permute.xlu0 %3718
    %3720 = vrot.lane.b32.xlu0 %v3234, 32
    %v3721 = vpop.permute.xlu0 %3720
    %3722 = vrot.lane.b32.xlu0 %v3235, 32
    %v3723 = vpop.permute.xlu0 %3722
    %3724 = vrot.lane.b32.xlu0 %v3236, 32
    %v3725 = vpop.permute.xlu0 %3724
    %3726 = vrot.lane.b32.xlu0 %v3237, 32
    %v3727 = vpop.permute.xlu0 %3726
    %3728 = vrot.lane.b32.xlu0 %v3238, 32
    %v3729 = vpop.permute.xlu0 %3728
    %3730 = vrot.lane.b32.xlu0 %v3239, 32
    %v3731 = vpop.permute.xlu0 %3730
    %3732 = vrot.lane.b32.xlu0 %v3240, 32
    %v3733 = vpop.permute.xlu0 %3732
    %3734 = vrot.lane.b32.xlu0 %v3241, 32
    %v3735 = vpop.permute.xlu0 %3734
    %3736 = vrot.lane.b32.xlu0 %v3242, 32
    %v3737 = vpop.permute.xlu0 %3736
    %3738 = vrot.lane.b32.xlu0 %v3243, 32
    %v3739 = vpop.permute.xlu0 %3738
    %v3756 = vsel %vm2332, %v3099, %v3261
    %v3757 = vsel %vm2332, %v3100, %v3263
    %v3758 = vsel %vm2332, %v3101, %v3265
    %v3759 = vsel %vm2332, %v3102, %v3267
    %v3760 = vsel %vm2332, %v3103, %v3269
    %v3761 = vsel %vm2332, %v3104, %v3271
    %v3762 = vsel %vm2332, %v3105, %v3273
    %v3763 = vsel %vm2332, %v3106, %v3275
    %v3764 = vsel %vm2332, %v3107, %v3277
    %v3765 = vsel %vm2332, %v3108, %v3279
    %v3766 = vsel %vm2332, %v3109, %v3281
    %v3767 = vsel %vm2332, %v3110, %v3283
    %v3768 = vsel %vm2332, %v3111, %v3285
    %v3769 = vsel %vm2332, %v3112, %v3287
    %v3770 = vsel %vm2332, %v3113, %v3289
    %v3771 = vsel %vm2332, %v3114, %v3291
    %v3772 = vsel %vm2808, %v3756, %v3325
    %v3773 = vsel %vm2808, %v3757, %v3327
    %v3774 = vsel %vm2808, %v3758, %v3329
    %v3775 = vsel %vm2808, %v3759, %v3331
    %v3776 = vsel %vm2808, %v3760, %v3333
    %v3777 = vsel %vm2808, %v3761, %v3335
    %v3778 = vsel %vm2808, %v3762, %v3337
    %v3779 = vsel %vm2808, %v3763, %v3339
    %v3780 = vsel %vm2808, %v3764, %v3341
    %v3781 = vsel %vm2808, %v3765, %v3343
    %v3782 = vsel %vm2808, %v3766, %v3345
    %v3783 = vsel %vm2808, %v3767, %v3347
    %v3784 = vsel %vm2808, %v3768, %v3349
    %v3785 = vsel %vm2808, %v3769, %v3351
    %v3786 = vsel %vm2808, %v3770, %v3353
    %v3787 = vsel %vm2808, %v3771, %v3355
    %vm3788 = vcmask 97280
    %v3789 = vsel %vm3788, %v3772, %v3389
    %v3790 = vsel %vm3788, %v3773, %v3391
    %v3791 = vsel %vm3788, %v3774, %v3393
    %v3792 = vsel %vm3788, %v3775, %v3395
    %v3793 = vsel %vm3788, %v3776, %v3397
    %v3794 = vsel %vm3788, %v3777, %v3399
    %v3795 = vsel %vm3788, %v3778, %v3401
    %v3796 = vsel %vm3788, %v3779, %v3403
    %v3797 = vsel %vm3788, %v3780, %v3405
    %v3798 = vsel %vm3788, %v3781, %v3407
    %v3799 = vsel %vm3788, %v3782, %v3409
    %v3800 = vsel %vm3788, %v3783, %v3411
    %v3801 = vsel %vm3788, %v3784, %v3413
    %v3802 = vsel %vm3788, %v3785, %v3415
    %v3803 = vsel %vm3788, %v3786, %v3417
    %v3804 = vsel %vm3788, %v3787, %v3419
    %vm3805 = vcmask 130048
    %v3806 = vsel %vm3805, %v3789, %v3453
    %v3807 = vsel %vm3805, %v3790, %v3455
    %v3808 = vsel %vm3805, %v3791, %v3457
    %v3809 = vsel %vm3805, %v3792, %v3459
    %v3810 = vsel %vm3805, %v3793, %v3461
    %v3811 = vsel %vm3805, %v3794, %v3463
    %v3812 = vsel %vm3805, %v3795, %v3465
    %v3813 = vsel %vm3805, %v3796, %v3467
    %v3814 = vsel %vm3805, %v3797, %v3469
    %v3815 = vsel %vm3805, %v3798, %v3471
    %v3816 = vsel %vm3805, %v3799, %v3473
    %v3817 = vsel %vm3805, %v3800, %v3475
    %v3818 = vsel %vm3805, %v3801, %v3477
    %v3819 = vsel %vm3805, %v3802, %v3479
    %v3820 = vsel %vm3805, %v3803, %v3481
    %v3821 = vsel %vm3805, %v3804, %v3483
    %vm3822 = vcmask 162816
    %v3823 = vsel %vm3822, %v3806, %v3517
    %v3824 = vsel %vm3822, %v3807, %v3519
    %v3825 = vsel %vm3822, %v3808, %v3521
    %v3826 = vsel %vm3822, %v3809, %v3523
    %v3827 = vsel %vm3822, %v3810, %v3525
    %v3828 = vsel %vm3822, %v3811, %v3527
    %v3829 = vsel %vm3822, %v3812, %v3529
    %v3830 = vsel %vm3822, %v3813, %v3531
    %v3831 = vsel %vm3822, %v3814, %v3533
    %v3832 = vsel %vm3822, %v3815, %v3535
    %v3833 = vsel %vm3822, %v3816, %v3537
    %v3834 = vsel %vm3822, %v3817, %v3539
    %v3835 = vsel %vm3822, %v3818, %v3541
    %v3836 = vsel %vm3822, %v3819, %v3543
    %v3837 = vsel %vm3822, %v3820, %v3545
    %v3838 = vsel %vm3822, %v3821, %v3547
    %vm3839 = vcmask 195584
    %v3840 = vsel %vm3839, %v3823, %v3581
    %v3841 = vsel %vm3839, %v3824, %v3583
    %v3842 = vsel %vm3839, %v3825, %v3585
    %v3843 = vsel %vm3839, %v3826, %v3587
    %v3844 = vsel %vm3839, %v3827, %v3589
    %v3845 = vsel %vm3839, %v3828, %v3591
    %v3846 = vsel %vm3839, %v3829, %v3593
    %v3847 = vsel %vm3839, %v3830, %v3595
    %v3848 = vsel %vm3839, %v3831, %v3597
    %v3849 = vsel %vm3839, %v3832, %v3599
    %v3850 = vsel %vm3839, %v3833, %v3601
    %v3851 = vsel %vm3839, %v3834, %v3603
    %v3852 = vsel %vm3839, %v3835, %v3605
    %v3853 = vsel %vm3839, %v3836, %v3607
    %v3854 = vsel %vm3839, %v3837, %v3609
    %v3855 = vsel %vm3839, %v3838, %v3611
    %vm3856 = vcmask 228352
    %v3857 = vsel %vm3856, %v3840, %v3645
    %v3858 = vsel %vm3856, %v3841, %v3647
    %v3859 = vsel %vm3856, %v3842, %v3649
    %v3860 = vsel %vm3856, %v3843, %v3651
    %v3861 = vsel %vm3856, %v3844, %v3653
    %v3862 = vsel %vm3856, %v3845, %v3655
    %v3863 = vsel %vm3856, %v3846, %v3657
    %v3864 = vsel %vm3856, %v3847, %v3659
    %v3865 = vsel %vm3856, %v3848, %v3661
    %v3866 = vsel %vm3856, %v3849, %v3663
    %v3867 = vsel %vm3856, %v3850, %v3665
    %v3868 = vsel %vm3856, %v3851, %v3667
    %v3869 = vsel %vm3856, %v3852, %v3669
    %v3870 = vsel %vm3856, %v3853, %v3671
    %v3871 = vsel %vm3856, %v3854, %v3673
    %v3872 = vsel %vm3856, %v3855, %v3675
    %vm3873 = vcmask 261120
    %v3874 = vsel %vm3873, %v3857, %v3709
    %v3875 = vsel %vm3873, %v3858, %v3711
    %v3876 = vsel %vm3873, %v3859, %v3713
    %v3877 = vsel %vm3873, %v3860, %v3715
    %v3878 = vsel %vm3873, %v3861, %v3717
    %v3879 = vsel %vm3873, %v3862, %v3719
    %v3880 = vsel %vm3873, %v3863, %v3721
    %v3881 = vsel %vm3873, %v3864, %v3723
    %v3882 = vsel %vm3873, %v3865, %v3725
    %v3883 = vsel %vm3873, %v3866, %v3727
    %v3884 = vsel %vm3873, %v3867, %v3729
    %v3885 = vsel %vm3873, %v3868, %v3731
    %v3886 = vsel %vm3873, %v3869, %v3733
    %v3887 = vsel %vm3873, %v3870, %v3735
    %v3888 = vsel %vm3873, %v3871, %v3737
    %v3889 = vsel %vm3873, %v3872, %v3739
    %v3890 = vld [vmem:[%s1] sm:$0xff]
    %v3891 = vld [vmem:[%s1 + $0x8] sm:$0xff]
    %v3892 = vld [vmem:[%s1 + $0x10] sm:$0xff]
    %v3893 = vld [vmem:[%s1 + $0x18] sm:$0xff]
    %v3894 = vld [vmem:[%s1 + $0x20] sm:$0xf]
    %vm3895 = vcmask 293888
    %v3897 = vsel %vm3895, %v3874, 0
    %v3900 = vsel %vm3895, %v3875, 0
    %v3903 = vsel %vm3895, %v3876, 0
    %v3906 = vsel %vm3895, %v3877, 0
    %v3909 = vsel %vm3895, %v3878, 0
    %v3912 = vsel %vm3895, %v3879, 0
    %v3915 = vsel %vm3895, %v3880, 0
    %v3918 = vsel %vm3895, %v3881, 0
    %v3921 = vsel %vm3895, %v3882, 0
    %v3924 = vsel %vm3895, %v3883, 0
    %v3927 = vsel %vm3895, %v3884, 0
    %v3930 = vsel %vm3895, %v3885, 0
    %v3933 = vsel %vm3895, %v3886, 0
    %v3936 = vsel %vm3895, %v3887, 0
    %v3939 = vsel %vm3895, %v3888, 0
    %v3942 = vsel %vm3895, %v3889, 0
    %vm3944 = vcmask 1043456
    %v3946 = vsel %vm3944, %v3894, 0
    %3948 = vmatpush.msra.mxu0 0.0
    %3949 = vmatpush.msra.mxu0 0.0
    %3950 = vmatpush.msra.mxu0 0.0
    %3951 = vmatpush.msra.mxu0 0.0
    %3952 = vmatpush.msra.mxu0 0.0
    %3953 = vmatpush.msra.mxu0 0.0
    %3954 = vmatpush.msra.mxu0 0.0
    %3955 = vmatpush.msra.mxu0 0.0
    %3956 = vmatpush.msra.mxu0 0.0
    %3957 = vmatpush.msra.mxu0 0.0
    %3958 = vmatpush.msra.mxu0 0.0
    %3959 = vmatpush.msra.mxu0 %v3946
    %3960 = vmatpush.msra.mxu0 %v3893
    %3961 = vmatpush.msra.mxu0 %v3892
    %3962 = vmatpush.msra.mxu0 %v3891
    %3963 = vmatpush.msra.mxu0 %v3890
    %3964 = vmatmul.f32.gmra.mxu0 %v3897
    %v3965 = vpop.f32.mrf.mxu0
    %v3966 = vadd.f32 0.0, %v3965
    %3967 = vmatmul.f32.gmra.mxu0 %v3900
    %v3968 = vpop.f32.mrf.mxu0
    %v3969 = vadd.f32 0.0, %v3968
    %3970 = vmatmul.f32.gmra.mxu0 %v3903
    %v3971 = vpop.f32.mrf.mxu0
    %v3972 = vadd.f32 0.0, %v3971
    %3973 = vmatmul.f32.gmra.mxu0 %v3906
    %v3974 = vpop.f32.mrf.mxu0
    %v3975 = vadd.f32 0.0, %v3974
    %3976 = vmatmul.f32.gmra.mxu0 %v3909
    %v3977 = vpop.f32.mrf.mxu0
    %v3978 = vadd.f32 0.0, %v3977
    %3979 = vmatmul.f32.gmra.mxu0 %v3912
    %v3980 = vpop.f32.mrf.mxu0
    %v3981 = vadd.f32 0.0, %v3980
    %3982 = vmatmul.f32.gmra.mxu0 %v3915
    %v3983 = vpop.f32.mrf.mxu0
    %v3984 = vadd.f32 0.0, %v3983
    %3985 = vmatmul.f32.gmra.mxu0 %v3918
    %v3986 = vpop.f32.mrf.mxu0
    %v3987 = vadd.f32 0.0, %v3986
    %3988 = vmatmul.f32.gmra.mxu0 %v3921
    %v3989 = vpop.f32.mrf.mxu0
    %v3990 = vadd.f32 0.0, %v3989
    %3991 = vmatmul.f32.gmra.mxu0 %v3924
    %v3992 = vpop.f32.mrf.mxu0
    %v3993 = vadd.f32 0.0, %v3992
    %3994 = vmatmul.f32.gmra.mxu0 %v3927
    %v3995 = vpop.f32.mrf.mxu0
    %v3996 = vadd.f32 0.0, %v3995
    %3997 = vmatmul.f32.gmra.mxu0 %v3930
    %v3998 = vpop.f32.mrf.mxu0
    %v3999 = vadd.f32 0.0, %v3998
    %4000 = vmatmul.f32.gmra.mxu0 %v3933
    %v4001 = vpop.f32.mrf.mxu0
    %v4002 = vadd.f32 0.0, %v4001
    %4003 = vmatmul.f32.gmra.mxu0 %v3936
    %v4004 = vpop.f32.mrf.mxu0
    %v4005 = vadd.f32 0.0, %v4004
    %4006 = vmatmul.f32.gmra.mxu0 %v3939
    %v4007 = vpop.f32.mrf.mxu0
    %v4008 = vadd.f32 0.0, %v4007
    %4009 = vmatmul.f32.gmra.mxu0 %v3942
    %v4010 = vpop.f32.mrf.mxu0
    %v4011 = vadd.f32 0.0, %v4010
    %4012 = vdwg.mxu0
    %v4013 = vld [vmem:[%s2] sm:$0x1]
    %v4015 = vperm.slane %v4013, 0
    %v4017 = vmul.f32 %v3966, %v4015
    %v4018 = vmul.f32 %v3969, %v4015
    %v4019 = vmul.f32 %v3972, %v4015
    %v4020 = vmul.f32 %v3975, %v4015
    %v4021 = vmul.f32 %v3978, %v4015
    %v4022 = vmul.f32 %v3981, %v4015
    %v4023 = vmul.f32 %v3984, %v4015
    %v4024 = vmul.f32 %v3987, %v4015
    %v4025 = vmul.f32 %v3990, %v4015
    %v4026 = vmul.f32 %v3993, %v4015
    %v4027 = vmul.f32 %v3996, %v4015
    %v4028 = vmul.f32 %v3999, %v4015
    %v4029 = vmul.f32 %v4002, %v4015
    %v4030 = vmul.f32 %v4005, %v4015
    %v4031 = vmul.f32 %v4008, %v4015
    %v4032 = vmul.f32 %v4011, %v4015
    %v4033 = vld [vmem:[%s3] sm:$0x1]
    %v4035 = vperm.slane %v4033, 0
    %v4037 = vadd.f32 %v4017, %v4035
    %v4038 = vadd.f32 %v4018, %v4035
    %v4039 = vadd.f32 %v4019, %v4035
    %v4040 = vadd.f32 %v4020, %v4035
    %v4041 = vadd.f32 %v4021, %v4035
    %v4042 = vadd.f32 %v4022, %v4035
    %v4043 = vadd.f32 %v4023, %v4035
    %v4044 = vadd.f32 %v4024, %v4035
    %v4045 = vadd.f32 %v4025, %v4035
    %v4046 = vadd.f32 %v4026, %v4035
    %v4047 = vadd.f32 %v4027, %v4035
    %v4048 = vadd.f32 %v4028, %v4035
    %v4049 = vadd.f32 %v4029, %v4035
    %v4050 = vadd.f32 %v4030, %v4035
    %v4051 = vadd.f32 %v4031, %v4035
    %v4052 = vadd.f32 %v4032, %v4035
    %v4053 = vmax.f32 %v4037, 0.0
    %v4054 = vmax.f32 %v4038, 0.0
    %v4055 = vmax.f32 %v4039, 0.0
    %v4056 = vmax.f32 %v4040, 0.0
    %v4057 = vmax.f32 %v4041, 0.0
    %v4058 = vmax.f32 %v4042, 0.0
    %v4059 = vmax.f32 %v4043, 0.0
    %v4060 = vmax.f32 %v4044, 0.0
    %v4061 = vmax.f32 %v4045, 0.0
    %v4062 = vmax.f32 %v4046, 0.0
    %v4063 = vmax.f32 %v4047, 0.0
    %v4064 = vmax.f32 %v4048, 0.0
    %v4065 = vmax.f32 %v4049, 0.0
    %v4066 = vmax.f32 %v4050, 0.0
    %v4067 = vmax.f32 %v4051, 0.0
    %v4068 = vmax.f32 %v4052, 0.0
    %s4069 = scalar_lea.vmem [#allocation3], 16
    %4070 = vst.msk [vmem:[%s4069 + $0x1] sm:$0xff] %vm2808, %v4053
    %4071 = vst.msk [vmem:[%s4069 + $0x11] sm:$0xff] %vm2808, %v4054
    %4072 = vst.msk [vmem:[%s4069 + $0x21] sm:$0xff] %vm2808, %v4055
    %4073 = vst.msk [vmem:[%s4069 + $0x31] sm:$0xff] %vm2808, %v4056
    %4074 = vst.msk [vmem:[%s4069 + $0x41] sm:$0xff] %vm2808, %v4057
    %4075 = vst.msk [vmem:[%s4069 + $0x51] sm:$0xff] %vm2808, %v4058
    %4076 = vst.msk [vmem:[%s4069 + $0x61] sm:$0xff] %vm2808, %v4059
    %4077 = vst.msk [vmem:[%s4069 + $0x71] sm:$0xff] %vm2808, %v4060
    %4078 = vst.msk [vmem:[%s4069 + $0xa1] sm:$0xff] %vm2808, %v4061
    %4079 = vst.msk [vmem:[%s4069 + $0xb1] sm:$0xff] %vm2808, %v4062
    %4080 = vst.msk [vmem:[%s4069 + $0xc1] sm:$0xff] %vm2808, %v4063
    %4081 = vst.msk [vmem:[%s4069 + $0xd1] sm:$0xff] %vm2808, %v4064
    %4082 = vst.msk [vmem:[%s4069 + $0xe1] sm:$0xff] %vm2808, %v4065
    %4083 = vst.msk [vmem:[%s4069 + $0xf1] sm:$0xff] %vm2808, %v4066
    %4084 = vst.msk [vmem:[%s4069 + $0x101] sm:$0xff] %vm2808, %v4067
    %4085 = vst.msk [vmem:[%s4069 + $0x111] sm:$0xff] %vm2808, %v4068
    %v4086 = vld [vmem:[#allocation3] sm:$0xff]
    %v4087 = vld [vmem:[#allocation3 + $0x10] sm:$0xff]
    %v4088 = vld [vmem:[#allocation3 + $0x20] sm:$0xff]
    %v4089 = vld [vmem:[#allocation3 + $0x30] sm:$0xff]
    %v4090 = vld [vmem:[#allocation3 + $0x40] sm:$0xff]
    %v4091 = vld [vmem:[#allocation3 + $0x50] sm:$0xff]
    %v4092 = vld [vmem:[#allocation3 + $0x60] sm:$0xff]
    %v4093 = vld [vmem:[#allocation3 + $0x70] sm:$0xff]
    %v4094 = vld [vmem:[#allocation3 + $0xa0] sm:$0xff]
    %v4095 = vld [vmem:[#allocation3 + $0xb0] sm:$0xff]
    %v4096 = vld [vmem:[#allocation3 + $0xc0] sm:$0xff]
    %v4097 = vld [vmem:[#allocation3 + $0xd0] sm:$0xff]
    %v4098 = vld [vmem:[#allocation3 + $0xe0] sm:$0xff]
    %v4099 = vld [vmem:[#allocation3 + $0xf0] sm:$0xff]
    %v4100 = vld [vmem:[#allocation3 + $0x100] sm:$0xff]
    %v4101 = vld [vmem:[#allocation3 + $0x110] sm:$0xff]
    %v4102 = vld [vmem:[#allocation3 + $0x1] sm:$0xff]
    %v4103 = vld [vmem:[#allocation3 + $0x11] sm:$0xff]
    %v4104 = vld [vmem:[#allocation3 + $0x21] sm:$0xff]
    %v4105 = vld [vmem:[#allocation3 + $0x31] sm:$0xff]
    %v4106 = vld [vmem:[#allocation3 + $0x41] sm:$0xff]
    %v4107 = vld [vmem:[#allocation3 + $0x51] sm:$0xff]
    %v4108 = vld [vmem:[#allocation3 + $0x61] sm:$0xff]
    %v4109 = vld [vmem:[#allocation3 + $0x71] sm:$0xff]
    %v4110 = vld [vmem:[#allocation3 + $0xa1] sm:$0xff]
    %v4111 = vld [vmem:[#allocation3 + $0xb1] sm:$0xff]
    %v4112 = vld [vmem:[#allocation3 + $0xc1] sm:$0xff]
    %v4113 = vld [vmem:[#allocation3 + $0xd1] sm:$0xff]
    %v4114 = vld [vmem:[#allocation3 + $0xe1] sm:$0xff]
    %v4115 = vld [vmem:[#allocation3 + $0xf1] sm:$0xff]
    %v4116 = vld [vmem:[#allocation3 + $0x101] sm:$0xff]
    %v4117 = vld [vmem:[#allocation3 + $0x111] sm:$0xff]
    %v4118 = vld [vmem:[#allocation3 + $0x2] sm:$0xff]
    %v4119 = vld [vmem:[#allocation3 + $0x12] sm:$0xff]
    %v4120 = vld [vmem:[#allocation3 + $0x22] sm:$0xff]
    %v4121 = vld [vmem:[#allocation3 + $0x32] sm:$0xff]
    %v4122 = vld [vmem:[#allocation3 + $0x42] sm:$0xff]
    %v4123 = vld [vmem:[#allocation3 + $0x52] sm:$0xff]
    %v4124 = vld [vmem:[#allocation3 + $0x62] sm:$0xff]
    %v4125 = vld [vmem:[#allocation3 + $0x72] sm:$0xff]
    %v4126 = vld [vmem:[#allocation3 + $0xa2] sm:$0xff]
    %v4127 = vld [vmem:[#allocation3 + $0xb2] sm:$0xff]
    %v4128 = vld [vmem:[#allocation3 + $0xc2] sm:$0xff]
    %v4129 = vld [vmem:[#allocation3 + $0xd2] sm:$0xff]
    %v4130 = vld [vmem:[#allocation3 + $0xe2] sm:$0xff]
    %v4131 = vld [vmem:[#allocation3 + $0xf2] sm:$0xff]
    %v4132 = vld [vmem:[#allocation3 + $0x102] sm:$0xff]
    %v4133 = vld [vmem:[#allocation3 + $0x112] sm:$0xff]
    %v4134 = vld [vmem:[%s4069] sm:$0xff]
    %v4135 = vld [vmem:[%s4069 + $0x10] sm:$0xff]
    %v4136 = vld [vmem:[%s4069 + $0x20] sm:$0xff]
    %v4137 = vld [vmem:[%s4069 + $0x30] sm:$0xff]
    %v4138 = vld [vmem:[%s4069 + $0x40] sm:$0xff]
    %v4139 = vld [vmem:[%s4069 + $0x50] sm:$0xff]
    %v4140 = vld [vmem:[%s4069 + $0x60] sm:$0xff]
    %v4141 = vld [vmem:[%s4069 + $0x70] sm:$0xff]
    %v4142 = vld [vmem:[%s4069 + $0xa0] sm:$0xff]
    %v4143 = vld [vmem:[%s4069 + $0xb0] sm:$0xff]
    %v4144 = vld [vmem:[%s4069 + $0xc0] sm:$0xff]
    %v4145 = vld [vmem:[%s4069 + $0xd0] sm:$0xff]
    %v4146 = vld [vmem:[%s4069 + $0xe0] sm:$0xff]
    %v4147 = vld [vmem:[%s4069 + $0xf0] sm:$0xff]
    %v4148 = vld [vmem:[%s4069 + $0x100] sm:$0xff]
    %v4149 = vld [vmem:[%s4069 + $0x110] sm:$0xff]
    %v4150 = vld [vmem:[%s4069 + $0x1] sm:$0xff]
    %v4151 = vld [vmem:[%s4069 + $0x11] sm:$0xff]
    %v4152 = vld [vmem:[%s4069 + $0x21] sm:$0xff]
    %v4153 = vld [vmem:[%s4069 + $0x31] sm:$0xff]
    %v4154 = vld [vmem:[%s4069 + $0x41] sm:$0xff]
    %v4155 = vld [vmem:[%s4069 + $0x51] sm:$0xff]
    %v4156 = vld [vmem:[%s4069 + $0x61] sm:$0xff]
    %v4157 = vld [vmem:[%s4069 + $0x71] sm:$0xff]
    %v4158 = vld [vmem:[%s4069 + $0xa1] sm:$0xff]
    %v4159 = vld [vmem:[%s4069 + $0xb1] sm:$0xff]
    %v4160 = vld [vmem:[%s4069 + $0xc1] sm:$0xff]
    %v4161 = vld [vmem:[%s4069 + $0xd1] sm:$0xff]
    %v4162 = vld [vmem:[%s4069 + $0xe1] sm:$0xff]
    %v4163 = vld [vmem:[%s4069 + $0xf1] sm:$0xff]
    %v4164 = vld [vmem:[%s4069 + $0x101] sm:$0xff]
    %v4165 = vld [vmem:[%s4069 + $0x111] sm:$0xff]
    %v4166 = vld [vmem:[%s4069 + $0x2] sm:$0xff]
    %v4167 = vld [vmem:[%s4069 + $0x12] sm:$0xff]
    %v4168 = vld [vmem:[%s4069 + $0x22] sm:$0xff]
    %v4169 = vld [vmem:[%s4069 + $0x32] sm:$0xff]
    %v4170 = vld [vmem:[%s4069 + $0x42] sm:$0xff]
    %v4171 = vld [vmem:[%s4069 + $0x52] sm:$0xff]
    %v4172 = vld [vmem:[%s4069 + $0x62] sm:$0xff]
    %v4173 = vld [vmem:[%s4069 + $0x72] sm:$0xff]
    %v4174 = vld [vmem:[%s4069 + $0xa2] sm:$0xff]
    %v4175 = vld [vmem:[%s4069 + $0xb2] sm:$0xff]
    %v4176 = vld [vmem:[%s4069 + $0xc2] sm:$0xff]
    %v4177 = vld [vmem:[%s4069 + $0xd2] sm:$0xff]
    %v4178 = vld [vmem:[%s4069 + $0xe2] sm:$0xff]
    %v4179 = vld [vmem:[%s4069 + $0xf2] sm:$0xff]
    %v4180 = vld [vmem:[%s4069 + $0x102] sm:$0xff]
    %v4181 = vld [vmem:[%s4069 + $0x112] sm:$0xff]
    %s4182 = scalar_lea.vmem [#allocation3], 32
    %v4183 = vld [vmem:[%s4182] sm:$0xff]
    %v4184 = vld [vmem:[%s4182 + $0x10] sm:$0xff]
    %v4185 = vld [vmem:[%s4182 + $0x20] sm:$0xff]
    %v4186 = vld [vmem:[%s4182 + $0x30] sm:$0xff]
    %v4187 = vld [vmem:[%s4182 + $0x40] sm:$0xff]
    %v4188 = vld [vmem:[%s4182 + $0x50] sm:$0xff]
    %v4189 = vld [vmem:[%s4182 + $0x60] sm:$0xff]
    %v4190 = vld [vmem:[%s4182 + $0x70] sm:$0xff]
    %v4191 = vld [vmem:[%s4182 + $0xa0] sm:$0xff]
    %v4192 = vld [vmem:[%s4182 + $0xb0] sm:$0xff]
    %v4193 = vld [vmem:[%s4182 + $0xc0] sm:$0xff]
    %v4194 = vld [vmem:[%s4182 + $0xd0] sm:$0xff]
    %v4195 = vld [vmem:[%s4182 + $0xe0] sm:$0xff]
    %v4196 = vld [vmem:[%s4182 + $0xf0] sm:$0xff]
    %v4197 = vld [vmem:[%s4182 + $0x100] sm:$0xff]
    %v4198 = vld [vmem:[%s4182 + $0x110] sm:$0xff]
    %v4199 = vld [vmem:[%s4182 + $0x1] sm:$0xff]
    %v4200 = vld [vmem:[%s4182 + $0x11] sm:$0xff]
    %v4201 = vld [vmem:[%s4182 + $0x21] sm:$0xff]
    %v4202 = vld [vmem:[%s4182 + $0x31] sm:$0xff]
    %v4203 = vld [vmem:[%s4182 + $0x41] sm:$0xff]
    %v4204 = vld [vmem:[%s4182 + $0x51] sm:$0xff]
    %v4205 = vld [vmem:[%s4182 + $0x61] sm:$0xff]
    %v4206 = vld [vmem:[%s4182 + $0x71] sm:$0xff]
    %v4207 = vld [vmem:[%s4182 + $0xa1] sm:$0xff]
    %v4208 = vld [vmem:[%s4182 + $0xb1] sm:$0xff]
    %v4209 = vld [vmem:[%s4182 + $0xc1] sm:$0xff]
    %v4210 = vld [vmem:[%s4182 + $0xd1] sm:$0xff]
    %v4211 = vld [vmem:[%s4182 + $0xe1] sm:$0xff]
    %v4212 = vld [vmem:[%s4182 + $0xf1] sm:$0xff]
    %v4213 = vld [vmem:[%s4182 + $0x101] sm:$0xff]
    %v4214 = vld [vmem:[%s4182 + $0x111] sm:$0xff]
    %v4215 = vld [vmem:[%s4182 + $0x2] sm:$0xff]
    %v4216 = vld [vmem:[%s4182 + $0x12] sm:$0xff]
    %v4217 = vld [vmem:[%s4182 + $0x22] sm:$0xff]
    %v4218 = vld [vmem:[%s4182 + $0x32] sm:$0xff]
    %v4219 = vld [vmem:[%s4182 + $0x42] sm:$0xff]
    %v4220 = vld [vmem:[%s4182 + $0x52] sm:$0xff]
    %v4221 = vld [vmem:[%s4182 + $0x62] sm:$0xff]
    %v4222 = vld [vmem:[%s4182 + $0x72] sm:$0xff]
    %v4223 = vld [vmem:[%s4182 + $0xa2] sm:$0xff]
    %v4224 = vld [vmem:[%s4182 + $0xb2] sm:$0xff]
    %v4225 = vld [vmem:[%s4182 + $0xc2] sm:$0xff]
    %v4226 = vld [vmem:[%s4182 + $0xd2] sm:$0xff]
    %v4227 = vld [vmem:[%s4182 + $0xe2] sm:$0xff]
    %v4228 = vld [vmem:[%s4182 + $0xf2] sm:$0xff]
    %v4229 = vld [vmem:[%s4182 + $0x102] sm:$0xff]
    %v4230 = vld [vmem:[%s4182 + $0x112] sm:$0xff]
    %4247 = vrot.lane.b32.xlu0 %v4102, 8
    %v4248 = vpop.permute.xlu0 %4247
    %4249 = vrot.lane.b32.xlu0 %v4103, 8
    %v4250 = vpop.permute.xlu0 %4249
    %4251 = vrot.lane.b32.xlu0 %v4104, 8
    %v4252 = vpop.permute.xlu0 %4251
    %4253 = vrot.lane.b32.xlu0 %v4105, 8
    %v4254 = vpop.permute.xlu0 %4253
    %4255 = vrot.lane.b32.xlu0 %v4106, 8
    %v4256 = vpop.permute.xlu0 %4255
    %4257 = vrot.lane.b32.xlu0 %v4107, 8
    %v4258 = vpop.permute.xlu0 %4257
    %4259 = vrot.lane.b32.xlu0 %v4108, 8
    %v4260 = vpop.permute.xlu0 %4259
    %4261 = vrot.lane.b32.xlu0 %v4109, 8
    %v4262 = vpop.permute.xlu0 %4261
    %4263 = vrot.lane.b32.xlu0 %v4110, 8
    %v4264 = vpop.permute.xlu0 %4263
    %4265 = vrot.lane.b32.xlu0 %v4111, 8
    %v4266 = vpop.permute.xlu0 %4265
    %4267 = vrot.lane.b32.xlu0 %v4112, 8
    %v4268 = vpop.permute.xlu0 %4267
    %4269 = vrot.lane.b32.xlu0 %v4113, 8
    %v4270 = vpop.permute.xlu0 %4269
    %4271 = vrot.lane.b32.xlu0 %v4114, 8
    %v4272 = vpop.permute.xlu0 %4271
    %4273 = vrot.lane.b32.xlu0 %v4115, 8
    %v4274 = vpop.permute.xlu0 %4273
    %4275 = vrot.lane.b32.xlu0 %v4116, 8
    %v4276 = vpop.permute.xlu0 %4275
    %4277 = vrot.lane.b32.xlu0 %v4117, 8
    %v4278 = vpop.permute.xlu0 %4277
    %4311 = vrot.lane.b32.xlu0 %v4118, 16
    %v4312 = vpop.permute.xlu0 %4311
    %4313 = vrot.lane.b32.xlu0 %v4119, 16
    %v4314 = vpop.permute.xlu0 %4313
    %4315 = vrot.lane.b32.xlu0 %v4120, 16
    %v4316 = vpop.permute.xlu0 %4315
    %4317 = vrot.lane.b32.xlu0 %v4121, 16
    %v4318 = vpop.permute.xlu0 %4317
    %4319 = vrot.lane.b32.xlu0 %v4122, 16
    %v4320 = vpop.permute.xlu0 %4319
    %4321 = vrot.lane.b32.xlu0 %v4123, 16
    %v4322 = vpop.permute.xlu0 %4321
    %4323 = vrot.lane.b32.xlu0 %v4124, 16
    %v4324 = vpop.permute.xlu0 %4323
    %4325 = vrot.lane.b32.xlu0 %v4125, 16
    %v4326 = vpop.permute.xlu0 %4325
    %4327 = vrot.lane.b32.xlu0 %v4126, 16
    %v4328 = vpop.permute.xlu0 %4327
    %4329 = vrot.lane.b32.xlu0 %v4127, 16
    %v4330 = vpop.permute.xlu0 %4329
    %4331 = vrot.lane.b32.xlu0 %v4128, 16
    %v4332 = vpop.permute.xlu0 %4331
    %4333 = vrot.lane.b32.xlu0 %v4129, 16
    %v4334 = vpop.permute.xlu0 %4333
    %4335 = vrot.lane.b32.xlu0 %v4130, 16
    %v4336 = vpop.permute.xlu0 %4335
    %4337 = vrot.lane.b32.xlu0 %v4131, 16
    %v4338 = vpop.permute.xlu0 %4337
    %4339 = vrot.lane.b32.xlu0 %v4132, 16
    %v4340 = vpop.permute.xlu0 %4339
    %4341 = vrot.lane.b32.xlu0 %v4133, 16
    %v4342 = vpop.permute.xlu0 %4341
    %4375 = vrot.lane.b32.xlu0 %v4134, 24
    %v4376 = vpop.permute.xlu0 %4375
    %4377 = vrot.lane.b32.xlu0 %v4135, 24
    %v4378 = vpop.permute.xlu0 %4377
    %4379 = vrot.lane.b32.xlu0 %v4136, 24
    %v4380 = vpop.permute.xlu0 %4379
    %4381 = vrot.lane.b32.xlu0 %v4137, 24
    %v4382 = vpop.permute.xlu0 %4381
    %4383 = vrot.lane.b32.xlu0 %v4138, 24
    %v4384 = vpop.permute.xlu0 %4383
    %4385 = vrot.lane.b32.xlu0 %v4139, 24
    %v4386 = vpop.permute.xlu0 %4385
    %4387 = vrot.lane.b32.xlu0 %v4140, 24
    %v4388 = vpop.permute.xlu0 %4387
    %4389 = vrot.lane.b32.xlu0 %v4141, 24
    %v4390 = vpop.permute.xlu0 %4389
    %4391 = vrot.lane.b32.xlu0 %v4142, 24
    %v4392 = vpop.permute.xlu0 %4391
    %4393 = vrot.lane.b32.xlu0 %v4143, 24
    %v4394 = vpop.permute.xlu0 %4393
    %4395 = vrot.lane.b32.xlu0 %v4144, 24
    %v4396 = vpop.permute.xlu0 %4395
    %4397 = vrot.lane.b32.xlu0 %v4145, 24
    %v4398 = vpop.permute.xlu0 %4397
    %4399 = vrot.lane.b32.xlu0 %v4146, 24
    %v4400 = vpop.permute.xlu0 %4399
    %4401 = vrot.lane.b32.xlu0 %v4147, 24
    %v4402 = vpop.permute.xlu0 %4401
    %4403 = vrot.lane.b32.xlu0 %v4148, 24
    %v4404 = vpop.permute.xlu0 %4403
    %4405 = vrot.lane.b32.xlu0 %v4149, 24
    %v4406 = vpop.permute.xlu0 %4405
    %4439 = vrot.lane.b32.xlu0 %v4150, 32
    %v4440 = vpop.permute.xlu0 %4439
    %4441 = vrot.lane.b32.xlu0 %v4151, 32
    %v4442 = vpop.permute.xlu0 %4441
    %4443 = vrot.lane.b32.xlu0 %v4152, 32
    %v4444 = vpop.permute.xlu0 %4443
    %4445 = vrot.lane.b32.xlu0 %v4153, 32
    %v4446 = vpop.permute.xlu0 %4445
    %4447 = vrot.lane.b32.xlu0 %v4154, 32
    %v4448 = vpop.permute.xlu0 %4447
    %4449 = vrot.lane.b32.xlu0 %v4155, 32
    %v4450 = vpop.permute.xlu0 %4449
    %4451 = vrot.lane.b32.xlu0 %v4156, 32
    %v4452 = vpop.permute.xlu0 %4451
    %4453 = vrot.lane.b32.xlu0 %v4157, 32
    %v4454 = vpop.permute.xlu0 %4453
    %4455 = vrot.lane.b32.xlu0 %v4158, 32
    %v4456 = vpop.permute.xlu0 %4455
    %4457 = vrot.lane.b32.xlu0 %v4159, 32
    %v4458 = vpop.permute.xlu0 %4457
    %4459 = vrot.lane.b32.xlu0 %v4160, 32
    %v4460 = vpop.permute.xlu0 %4459
    %4461 = vrot.lane.b32.xlu0 %v4161, 32
    %v4462 = vpop.permute.xlu0 %4461
    %4463 = vrot.lane.b32.xlu0 %v4162, 32
    %v4464 = vpop.permute.xlu0 %4463
    %4465 = vrot.lane.b32.xlu0 %v4163, 32
    %v4466 = vpop.permute.xlu0 %4465
    %4467 = vrot.lane.b32.xlu0 %v4164, 32
    %v4468 = vpop.permute.xlu0 %4467
    %4469 = vrot.lane.b32.xlu0 %v4165, 32
    %v4470 = vpop.permute.xlu0 %4469
    %4503 = vrot.lane.b32.xlu0 %v4166, 40
    %v4504 = vpop.permute.xlu0 %4503
    %4505 = vrot.lane.b32.xlu0 %v4167, 40
    %v4506 = vpop.permute.xlu0 %4505
    %4507 = vrot.lane.b32.xlu0 %v4168, 40
    %v4508 = vpop.permute.xlu0 %4507
    %4509 = vrot.lane.b32.xlu0 %v4169, 40
    %v4510 = vpop.permute.xlu0 %4509
    %4511 = vrot.lane.b32.xlu0 %v4170, 40
    %v4512 = vpop.permute.xlu0 %4511
    %4513 = vrot.lane.b32.xlu0 %v4171, 40
    %v4514 = vpop.permute.xlu0 %4513
    %4515 = vrot.lane.b32.xlu0 %v4172, 40
    %v4516 = vpop.permute.xlu0 %4515
    %4517 = vrot.lane.b32.xlu0 %v4173, 40
    %v4518 = vpop.permute.xlu0 %4517
    %4519 = vrot.lane.b32.xlu0 %v4174, 40
    %v4520 = vpop.permute.xlu0 %4519
    %4521 = vrot.lane.b32.xlu0 %v4175, 40
    %v4522 = vpop.permute.xlu0 %4521
    %4523 = vrot.lane.b32.xlu0 %v4176, 40
    %v4524 = vpop.permute.xlu0 %4523
    %4525 = vrot.lane.b32.xlu0 %v4177, 40
    %v4526 = vpop.permute.xlu0 %4525
    %4527 = vrot.lane.b32.xlu0 %v4178, 40
    %v4528 = vpop.permute.xlu0 %4527
    %4529 = vrot.lane.b32.xlu0 %v4179, 40
    %v4530 = vpop.permute.xlu0 %4529
    %4531 = vrot.lane.b32.xlu0 %v4180, 40
    %v4532 = vpop.permute.xlu0 %4531
    %4533 = vrot.lane.b32.xlu0 %v4181, 40
    %v4534 = vpop.permute.xlu0 %4533
    %4567 = vrot.lane.b32.xlu0 %v4183, 48
    %v4568 = vpop.permute.xlu0 %4567
    %4569 = vrot.lane.b32.xlu0 %v4184, 48
    %v4570 = vpop.permute.xlu0 %4569
    %4571 = vrot.lane.b32.xlu0 %v4185, 48
    %v4572 = vpop.permute.xlu0 %4571
    %4573 = vrot.lane.b32.xlu0 %v4186, 48
    %v4574 = vpop.permute.xlu0 %4573
    %4575 = vrot.lane.b32.xlu0 %v4187, 48
    %v4576 = vpop.permute.xlu0 %4575
    %4577 = vrot.lane.b32.xlu0 %v4188, 48
    %v4578 = vpop.permute.xlu0 %4577
    %4579 = vrot.lane.b32.xlu0 %v4189, 48
    %v4580 = vpop.permute.xlu0 %4579
    %4581 = vrot.lane.b32.xlu0 %v4190, 48
    %v4582 = vpop.permute.xlu0 %4581
    %4583 = vrot.lane.b32.xlu0 %v4191, 48
    %v4584 = vpop.permute.xlu0 %4583
    %4585 = vrot.lane.b32.xlu0 %v4192, 48
    %v4586 = vpop.permute.xlu0 %4585
    %4587 = vrot.lane.b32.xlu0 %v4193, 48
    %v4588 = vpop.permute.xlu0 %4587
    %4589 = vrot.lane.b32.xlu0 %v4194, 48
    %v4590 = vpop.permute.xlu0 %4589
    %4591 = vrot.lane.b32.xlu0 %v4195, 48
    %v4592 = vpop.permute.xlu0 %4591
    %4593 = vrot.lane.b32.xlu0 %v4196, 48
    %v4594 = vpop.permute.xlu0 %4593
    %4595 = vrot.lane.b32.xlu0 %v4197, 48
    %v4596 = vpop.permute.xlu0 %4595
    %4597 = vrot.lane.b32.xlu0 %v4198, 48
    %v4598 = vpop.permute.xlu0 %4597
    %4631 = vrot.lane.b32.xlu0 %v4199, 56
    %v4632 = vpop.permute.xlu0 %4631
    %4633 = vrot.lane.b32.xlu0 %v4200, 56
    %v4634 = vpop.permute.xlu0 %4633
    %4635 = vrot.lane.b32.xlu0 %v4201, 56
    %v4636 = vpop.permute.xlu0 %4635
    %4637 = vrot.lane.b32.xlu0 %v4202, 56
    %v4638 = vpop.permute.xlu0 %4637
    %4639 = vrot.lane.b32.xlu0 %v4203, 56
    %v4640 = vpop.permute.xlu0 %4639
    %4641 = vrot.lane.b32.xlu0 %v4204, 56
    %v4642 = vpop.permute.xlu0 %4641
    %4643 = vrot.lane.b32.xlu0 %v4205, 56
    %v4644 = vpop.permute.xlu0 %4643
    %4645 = vrot.lane.b32.xlu0 %v4206, 56
    %v4646 = vpop.permute.xlu0 %4645
    %4647 = vrot.lane.b32.xlu0 %v4207, 56
    %v4648 = vpop.permute.xlu0 %4647
    %4649 = vrot.lane.b32.xlu0 %v4208, 56
    %v4650 = vpop.permute.xlu0 %4649
    %4651 = vrot.lane.b32.xlu0 %v4209, 56
    %v4652 = vpop.permute.xlu0 %4651
    %4653 = vrot.lane.b32.xlu0 %v4210, 56
    %v4654 = vpop.permute.xlu0 %4653
    %4655 = vrot.lane.b32.xlu0 %v4211, 56
    %v4656 = vpop.permute.xlu0 %4655
    %4657 = vrot.lane.b32.xlu0 %v4212, 56
    %v4658 = vpop.permute.xlu0 %4657
    %4659 = vrot.lane.b32.xlu0 %v4213, 56
    %v4660 = vpop.permute.xlu0 %4659
    %4661 = vrot.lane.b32.xlu0 %v4214, 56
    %v4662 = vpop.permute.xlu0 %4661
    %4695 = vrot.lane.b32.xlu0 %v4215, 64
    %v4696 = vpop.permute.xlu0 %4695
    %4697 = vrot.lane.b32.xlu0 %v4216, 64
    %v4698 = vpop.permute.xlu0 %4697
    %4699 = vrot.lane.b32.xlu0 %v4217, 64
    %v4700 = vpop.permute.xlu0 %4699
    %4701 = vrot.lane.b32.xlu0 %v4218, 64
    %v4702 = vpop.permute.xlu0 %4701
    %4703 = vrot.lane.b32.xlu0 %v4219, 64
    %v4704 = vpop.permute.xlu0 %4703
    %4705 = vrot.lane.b32.xlu0 %v4220, 64
    %v4706 = vpop.permute.xlu0 %4705
    %4707 = vrot.lane.b32.xlu0 %v4221, 64
    %v4708 = vpop.permute.xlu0 %4707
    %4709 = vrot.lane.b32.xlu0 %v4222, 64
    %v4710 = vpop.permute.xlu0 %4709
    %4711 = vrot.lane.b32.xlu0 %v4223, 64
    %v4712 = vpop.permute.xlu0 %4711
    %4713 = vrot.lane.b32.xlu0 %v4224, 64
    %v4714 = vpop.permute.xlu0 %4713
    %4715 = vrot.lane.b32.xlu0 %v4225, 64
    %v4716 = vpop.permute.xlu0 %4715
    %4717 = vrot.lane.b32.xlu0 %v4226, 64
    %v4718 = vpop.permute.xlu0 %4717
    %4719 = vrot.lane.b32.xlu0 %v4227, 64
    %v4720 = vpop.permute.xlu0 %4719
    %4721 = vrot.lane.b32.xlu0 %v4228, 64
    %v4722 = vpop.permute.xlu0 %4721
    %4723 = vrot.lane.b32.xlu0 %v4229, 64
    %v4724 = vpop.permute.xlu0 %4723
    %4725 = vrot.lane.b32.xlu0 %v4230, 64
    %v4726 = vpop.permute.xlu0 %4725
    %v4743 = vsel %vm2808, %v4086, %v4248
    %v4744 = vsel %vm2808, %v4087, %v4250
    %v4745 = vsel %vm2808, %v4088, %v4252
    %v4746 = vsel %vm2808, %v4089, %v4254
    %v4747 = vsel %vm2808, %v4090, %v4256
    %v4748 = vsel %vm2808, %v4091, %v4258
    %v4749 = vsel %vm2808, %v4092, %v4260
    %v4750 = vsel %vm2808, %v4093, %v4262
    %v4751 = vsel %vm2808, %v4094, %v4264
    %v4752 = vsel %vm2808, %v4095, %v4266
    %v4753 = vsel %vm2808, %v4096, %v4268
    %v4754 = vsel %vm2808, %v4097, %v4270
    %v4755 = vsel %vm2808, %v4098, %v4272
    %v4756 = vsel %vm2808, %v4099, %v4274
    %v4757 = vsel %vm2808, %v4100, %v4276
    %v4758 = vsel %vm2808, %v4101, %v4278
    %v4759 = vsel %vm3805, %v4743, %v4312
    %v4760 = vsel %vm3805, %v4744, %v4314
    %v4761 = vsel %vm3805, %v4745, %v4316
    %v4762 = vsel %vm3805, %v4746, %v4318
    %v4763 = vsel %vm3805, %v4747, %v4320
    %v4764 = vsel %vm3805, %v4748, %v4322
    %v4765 = vsel %vm3805, %v4749, %v4324
    %v4766 = vsel %vm3805, %v4750, %v4326
    %v4767 = vsel %vm3805, %v4751, %v4328
    %v4768 = vsel %vm3805, %v4752, %v4330
    %v4769 = vsel %vm3805, %v4753, %v4332
    %v4770 = vsel %vm3805, %v4754, %v4334
    %v4771 = vsel %vm3805, %v4755, %v4336
    %v4772 = vsel %vm3805, %v4756, %v4338
    %v4773 = vsel %vm3805, %v4757, %v4340
    %v4774 = vsel %vm3805, %v4758, %v4342
    %v4775 = vsel %vm3839, %v4759, %v4376
    %v4776 = vsel %vm3839, %v4760, %v4378
    %v4777 = vsel %vm3839, %v4761, %v4380
    %v4778 = vsel %vm3839, %v4762, %v4382
    %v4779 = vsel %vm3839, %v4763, %v4384
    %v4780 = vsel %vm3839, %v4764, %v4386
    %v4781 = vsel %vm3839, %v4765, %v4388
    %v4782 = vsel %vm3839, %v4766, %v4390
    %v4783 = vsel %vm3839, %v4767, %v4392
    %v4784 = vsel %vm3839, %v4768, %v4394
    %v4785 = vsel %vm3839, %v4769, %v4396
    %v4786 = vsel %vm3839, %v4770, %v4398
    %v4787 = vsel %vm3839, %v4771, %v4400
    %v4788 = vsel %vm3839, %v4772, %v4402
    %v4789 = vsel %vm3839, %v4773, %v4404
    %v4790 = vsel %vm3839, %v4774, %v4406
    %v4791 = vsel %vm3873, %v4775, %v4440
    %v4792 = vsel %vm3873, %v4776, %v4442
    %v4793 = vsel %vm3873, %v4777, %v4444
    %v4794 = vsel %vm3873, %v4778, %v4446
    %v4795 = vsel %vm3873, %v4779, %v4448
    %v4796 = vsel %vm3873, %v4780, %v4450
    %v4797 = vsel %vm3873, %v4781, %v4452
    %v4798 = vsel %vm3873, %v4782, %v4454
    %v4799 = vsel %vm3873, %v4783, %v4456
    %v4800 = vsel %vm3873, %v4784, %v4458
    %v4801 = vsel %vm3873, %v4785, %v4460
    %v4802 = vsel %vm3873, %v4786, %v4462
    %v4803 = vsel %vm3873, %v4787, %v4464
    %v4804 = vsel %vm3873, %v4788, %v4466
    %v4805 = vsel %vm3873, %v4789, %v4468
    %v4806 = vsel %vm3873, %v4790, %v4470
    %vm4807 = vcmask 326656
    %v4808 = vsel %vm4807, %v4791, %v4504
    %v4809 = vsel %vm4807, %v4792, %v4506
    %v4810 = vsel %vm4807, %v4793, %v4508
    %v4811 = vsel %vm4807, %v4794, %v4510
    %v4812 = vsel %vm4807, %v4795, %v4512
    %v4813 = vsel %vm4807, %v4796, %v4514
    %v4814 = vsel %vm4807, %v4797, %v4516
    %v4815 = vsel %vm4807, %v4798, %v4518
    %v4816 = vsel %vm4807, %v4799, %v4520
    %v4817 = vsel %vm4807, %v4800, %v4522
    %v4818 = vsel %vm4807, %v4801, %v4524
    %v4819 = vsel %vm4807, %v4802, %v4526
    %v4820 = vsel %vm4807, %v4803, %v4528
    %v4821 = vsel %vm4807, %v4804, %v4530
    %v4822 = vsel %vm4807, %v4805, %v4532
    %v4823 = vsel %vm4807, %v4806, %v4534
    %vm4824 = vcmask 392192
    %v4825 = vsel %vm4824, %v4808, %v4568
    %v4826 = vsel %vm4824, %v4809, %v4570
    %v4827 = vsel %vm4824, %v4810, %v4572
    %v4828 = vsel %vm4824, %v4811, %v4574
    %v4829 = vsel %vm4824, %v4812, %v4576
    %v4830 = vsel %vm4824, %v4813, %v4578
    %v4831 = vsel %vm4824, %v4814, %v4580
    %v4832 = vsel %vm4824, %v4815, %v4582
    %v4833 = vsel %vm4824, %v4816, %v4584
    %v4834 = vsel %vm4824, %v4817, %v4586
    %v4835 = vsel %vm4824, %v4818, %v4588
    %v4836 = vsel %vm4824, %v4819, %v4590
    %v4837 = vsel %vm4824, %v4820, %v4592
    %v4838 = vsel %vm4824, %v4821, %v4594
    %v4839 = vsel %vm4824, %v4822, %v4596
    %v4840 = vsel %vm4824, %v4823, %v4598
    %vm4841 = vcmask 457728
    %v4842 = vsel %vm4841, %v4825, %v4632
    %v4843 = vsel %vm4841, %v4826, %v4634
    %v4844 = vsel %vm4841, %v4827, %v4636
    %v4845 = vsel %vm4841, %v4828, %v4638
    %v4846 = vsel %vm4841, %v4829, %v4640
    %v4847 = vsel %vm4841, %v4830, %v4642
    %v4848 = vsel %vm4841, %v4831, %v4644
    %v4849 = vsel %vm4841, %v4832, %v4646
    %v4850 = vsel %vm4841, %v4833, %v4648
    %v4851 = vsel %vm4841, %v4834, %v4650
    %v4852 = vsel %vm4841, %v4835, %v4652
    %v4853 = vsel %vm4841, %v4836, %v4654
    %v4854 = vsel %vm4841, %v4837, %v4656
    %v4855 = vsel %vm4841, %v4838, %v4658
    %v4856 = vsel %vm4841, %v4839, %v4660
    %v4857 = vsel %vm4841, %v4840, %v4662
    %vm4858 = vcmask 523264
    %v4859 = vsel %vm4858, %v4842, %v4696
    %v4860 = vsel %vm4858, %v4843, %v4698
    %v4861 = vsel %vm4858, %v4844, %v4700
    %v4862 = vsel %vm4858, %v4845, %v4702
    %v4863 = vsel %vm4858, %v4846, %v4704
    %v4864 = vsel %vm4858, %v4847, %v4706
    %v4865 = vsel %vm4858, %v4848, %v4708
    %v4866 = vsel %vm4858, %v4849, %v4710
    %v4867 = vsel %vm4858, %v4850, %v4712
    %v4868 = vsel %vm4858, %v4851, %v4714
    %v4869 = vsel %vm4858, %v4852, %v4716
    %v4870 = vsel %vm4858, %v4853, %v4718
    %v4871 = vsel %vm4858, %v4854, %v4720
    %v4872 = vsel %vm4858, %v4855, %v4722
    %v4873 = vsel %vm4858, %v4856, %v4724
    %v4874 = vsel %vm4858, %v4857, %v4726
    %v4875 = vld [vmem:[%s4] sm:$0xff]
    %v4876 = vld [vmem:[%s4 + $0x8] sm:$0xff]
    %v4877 = vld [vmem:[%s4 + $0x10] sm:$0xff]
    %v4878 = vld [vmem:[%s4 + $0x18] sm:$0xff]
    %v4879 = vld [vmem:[%s4 + $0x20] sm:$0xff]
    %v4880 = vld [vmem:[%s4 + $0x28] sm:$0xff]
    %v4881 = vld [vmem:[%s4 + $0x30] sm:$0xff]
    %v4882 = vld [vmem:[%s4 + $0x38] sm:$0xff]
    %v4883 = vld [vmem:[%s4 + $0x40] sm:$0xff]
    %vm4884 = vcmask 588800
    %v4886 = vsel %vm4884, %v4859, 0
    %v4889 = vsel %vm4884, %v4860, 0
    %v4892 = vsel %vm4884, %v4861, 0
    %v4895 = vsel %vm4884, %v4862, 0
    %v4898 = vsel %vm4884, %v4863, 0
    %v4901 = vsel %vm4884, %v4864, 0
    %v4904 = vsel %vm4884, %v4865, 0
    %v4907 = vsel %vm4884, %v4866, 0
    %v4910 = vsel %vm4884, %v4867, 0
    %v4913 = vsel %vm4884, %v4868, 0
    %v4916 = vsel %vm4884, %v4869, 0
    %v4919 = vsel %vm4884, %v4870, 0
    %v4922 = vsel %vm4884, %v4871, 0
    %v4925 = vsel %vm4884, %v4872, 0
    %v4928 = vsel %vm4884, %v4873, 0
    %v4931 = vsel %vm4884, %v4874, 0
    %4933 = vmatpush.msra.mxu0 0.0
    %4934 = vmatpush.msra.mxu0 0.0
    %4935 = vmatpush.msra.mxu0 0.0
    %4936 = vmatpush.msra.mxu0 0.0
    %4937 = vmatpush.msra.mxu0 0.0
    %4938 = vmatpush.msra.mxu0 0.0
    %4939 = vmatpush.msra.mxu0 0.0
    %4940 = vmatpush.msra.mxu0 %v4883
    %4941 = vmatpush.msra.mxu0 %v4882
    %4942 = vmatpush.msra.mxu0 %v4881
    %4943 = vmatpush.msra.mxu0 %v4880
    %4944 = vmatpush.msra.mxu0 %v4879
    %4945 = vmatpush.msra.mxu0 %v4878
    %4946 = vmatpush.msra.mxu0 %v4877
    %4947 = vmatpush.msra.mxu0 %v4876
    %4948 = vmatpush.msra.mxu0 %v4875
    %4949 = vmatmul.f32.gmra.mxu0 %v4886
    %v4950 = vpop.f32.mrf.mxu0
    %v4951 = vadd.f32 0.0, %v4950
    %4952 = vmatmul.f32.gmra.mxu0 %v4889
    %v4953 = vpop.f32.mrf.mxu0
    %v4954 = vadd.f32 0.0, %v4953
    %4955 = vmatmul.f32.gmra.mxu0 %v4892
    %v4956 = vpop.f32.mrf.mxu0
    %v4957 = vadd.f32 0.0, %v4956
    %4958 = vmatmul.f32.gmra.mxu0 %v4895
    %v4959 = vpop.f32.mrf.mxu0
    %v4960 = vadd.f32 0.0, %v4959
    %4961 = vmatmul.f32.gmra.mxu0 %v4898
    %v4962 = vpop.f32.mrf.mxu0
    %v4963 = vadd.f32 0.0, %v4962
    %4964 = vmatmul.f32.gmra.mxu0 %v4901
    %v4965 = vpop.f32.mrf.mxu0
    %v4966 = vadd.f32 0.0, %v4965
    %4967 = vmatmul.f32.gmra.mxu0 %v4904
    %v4968 = vpop.f32.mrf.mxu0
    %v4969 = vadd.f32 0.0, %v4968
    %4970 = vmatmul.f32.gmra.mxu0 %v4907
    %v4971 = vpop.f32.mrf.mxu0
    %v4972 = vadd.f32 0.0, %v4971
    %4973 = vmatmul.f32.gmra.mxu0 %v4910
    %v4974 = vpop.f32.mrf.mxu0
    %v4975 = vadd.f32 0.0, %v4974
    %4976 = vmatmul.f32.gmra.mxu0 %v4913
    %v4977 = vpop.f32.mrf.mxu0
    %v4978 = vadd.f32 0.0, %v4977
    %4979 = vmatmul.f32.gmra.mxu0 %v4916
    %v4980 = vpop.f32.mrf.mxu0
    %v4981 = vadd.f32 0.0, %v4980
    %4982 = vmatmul.f32.gmra.mxu0 %v4919
    %v4983 = vpop.f32.mrf.mxu0
    %v4984 = vadd.f32 0.0, %v4983
    %4985 = vmatmul.f32.gmra.mxu0 %v4922
    %v4986 = vpop.f32.mrf.mxu0
    %v4987 = vadd.f32 0.0, %v4986
    %4988 = vmatmul.f32.gmra.mxu0 %v4925
    %v4989 = vpop.f32.mrf.mxu0
    %v4990 = vadd.f32 0.0, %v4989
    %4991 = vmatmul.f32.gmra.mxu0 %v4928
    %v4992 = vpop.f32.mrf.mxu0
    %v4993 = vadd.f32 0.0, %v4992
    %4994 = vmatmul.f32.gmra.mxu0 %v4931
    %v4995 = vpop.f32.mrf.mxu0
    %v4996 = vadd.f32 0.0, %v4995
    %4997 = vdwg.mxu0
    %v4998 = vld [vmem:[%s5] sm:$0x1]
    %v5000 = vperm.slane %v4998, 0
    %v5002 = vmul.f32 %v4951, %v5000
    %v5003 = vmul.f32 %v4954, %v5000
    %v5004 = vmul.f32 %v4957, %v5000
    %v5005 = vmul.f32 %v4960, %v5000
    %v5006 = vmul.f32 %v4963, %v5000
    %v5007 = vmul.f32 %v4966, %v5000
    %v5008 = vmul.f32 %v4969, %v5000
    %v5009 = vmul.f32 %v4972, %v5000
    %v5010 = vmul.f32 %v4975, %v5000
    %v5011 = vmul.f32 %v4978, %v5000
    %v5012 = vmul.f32 %v4981, %v5000
    %v5013 = vmul.f32 %v4984, %v5000
    %v5014 = vmul.f32 %v4987, %v5000
    %v5015 = vmul.f32 %v4990, %v5000
    %v5016 = vmul.f32 %v4993, %v5000
    %v5017 = vmul.f32 %v4996, %v5000
    %v5018 = vld [vmem:[%s6] sm:$0x1]
    %v5020 = vperm.slane %v5018, 0
    %v5022 = vadd.f32 %v5002, %v5020
    %v5023 = vadd.f32 %v5003, %v5020
    %v5024 = vadd.f32 %v5004, %v5020
    %v5025 = vadd.f32 %v5005, %v5020
    %v5026 = vadd.f32 %v5006, %v5020
    %v5027 = vadd.f32 %v5007, %v5020
    %v5028 = vadd.f32 %v5008, %v5020
    %v5029 = vadd.f32 %v5009, %v5020
    %v5030 = vadd.f32 %v5010, %v5020
    %v5031 = vadd.f32 %v5011, %v5020
    %v5032 = vadd.f32 %v5012, %v5020
    %v5033 = vadd.f32 %v5013, %v5020
    %v5034 = vadd.f32 %v5014, %v5020
    %v5035 = vadd.f32 %v5015, %v5020
    %v5036 = vadd.f32 %v5016, %v5020
    %v5037 = vadd.f32 %v5017, %v5020
    %v5038 = vmax.f32 %v5022, 0.0
    %v5039 = vmax.f32 %v5023, 0.0
    %v5040 = vmax.f32 %v5024, 0.0
    %v5041 = vmax.f32 %v5025, 0.0
    %v5042 = vmax.f32 %v5026, 0.0
    %v5043 = vmax.f32 %v5027, 0.0
    %v5044 = vmax.f32 %v5028, 0.0
    %v5045 = vmax.f32 %v5029, 0.0
    %v5046 = vmax.f32 %v5030, 0.0
    %v5047 = vmax.f32 %v5031, 0.0
    %v5048 = vmax.f32 %v5032, 0.0
    %v5049 = vmax.f32 %v5033, 0.0
    %v5050 = vmax.f32 %v5034, 0.0
    %v5051 = vmax.f32 %v5035, 0.0
    %v5052 = vmax.f32 %v5036, 0.0
    %v5053 = vmax.f32 %v5037, 0.0
    %5054 = vst.msk [vmem:[#allocation4] sm:$0xff] %vm2808, %v5038
    %5055 = vst.msk [vmem:[#allocation4 + $0x8] sm:$0xff] %vm2808, %v5039
    %5056 = vst.msk [vmem:[#allocation4 + $0x10] sm:$0xff] %vm2808, %v5040
    %5057 = vst.msk [vmem:[#allocation4 + $0x18] sm:$0xff] %vm2808, %v5041
    %5058 = vst.msk [vmem:[#allocation4 + $0x20] sm:$0xff] %vm2808, %v5042
    %5059 = vst.msk [vmem:[#allocation4 + $0x28] sm:$0xff] %vm2808, %v5043
    %5060 = vst.msk [vmem:[#allocation4 + $0x30] sm:$0xff] %vm2808, %v5044
    %5061 = vst.msk [vmem:[#allocation4 + $0x38] sm:$0xff] %vm2808, %v5045
    %5062 = vst.msk [vmem:[#allocation4 + $0x40] sm:$0xff] %vm2808, %v5046
    %5063 = vst.msk [vmem:[#allocation4 + $0x48] sm:$0xff] %vm2808, %v5047
    %5064 = vst.msk [vmem:[#allocation4 + $0x50] sm:$0xff] %vm2808, %v5048
    %5065 = vst.msk [vmem:[#allocation4 + $0x58] sm:$0xff] %vm2808, %v5049
    %5066 = vst.msk [vmem:[#allocation4 + $0x60] sm:$0xff] %vm2808, %v5050
    %5067 = vst.msk [vmem:[#allocation4 + $0x68] sm:$0xff] %vm2808, %v5051
    %5068 = vst.msk [vmem:[#allocation4 + $0x70] sm:$0xff] %vm2808, %v5052
    %5069 = vst.msk [vmem:[#allocation4 + $0x78] sm:$0xff] %vm2808, %v5053
    // Predicated region
    $region30: #{tpu_custom_call.1} parent=1 // pred_check
      _
    $region31: #{tpu_custom_call.1} parent=1 // pred_check_branch
      %5071 = sbr.rel (0) target = $region33
    $region32: #{tpu_custom_call.1} parent=1 // pred_region
      %5073 = vsyncadd [#allocation5], 0
      %s5074 = sshll.u32 [#allocation4], 4
      %s5075 = int_to_ptr.vmem [resolvable:$true] %s5074
      %s5076 = sshll.u32 %s7, 4
      %s5077 = int_to_ptr.hbm [resolvable:$true] %s5076
      %5082 = dma.vmem_to_hbm [thread:$0]  %s5075, 2048, %s5077, [#allocation5], 128, 128, 8
    $region33: #{tpu_custom_call.1} parent=1 // pred_fallthru
      _
    // Predicated region
    $region34: #{tpu_custom_call.1} parent=1 // pred_check
      _
    $region35: #{tpu_custom_call.1} parent=1 // pred_check_branch
      %5084 = sbr.rel (0) target = $region37
    $region36: #{tpu_custom_call.1} parent=1 // pred_region
      %5086 = dma.done [#allocation5], 2048
    $region37: #{tpu_custom_call.1} parent=1 // pred_fallthru
      _
    %5087 = vsyncpa [#allocation5], 1

</llo_original>
